<compile_context>
chip_gen: v7x
topology: tpu7x:2x2x1
jax: 0.10.0
libtpu: 0.0.40
codegen_flags: <defaults>
</compile_context>

<pallas_src>
import functools
import math

import jax
import jax.numpy as jnp
from jax.experimental import pallas as pl
from jax.experimental.pallas import tpu as pltpu


# --------------------------------------------------------------------------- #
# Pallas kernel 1: per-point MLP (ln1..ln4 + relu/relu/relu/tanh, *8.0)
# Operands are [features, points]; all matmuls hit the MXU in bf16, accumulate f32.
# --------------------------------------------------------------------------- #
def _mlp_kernel(x_ref, w1_ref, b1_ref, w2_ref, b2_ref, w3_ref, b3_ref,
                w4_ref, b4_ref, o_ref):
    x = x_ref[...].astype(jnp.bfloat16)                       # [8, tm]
    h = jnp.dot(w1_ref[...], x, preferred_element_type=jnp.float32) + b1_ref[...]
    h = jnp.maximum(h, 0.0)
    h = jnp.dot(w2_ref[...], h.astype(jnp.bfloat16),
                preferred_element_type=jnp.float32) + b2_ref[...]
    h = jnp.maximum(h, 0.0)
    h = jnp.dot(w3_ref[...], h.astype(jnp.bfloat16),
                preferred_element_type=jnp.float32) + b3_ref[...]
    h = jnp.maximum(h, 0.0)
    h = jnp.dot(w4_ref[...], h.astype(jnp.bfloat16),
                preferred_element_type=jnp.float32) + b4_ref[...]
    o_ref[...] = jnp.tanh(h) * 8.0                            # [8, tm], lane-dense


def mlp_pallas(x_t, w1, b1, w2, b2, w3, b3, w4, b4, tm):
    FIN, P = x_t.shape          # FIN = 8 (6 real features + 2 zero pad rows)
    HID = w1.shape[0]
    FOUT = w4.shape[0]          # 8 (3 real flow rows + 5 zero rows)
    assert P % tm == 0
    return pl.pallas_call(
        _mlp_kernel,
        out_shape=jax.ShapeDtypeStruct((FOUT, P), jnp.float32),
        grid=(P // tm,),
        in_specs=[
            pl.BlockSpec((FIN, tm), lambda i: (0, i)),
            pl.BlockSpec((HID, FIN), lambda i: (0, 0)),
            pl.BlockSpec((HID, 1), lambda i: (0, 0)),
            pl.BlockSpec((HID, HID), lambda i: (0, 0)),
            pl.BlockSpec((HID, 1), lambda i: (0, 0)),
            pl.BlockSpec((HID, HID), lambda i: (0, 0)),
            pl.BlockSpec((HID, 1), lambda i: (0, 0)),
            pl.BlockSpec((FOUT, HID), lambda i: (0, 0)),
            pl.BlockSpec((FOUT, 1), lambda i: (0, 0)),
        ],
        out_specs=pl.BlockSpec((FOUT, tm), lambda i: (0, i)),
        compiler_params=pltpu.CompilerParams(dimension_semantics=("parallel",)),
    )(x_t, w1, b1, w2, b2, w3, b3, w4, b4)


def _choose_tm(P):
    for tm in (2048, 1024, 512, 256, 128):
        if P % tm == 0:
            return tm
    return P


# --------------------------------------------------------------------------- #
# Pallas kernel 2: trilinear combine for grid_sample (align_corners=True,
# padding_mode='zeros').  Corner values are pre-gathered (clamped indices) in
# JAX; floor/frac, zeros-padding mask and the 8-corner blend run in-kernel.
#   c_ref : [8*bz*C, tr, L]  corner values, index = (corner*bz + b)*C + c
#   p_ref : [3*bz,   tr, L]  raw sampling coords, index = axis*bz + b
#   o_ref : [bz*C,   tr, L]
# --------------------------------------------------------------------------- #
def _blend_kernel(c_ref, p_ref, o_ref, *, D, H, W, bz, C):
    def _inb(v, size):
        return ((v >= 0.0) & (v <= size - 1.0)).astype(jnp.float32)

    for b in range(bz):
        pd = p_ref[0 * bz + b]
        ph = p_ref[1 * bz + b]
        pw = p_ref[2 * bz + b]
        d0 = jnp.floor(pd)
        h0 = jnp.floor(ph)
        w0 = jnp.floor(pw)
        fd = pd - d0
        fh = ph - h0
        fw = pw - w0
        wd = ((1.0 - fd) * _inb(d0, D), fd * _inb(d0 + 1.0, D))
        wh = ((1.0 - fh) * _inb(h0, H), fh * _inb(h0 + 1.0, H))
        ww = ((1.0 - fw) * _inb(w0, W), fw * _inb(w0 + 1.0, W))
        wts = []
        for bd in (0, 1):
            for bh in (0, 1):
                for bw in (0, 1):
                    wts.append(wd[bd] * wh[bh] * ww[bw])
        for c in range(C):
            acc = wts[0] * c_ref[(0 * bz + b) * C + c]
            for k in range(1, 8):
                acc = acc + wts[k] * c_ref[(k * bz + b) * C + c]
            o_ref[b * C + c] = acc.astype(o_ref.dtype)


def trilinear_pallas(corners, positions, D, H, W, bz, C, tr):
    KC, NR, L = corners.shape
    PC = positions.shape[0]
    assert NR % tr == 0
    return pl.pallas_call(
        functools.partial(_blend_kernel, D=float(D), H=float(H), W=float(W),
                          bz=bz, C=C),
        out_shape=jax.ShapeDtypeStruct((bz * C, NR, L), jnp.float32),
        grid=(NR // tr,),
        in_specs=[
            pl.BlockSpec((KC, tr, L), lambda i: (0, i, 0)),
            pl.BlockSpec((PC, tr, L), lambda i: (0, i, 0)),
        ],
        out_specs=pl.BlockSpec((bz * C, tr, L), lambda i: (0, i, 0)),
        compiler_params=pltpu.CompilerParams(
            dimension_semantics=("parallel",),
            vmem_limit_bytes=32 * 1024 * 1024,
        ),
    )(corners, positions)


def _choose_chunk(N, target=32768):
    """Split flattened voxel count N into (NR, L) with a row tile tr so each grid
    step processes ~`target` voxels (fits default scoped VMEM on v5e/v6e/v7x)."""
    L = None
    for cand in (1024, 512, 256, 128):
        if N % cand == 0:
            L = cand
            break
    if L is None:
        return 1, N, 1
    NR = N // L
    tr = NR                         # full-extent rows: always a legal block shape
    for cand in (64, 32, 16, 8):    # 8-aligned row tiles only
        if cand * L <= target and NR % cand == 0:
            tr = cand
            break
    return NR, L, tr


# --------------------------------------------------------------------------- #
# SpatialTransformer equivalent: sample img at (d + flow_d, h + flow_h, w + flow_w)
# with trilinear interp, align_corners=True, zeros padding.
# --------------------------------------------------------------------------- #
def spatial_transformer(img, flow):
    bz, C, D, H, W = img.shape
    N = D * H * W
    ad = jnp.arange(D, dtype=jnp.float32).reshape(1, D, 1, 1)
    ah = jnp.arange(H, dtype=jnp.float32).reshape(1, 1, H, 1)
    aw = jnp.arange(W, dtype=jnp.float32).reshape(1, 1, 1, W)
    pd = (ad + flow[:, 0]).reshape(bz, N)
    ph = (ah + flow[:, 1]).reshape(bz, N)
    pw = (aw + flow[:, 2]).reshape(bz, N)

    d0 = jnp.floor(pd).astype(jnp.int32)
    h0 = jnp.floor(ph).astype(jnp.int32)
    w0 = jnp.floor(pw).astype(jnp.int32)

    img_flat = img.reshape(bz, C, -1)

    # TODO(synk): the data-dependent 8-corner 3-D gather has no clean Pallas
    # equivalent on TPU (arbitrary gather), so it stays as XLA glue.  All dense
    # work (frac/mask/blend) is fused into the Pallas kernel; corners are gathered
    # with clamped indices only (no separate mask pass, no xC frac broadcast).
    corners = []
    for bd in (0, 1):
        for bh in (0, 1):
            for bw in (0, 1):
                di = jnp.clip(d0 + bd, 0, D - 1)
                hi = jnp.clip(h0 + bh, 0, H - 1)
                wi = jnp.clip(w0 + bw, 0, W - 1)
                idx = di * (H * W) + hi * W + wi                     # [bz, N]
                idx_b = jnp.broadcast_to(idx[:, None, :], (bz, C, N))
                corners.append(jnp.take_along_axis(img_flat, idx_b, axis=2))
    corners = jnp.stack(corners, axis=0)                             # [8, bz, C, N]
    positions = jnp.stack([pd, ph, pw], axis=0)                      # [3, bz, N]

    NR, L, tr = _choose_chunk(N)
    corners = corners.reshape(8 * bz * C, NR, L)
    positions = positions.reshape(3 * bz, NR, L)

    out = trilinear_pallas(corners, positions, D, H, W, bz, C, tr)   # [bz*C, NR, L]
    return out.reshape(bz, C, D, H, W)


# --------------------------------------------------------------------------- #
# Full gen_new forward (scaled: latent grid g, output size S = img spatial dim)
# --------------------------------------------------------------------------- #
def gen_new_forward(z, img, params, g):
    (w1t, b1, w2t, b2, w3t, b3, w4t, b4) = params
    bz = z.shape[0]
    S = img.shape[2]
    Ng = g ** 3
    P = Ng * bz

    lin = jnp.linspace(0.0, 1.0, g, dtype=jnp.float32)
    gx, gy, gzz = jnp.meshgrid(lin, lin, lin, indexing="ij")
    grid_feat = jnp.stack([gx, gy, gzz], axis=0)                     # [3, g, g, g]

    z_br = jnp.ones((bz, 1, g, g, g), jnp.float32) * z               # [bz, 3, g, g, g]
    grid_t = jnp.broadcast_to(grid_feat[None], (bz, 3, g, g, g))
    x6 = jnp.stack([z_br, grid_t], axis=1).reshape(bz, 6, Ng)        # [bz, 6, Ng]
    # Transposed MLP layout [features, points]; point order (n, b) matches the
    # reference .permute([2,0,1]).reshape(-1,6).  Pad features 6 -> 8 (not 128).
    x_t = x6.transpose(1, 2, 0).reshape(6, P)
    x_t = jnp.pad(x_t, ((0, 2), (0, 0)))                             # [8, P]

    tm = _choose_tm(P)
    flow_t = mlp_pallas(x_t, w1t, b1, w2t, b2, w3t, b3, w4t, b4, tm)  # [8, P]
    flow = flow_t[:3].reshape(3, Ng, bz).transpose(2, 0, 1).reshape(bz, 3, g, g, g)

    # nn.Upsample(size=[S,S,S]) default mode='nearest': src = floor(dst*g/S)
    idx = (jnp.arange(S) * g) // S
    flow_up = flow[:, :, idx][:, :, :, idx][:, :, :, :, idx]

    return spatial_transformer(img, flow_up)


# --------------------------------------------------------------------------- #
if __name__ == "__main__":
    key = jax.random.PRNGKey(0)
    keys = jax.random.split(key, 10)

    bz, C = 2, 2        # batch, image channels
    g, S = 8, 16        # latent grid (module: 64), output size (module: 256)
    HID = 256

    def lin_init(kw, kb, fin, fout):
        lim = 1.0 / math.sqrt(fin)
        W = jax.random.uniform(kw, (fin, fout), jnp.float32, -lim, lim)
        b = jax.random.uniform(kb, (fout,), jnp.float32, -lim, lim)
        return W, b

    W1, b1 = lin_init(keys[0], keys[1], 6, HID)
    W2, b2 = lin_init(keys[2], keys[3], HID, HID)
    W3, b3 = lin_init(keys[4], keys[5], HID, HID)
    W4, b4 = lin_init(keys[6], keys[7], HID, 3)

    # Transposed, feature-padded, bf16 weight layout (MXU inputs); biases stay f32
    # as column vectors that broadcast along the lane (points) axis.
    W1t = jnp.zeros((HID, 8), jnp.float32).at[:, :6].set(W1.T).astype(jnp.bfloat16)
    W2t = W2.T.astype(jnp.bfloat16)
    W3t = W3.T.astype(jnp.bfloat16)
    W4t = jnp.zeros((8, HID), jnp.float32).at[:3, :].set(W4.T).astype(jnp.bfloat16)
    b1c = b1.reshape(HID, 1)
    b2c = b2.reshape(HID, 1)
    b3c = b3.reshape(HID, 1)
    b4c = jnp.zeros((8, 1), jnp.float32).at[:3, 0].set(b4)
    params = (W1t, b1c, W2t, b2c, W3t, b3c, W4t, b4c)

    z = jax.random.normal(keys[8], (bz, 3, 1, 1, 1), jnp.float32)
    img = jax.random.normal(keys[9], (bz, C, S, S, S), jnp.float32)

    fwd = jax.jit(gen_new_forward, static_argnames=("g",))
    out = fwd(z, img, params, g=g)
    jax.block_until_ready(out)
    assert out.shape == (bz, C, S, S, S)
    assert bool(jnp.all(jnp.isfinite(out)))
    print("KERNEL_OK")
</pallas_src>

<mosaic_0001>
module attributes {stable_mosaic.version = 11 : i64} {
  func.func private @main(%arg0: i32) attributes {dimension_semantics = [#tpu.dimension_semantics<core_parallel>], iteration_bounds = array<i64: 2>, tpu.core_type = #tpu.core_type<sc_scalar_subcore>, window_params = []} {
    return
  }
}

module attributes {stable_mosaic.version = 11 : i64} {
  func.func private @main(%arg0: i32) attributes {dimension_semantics = [#tpu.dimension_semantics<core_parallel>], iteration_bounds = array<i64: 2>, tpu.core_type = #tpu.core_type<sc_scalar_subcore>, window_params = []} {
    return
  }
}

module attributes {stable_mosaic.version = 11 : i64} {
  func.func @_mlp_kernel(%arg0: i32, %arg1: memref<8x1024xf32, #tpu.memory_space<vmem>>, %arg2: memref<256x8xbf16, #tpu.memory_space<vmem>>, %arg3: memref<256x1xf32, #tpu.memory_space<vmem>>, %arg4: memref<256x256xbf16, #tpu.memory_space<vmem>>, %arg5: memref<256x1xf32, #tpu.memory_space<vmem>>, %arg6: memref<256x256xbf16, #tpu.memory_space<vmem>>, %arg7: memref<256x1xf32, #tpu.memory_space<vmem>>, %arg8: memref<8x256xbf16, #tpu.memory_space<vmem>>, %arg9: memref<8x1xf32, #tpu.memory_space<vmem>>, %arg10: memref<8x1024xf32, #tpu.memory_space<vmem>>) attributes {dimension_semantics = [#tpu.dimension_semantics<parallel>], iteration_bounds = array<i64: 1>, scalar_prefetch = 0 : i64, scratch_operands = 0 : i64, tpu.core_type = #tpu.core_type<tc>, window_params = [{transform_indices = @transform_0, window_bounds = array<i64: 8, 1024>}, {pipeline_mode = #tpu.pipeline_mode<synchronous>, transform_indices = @transform_1, window_bounds = array<i64: 256, 8>}, {pipeline_mode = #tpu.pipeline_mode<synchronous>, transform_indices = @transform_2, window_bounds = array<i64: 256, 1>}, {pipeline_mode = #tpu.pipeline_mode<synchronous>, transform_indices = @transform_3, window_bounds = array<i64: 256, 256>}, {pipeline_mode = #tpu.pipeline_mode<synchronous>, transform_indices = @transform_4, window_bounds = array<i64: 256, 1>}, {pipeline_mode = #tpu.pipeline_mode<synchronous>, transform_indices = @transform_5, window_bounds = array<i64: 256, 256>}, {pipeline_mode = #tpu.pipeline_mode<synchronous>, transform_indices = @transform_6, window_bounds = array<i64: 256, 1>}, {pipeline_mode = #tpu.pipeline_mode<synchronous>, transform_indices = @transform_7, window_bounds = array<i64: 8, 256>}, {pipeline_mode = #tpu.pipeline_mode<synchronous>, transform_indices = @transform_8, window_bounds = array<i64: 8, 1>}, {transform_indices = @transform_9, window_bounds = array<i64: 8, 1024>}]} {
    %c0 = arith.constant 0 : index
    %c0_0 = arith.constant 0 : index
    %0 = vector.load %arg1[%c0, %c0_0] : memref<8x1024xf32, #tpu.memory_space<vmem>>, vector<8x1024xf32>
    %1 = arith.truncf %0 : vector<8x1024xf32> to vector<8x1024xbf16>
    %c0_1 = arith.constant 0 : index
    %c0_2 = arith.constant 0 : index
    %2 = vector.load %arg2[%c0_1, %c0_2] : memref<256x8xbf16, #tpu.memory_space<vmem>>, vector<256x8xbf16>
    %cst = arith.constant dense<0.000000e+00> : vector<256x1024xf32>
    %3 = tpu.matmul %2, %1, %cst {dimension_numbers = #tpu.dot_dimension_numbers<[1], [0], [0], [1], [0, 0, 1, 1], [], []>} : vector<256x8xbf16>, vector<8x1024xbf16>, vector<256x1024xf32> -> vector<256x1024xf32>
    %c0_3 = arith.constant 0 : index
    %c0_4 = arith.constant 0 : index
    %4 = vector.load %arg3[%c0_3, %c0_4] : memref<256x1xf32, #tpu.memory_space<vmem>>, vector<256x1xf32>
    %5 = vector.broadcast %4 : vector<256x1xf32> to vector<256x1024xf32>
    %6 = arith.addf %3, %5 : vector<256x1024xf32>
    %cst_5 = arith.constant 0.000000e+00 : f32
    %7 = vector.broadcast %cst_5 : f32 to vector<256x1024xf32>
    %8 = arith.maximumf %6, %7 : vector<256x1024xf32>
    %c0_6 = arith.constant 0 : index
    %c0_7 = arith.constant 0 : index
    %9 = vector.load %arg4[%c0_6, %c0_7] : memref<256x256xbf16, #tpu.memory_space<vmem>>, vector<256x256xbf16>
    %10 = arith.truncf %8 : vector<256x1024xf32> to vector<256x1024xbf16>
    %cst_8 = arith.constant dense<0.000000e+00> : vector<256x1024xf32>
    %11 = tpu.matmul %9, %10, %cst_8 {dimension_numbers = #tpu.dot_dimension_numbers<[1], [0], [0], [1], [0, 0, 1, 1], [], []>} : vector<256x256xbf16>, vector<256x1024xbf16>, vector<256x1024xf32> -> vector<256x1024xf32>
    %c0_9 = arith.constant 0 : index
    %c0_10 = arith.constant 0 : index
    %12 = vector.load %arg5[%c0_9, %c0_10] : memref<256x1xf32, #tpu.memory_space<vmem>>, vector<256x1xf32>
    %13 = vector.broadcast %12 : vector<256x1xf32> to vector<256x1024xf32>
    %14 = arith.addf %11, %13 : vector<256x1024xf32>
    %cst_11 = arith.constant 0.000000e+00 : f32
    %15 = vector.broadcast %cst_11 : f32 to vector<256x1024xf32>
    %16 = arith.maximumf %14, %15 : vector<256x1024xf32>
    %c0_12 = arith.constant 0 : index
    %c0_13 = arith.constant 0 : index
    %17 = vector.load %arg6[%c0_12, %c0_13] : memref<256x256xbf16, #tpu.memory_space<vmem>>, vector<256x256xbf16>
    %18 = arith.truncf %16 : vector<256x1024xf32> to vector<256x1024xbf16>
    %cst_14 = arith.constant dense<0.000000e+00> : vector<256x1024xf32>
    %19 = tpu.matmul %17, %18, %cst_14 {dimension_numbers = #tpu.dot_dimension_numbers<[1], [0], [0], [1], [0, 0, 1, 1], [], []>} : vector<256x256xbf16>, vector<256x1024xbf16>, vector<256x1024xf32> -> vector<256x1024xf32>
    %c0_15 = arith.constant 0 : index
    %c0_16 = arith.constant 0 : index
    %20 = vector.load %arg7[%c0_15, %c0_16] : memref<256x1xf32, #tpu.memory_space<vmem>>, vector<256x1xf32>
    %21 = vector.broadcast %20 : vector<256x1xf32> to vector<256x1024xf32>
    %22 = arith.addf %19, %21 : vector<256x1024xf32>
    %cst_17 = arith.constant 0.000000e+00 : f32
    %23 = vector.broadcast %cst_17 : f32 to vector<256x1024xf32>
    %24 = arith.maximumf %22, %23 : vector<256x1024xf32>
    %c0_18 = arith.constant 0 : index
    %c0_19 = arith.constant 0 : index
    %25 = vector.load %arg8[%c0_18, %c0_19] : memref<8x256xbf16, #tpu.memory_space<vmem>>, vector<8x256xbf16>
    %26 = arith.truncf %24 : vector<256x1024xf32> to vector<256x1024xbf16>
    %cst_20 = arith.constant dense<0.000000e+00> : vector<8x1024xf32>
    %27 = tpu.matmul %25, %26, %cst_20 {dimension_numbers = #tpu.dot_dimension_numbers<[1], [0], [0], [1], [0, 0, 1, 1], [], []>} : vector<8x256xbf16>, vector<256x1024xbf16>, vector<8x1024xf32> -> vector<8x1024xf32>
    %c0_21 = arith.constant 0 : index
    %c0_22 = arith.constant 0 : index
    %28 = vector.load %arg9[%c0_21, %c0_22] : memref<8x1xf32, #tpu.memory_space<vmem>>, vector<8x1xf32>
    %29 = vector.broadcast %28 : vector<8x1xf32> to vector<8x1024xf32>
    %30 = arith.addf %27, %29 : vector<8x1024xf32>
    %31 = math.tanh %30 : vector<8x1024xf32>
    %cst_23 = arith.constant 8.000000e+00 : f32
    %32 = vector.broadcast %cst_23 : f32 to vector<8x1024xf32>
    %33 = arith.mulf %31, %32 : vector<8x1024xf32>
    %c0_24 = arith.constant 0 : index
    %c0_25 = arith.constant 0 : index
    %34 = vector.load %arg10[%c0_24, %c0_25] : memref<8x1024xf32, #tpu.memory_space<vmem>>, vector<8x1024xf32>
    tpu.vector_store %arg10[%c0_24, %c0_25], %33 {strides = array<i32>} : memref<8x1024xf32, #tpu.memory_space<vmem>>, vector<8x1024xf32>,
    return
  }
  func.func @transform_0(%arg0: i32) -> (i32, i32) {
    %c0_i32 = arith.constant 0 : i32
    %c0_i32_0 = arith.constant 0 : i32
    return %c0_i32, %arg0 : i32, i32
  }
  func.func @transform_1(%arg0: i32) -> (i32, i32) {
    %c0_i32 = arith.constant 0 : i32
    %c0_i32_0 = arith.constant 0 : i32
    %c0_i32_1 = arith.constant 0 : i32
    return %c0_i32, %c0_i32_0 : i32, i32
  }
  func.func @transform_2(%arg0: i32) -> (i32, i32) {
    %c0_i32 = arith.constant 0 : i32
    %c0_i32_0 = arith.constant 0 : i32
    %c0_i32_1 = arith.constant 0 : i32
    return %c0_i32, %c0_i32_0 : i32, i32
  }
  func.func @transform_3(%arg0: i32) -> (i32, i32) {
    %c0_i32 = arith.constant 0 : i32
    %c0_i32_0 = arith.constant 0 : i32
    %c0_i32_1 = arith.constant 0 : i32
    return %c0_i32, %c0_i32_0 : i32, i32
  }
  func.func @transform_4(%arg0: i32) -> (i32, i32) {
    %c0_i32 = arith.constant 0 : i32
    %c0_i32_0 = arith.constant 0 : i32
    %c0_i32_1 = arith.constant 0 : i32
    return %c0_i32, %c0_i32_0 : i32, i32
  }
  func.func @transform_5(%arg0: i32) -> (i32, i32) {
    %c0_i32 = arith.constant 0 : i32
    %c0_i32_0 = arith.constant 0 : i32
    %c0_i32_1 = arith.constant 0 : i32
    return %c0_i32, %c0_i32_0 : i32, i32
  }
  func.func @transform_6(%arg0: i32) -> (i32, i32) {
    %c0_i32 = arith.constant 0 : i32
    %c0_i32_0 = arith.constant 0 : i32
    %c0_i32_1 = arith.constant 0 : i32
    return %c0_i32, %c0_i32_0 : i32, i32
  }
  func.func @transform_7(%arg0: i32) -> (i32, i32) {
    %c0_i32 = arith.constant 0 : i32
    %c0_i32_0 = arith.constant 0 : i32
    %c0_i32_1 = arith.constant 0 : i32
    return %c0_i32, %c0_i32_0 : i32, i32
  }
  func.func @transform_8(%arg0: i32) -> (i32, i32) {
    %c0_i32 = arith.constant 0 : i32
    %c0_i32_0 = arith.constant 0 : i32
    %c0_i32_1 = arith.constant 0 : i32
    return %c0_i32, %c0_i32_0 : i32, i32
  }
  func.func @transform_9(%arg0: i32) -> (i32, i32) {
    %c0_i32 = arith.constant 0 : i32
    %c0_i32_0 = arith.constant 0 : i32
    return %c0_i32, %arg0 : i32, i32
  }
}

module attributes {stable_mosaic.version = 11 : i64} {
  func.func @_blend_kernel(%arg0: i32, %arg1: memref<32x4x1024xf32, #tpu.memory_space<vmem>>, %arg2: memref<6x4x1024xf32, #tpu.memory_space<vmem>>, %arg3: memref<4x4x1024xf32, #tpu.memory_space<vmem>>) attributes {dimension_semantics = [#tpu.dimension_semantics<parallel>], iteration_bounds = array<i64: 1>, scalar_prefetch = 0 : i64, scratch_operands = 0 : i64, tpu.core_type = #tpu.core_type<tc>, window_params = [{transform_indices = @transform_0, window_bounds = array<i64: 32, 4, 1024>}, {transform_indices = @transform_1, window_bounds = array<i64: 6, 4, 1024>}, {transform_indices = @transform_2, window_bounds = array<i64: 4, 4, 1024>}]} {
    %c0 = arith.constant 0 : index
    %c0_0 = arith.constant 0 : index
    %c0_1 = arith.constant 0 : index
    %0 = vector.load %arg2[%c0, %c0_0, %c0_1] : memref<6x4x1024xf32, #tpu.memory_space<vmem>>, vector<1x4x1024xf32>
    %1 = vector.shape_cast %0 : vector<1x4x1024xf32> to vector<4x1024xf32>
    %c2 = arith.constant 2 : index
    %c0_2 = arith.constant 0 : index
    %c0_3 = arith.constant 0 : index
    %2 = vector.load %arg2[%c2, %c0_2, %c0_3] : memref<6x4x1024xf32, #tpu.memory_space<vmem>>, vector<1x4x1024xf32>
    %3 = vector.shape_cast %2 : vector<1x4x1024xf32> to vector<4x1024xf32>
    %c4 = arith.constant 4 : index
    %c0_4 = arith.constant 0 : index
    %c0_5 = arith.constant 0 : index
    %4 = vector.load %arg2[%c4, %c0_4, %c0_5] : memref<6x4x1024xf32, #tpu.memory_space<vmem>>, vector<1x4x1024xf32>
    %5 = vector.shape_cast %4 : vector<1x4x1024xf32> to vector<4x1024xf32>
    %6 = math.floor %1 : vector<4x1024xf32>
    %7 = math.floor %3 : vector<4x1024xf32>
    %8 = math.floor %5 : vector<4x1024xf32>
    %9 = arith.subf %1, %6 : vector<4x1024xf32>
    %10 = arith.subf %3, %7 : vector<4x1024xf32>
    %11 = arith.subf %5, %8 : vector<4x1024xf32>
    %cst = arith.constant 1.000000e+00 : f32
    %12 = vector.broadcast %cst : f32 to vector<4x1024xf32>
    %13 = arith.subf %12, %9 : vector<4x1024xf32>
    %cst_6 = arith.constant 0.000000e+00 : f32
    %14 = vector.broadcast %cst_6 : f32 to vector<4x1024xf32>
    %15 = arith.cmpf oge, %6, %14 : vector<4x1024xf32>
    %cst_7 = arith.constant 1.500000e+01 : f32
    %16 = vector.broadcast %cst_7 : f32 to vector<4x1024xf32>
    %17 = arith.cmpf ole, %6, %16 : vector<4x1024xf32>
    %18 = arith.andi %15, %17 : vector<4x1024xi1>
    %19 = arith.extui %18 : vector<4x1024xi1> to vector<4x1024xi32>
    %20 = arith.sitofp %19 : vector<4x1024xi32> to vector<4x1024xf32>
    %21 = arith.mulf %13, %20 : vector<4x1024xf32>
    %cst_8 = arith.constant 1.000000e+00 : f32
    %22 = vector.broadcast %cst_8 : f32 to vector<4x1024xf32>
    %23 = arith.addf %6, %22 : vector<4x1024xf32>
    %cst_9 = arith.constant 0.000000e+00 : f32
    %24 = vector.broadcast %cst_9 : f32 to vector<4x1024xf32>
    %25 = arith.cmpf oge, %23, %24 : vector<4x1024xf32>
    %cst_10 = arith.constant 1.500000e+01 : f32
    %26 = vector.broadcast %cst_10 : f32 to vector<4x1024xf32>
    %27 = arith.cmpf ole, %23, %26 : vector<4x1024xf32>
    %28 = arith.andi %25, %27 : vector<4x1024xi1>
    %29 = arith.extui %28 : vector<4x1024xi1> to vector<4x1024xi32>
    %30 = arith.sitofp %29 : vector<4x1024xi32> to vector<4x1024xf32>
    %31 = arith.mulf %9, %30 : vector<4x1024xf32>
    %cst_11 = arith.constant 1.000000e+00 : f32
    %32 = vector.broadcast %cst_11 : f32 to vector<4x1024xf32>
    %33 = arith.subf %32, %10 : vector<4x1024xf32>
    %cst_12 = arith.constant 0.000000e+00 : f32
    %34 = vector.broadcast %cst_12 : f32 to vector<4x1024xf32>
    %35 = arith.cmpf oge, %7, %34 : vector<4x1024xf32>
    %cst_13 = arith.constant 1.500000e+01 : f32
    %36 = vector.broadcast %cst_13 : f32 to vector<4x1024xf32>
    %37 = arith.cmpf ole, %7, %36 : vector<4x1024xf32>
    %38 = arith.andi %35, %37 : vector<4x1024xi1>
    %39 = arith.extui %38 : vector<4x1024xi1> to vector<4x1024xi32>
    %40 = arith.sitofp %39 : vector<4x1024xi32> to vector<4x1024xf32>
    %41 = arith.mulf %33, %40 : vector<4x1024xf32>
    %cst_14 = arith.constant 1.000000e+00 : f32
    %42 = vector.broadcast %cst_14 : f32 to vector<4x1024xf32>
    %43 = arith.addf %7, %42 : vector<4x1024xf32>
    %cst_15 = arith.constant 0.000000e+00 : f32
    %44 = vector.broadcast %cst_15 : f32 to vector<4x1024xf32>
    %45 = arith.cmpf oge, %43, %44 : vector<4x1024xf32>
    %cst_16 = arith.constant 1.500000e+01 : f32
    %46 = vector.broadcast %cst_16 : f32 to vector<4x1024xf32>
    %47 = arith.cmpf ole, %43, %46 : vector<4x1024xf32>
    %48 = arith.andi %45, %47 : vector<4x1024xi1>
    %49 = arith.extui %48 : vector<4x1024xi1> to vector<4x1024xi32>
    %50 = arith.sitofp %49 : vector<4x1024xi32> to vector<4x1024xf32>
    %51 = arith.mulf %10, %50 : vector<4x1024xf32>
    %cst_17 = arith.constant 1.000000e+00 : f32
    %52 = vector.broadcast %cst_17 : f32 to vector<4x1024xf32>
    %53 = arith.subf %52, %11 : vector<4x1024xf32>
    %cst_18 = arith.constant 0.000000e+00 : f32
    %54 = vector.broadcast %cst_18 : f32 to vector<4x1024xf32>
    %55 = arith.cmpf oge, %8, %54 : vector<4x1024xf32>
    %cst_19 = arith.constant 1.500000e+01 : f32
    %56 = vector.broadcast %cst_19 : f32 to vector<4x1024xf32>
    %57 = arith.cmpf ole, %8, %56 : vector<4x1024xf32>
    %58 = arith.andi %55, %57 : vector<4x1024xi1>
    %59 = arith.extui %58 : vector<4x1024xi1> to vector<4x1024xi32>
    %60 = arith.sitofp %59 : vector<4x1024xi32> to vector<4x1024xf32>
    %61 = arith.mulf %53, %60 : vector<4x1024xf32>
    %cst_20 = arith.constant 1.000000e+00 : f32
    %62 = vector.broadcast %cst_20 : f32 to vector<4x1024xf32>
    %63 = arith.addf %8, %62 : vector<4x1024xf32>
    %cst_21 = arith.constant 0.000000e+00 : f32
    %64 = vector.broadcast %cst_21 : f32 to vector<4x1024xf32>
    %65 = arith.cmpf oge, %63, %64 : vector<4x1024xf32>
    %cst_22 = arith.constant 1.500000e+01 : f32
    %66 = vector.broadcast %cst_22 : f32 to vector<4x1024xf32>
    %67 = arith.cmpf ole, %63, %66 : vector<4x1024xf32>
    %68 = arith.andi %65, %67 : vector<4x1024xi1>
    %69 = arith.extui %68 : vector<4x1024xi1> to vector<4x1024xi32>
    %70 = arith.sitofp %69 : vector<4x1024xi32> to vector<4x1024xf32>
    %71 = arith.mulf %11, %70 : vector<4x1024xf32>
    %72 = arith.mulf %21, %41 : vector<4x1024xf32>
    %73 = arith.mulf %72, %61 : vector<4x1024xf32>
    %74 = arith.mulf %21, %41 : vector<4x1024xf32>
    %75 = arith.mulf %74, %71 : vector<4x1024xf32>
    %76 = arith.mulf %21, %51 : vector<4x1024xf32>
    %77 = arith.mulf %76, %61 : vector<4x1024xf32>
    %78 = arith.mulf %21, %51 : vector<4x1024xf32>
    %79 = arith.mulf %78, %71 : vector<4x1024xf32>
    %80 = arith.mulf %31, %41 : vector<4x1024xf32>
    %81 = arith.mulf %80, %61 : vector<4x1024xf32>
    %82 = arith.mulf %31, %41 : vector<4x1024xf32>
    %83 = arith.mulf %82, %71 : vector<4x1024xf32>
    %84 = arith.mulf %31, %51 : vector<4x1024xf32>
    %85 = arith.mulf %84, %61 : vector<4x1024xf32>
    %86 = arith.mulf %31, %51 : vector<4x1024xf32>
    %87 = arith.mulf %86, %71 : vector<4x1024xf32>
    %c0_23 = arith.constant 0 : index
    %c0_24 = arith.constant 0 : index
    %c0_25 = arith.constant 0 : index
    %88 = vector.load %arg1[%c0_23, %c0_24, %c0_25] : memref<32x4x1024xf32, #tpu.memory_space<vmem>>, vector<1x4x1024xf32>
    %89 = vector.shape_cast %88 : vector<1x4x1024xf32> to vector<4x1024xf32>
    %90 = arith.mulf %73, %89 : vector<4x1024xf32>
    %c4_26 = arith.constant 4 : index
    %c0_27 = arith.constant 0 : index
    %c0_28 = arith.constant 0 : index
    %91 = vector.load %arg1[%c4_26, %c0_27, %c0_28] : memref<32x4x1024xf32, #tpu.memory_space<vmem>>, vector<1x4x1024xf32>
    %92 = vector.shape_cast %91 : vector<1x4x1024xf32> to vector<4x1024xf32>
    %93 = arith.mulf %75, %92 : vector<4x1024xf32>
    %94 = arith.addf %90, %93 : vector<4x1024xf32>
    %c8 = arith.constant 8 : index
    %c0_29 = arith.constant 0 : index
    %c0_30 = arith.constant 0 : index
    %95 = vector.load %arg1[%c8, %c0_29, %c0_30] : memref<32x4x1024xf32, #tpu.memory_space<vmem>>, vector<1x4x1024xf32>
    %96 = vector.shape_cast %95 : vector<1x4x1024xf32> to vector<4x1024xf32>
    %97 = arith.mulf %77, %96 : vector<4x1024xf32>
    %98 = arith.addf %94, %97 : vector<4x1024xf32>
    %c12 = arith.constant 12 : index
    %c0_31 = arith.constant 0 : index
    %c0_32 = arith.constant 0 : index
    %99 = vector.load %arg1[%c12, %c0_31, %c0_32] : memref<32x4x1024xf32, #tpu.memory_space<vmem>>, vector<1x4x1024xf32>
    %100 = vector.shape_cast %99 : vector<1x4x1024xf32> to vector<4x1024xf32>
    %101 = arith.mulf %79, %100 : vector<4x1024xf32>
    %102 = arith.addf %98, %101 : vector<4x1024xf32>
    %c16 = arith.constant 16 : index
    %c0_33 = arith.constant 0 : index
    %c0_34 = arith.constant 0 : index
    %103 = vector.load %arg1[%c16, %c0_33, %c0_34] : memref<32x4x1024xf32, #tpu.memory_space<vmem>>, vector<1x4x1024xf32>
    %104 = vector.shape_cast %103 : vector<1x4x1024xf32> to vector<4x1024xf32>
    %105 = arith.mulf %81, %104 : vector<4x1024xf32>
    %106 = arith.addf %102, %105 : vector<4x1024xf32>
    %c20 = arith.constant 20 : index
    %c0_35 = arith.constant 0 : index
    %c0_36 = arith.constant 0 : index
    %107 = vector.load %arg1[%c20, %c0_35, %c0_36] : memref<32x4x1024xf32, #tpu.memory_space<vmem>>, vector<1x4x1024xf32>
    %108 = vector.shape_cast %107 : vector<1x4x1024xf32> to vector<4x1024xf32>
    %109 = arith.mulf %83, %108 : vector<4x1024xf32>
    %110 = arith.addf %106, %109 : vector<4x1024xf32>
    %c24 = arith.constant 24 : index
    %c0_37 = arith.constant 0 : index
    %c0_38 = arith.constant 0 : index
    %111 = vector.load %arg1[%c24, %c0_37, %c0_38] : memref<32x4x1024xf32, #tpu.memory_space<vmem>>, vector<1x4x1024xf32>
    %112 = vector.shape_cast %111 : vector<1x4x1024xf32> to vector<4x1024xf32>
    %113 = arith.mulf %85, %112 : vector<4x1024xf32>
    %114 = arith.addf %110, %113 : vector<4x1024xf32>
    %c28 = arith.constant 28 : index
    %c0_39 = arith.constant 0 : index
    %c0_40 = arith.constant 0 : index
    %115 = vector.load %arg1[%c28, %c0_39, %c0_40] : memref<32x4x1024xf32, #tpu.memory_space<vmem>>, vector<1x4x1024xf32>
    %116 = vector.shape_cast %115 : vector<1x4x1024xf32> to vector<4x1024xf32>
    %117 = arith.mulf %87, %116 : vector<4x1024xf32>
    %118 = arith.addf %114, %117 : vector<4x1024xf32>
    %c0_41 = arith.constant 0 : index
    %c0_42 = arith.constant 0 : index
    %c0_43 = arith.constant 0 : index
    %119 = vector.load %arg3[%c0_41, %c0_42, %c0_43] : memref<4x4x1024xf32, #tpu.memory_space<vmem>>, vector<1x4x1024xf32>
    %120 = vector.shape_cast %119 : vector<1x4x1024xf32> to vector<4x1024xf32>
    %121 = vector.shape_cast %118 : vector<4x1024xf32> to vector<1x4x1024xf32>
    tpu.vector_store %arg3[%c0_41, %c0_42, %c0_43], %121 {strides = array<i32>} : memref<4x4x1024xf32, #tpu.memory_space<vmem>>, vector<1x4x1024xf32>,
    %c1 = arith.constant 1 : index
    %c0_44 = arith.constant 0 : index
    %c0_45 = arith.constant 0 : index
    %122 = vector.load %arg1[%c1, %c0_44, %c0_45] : memref<32x4x1024xf32, #tpu.memory_space<vmem>>, vector<1x4x1024xf32>
    %123 = vector.shape_cast %122 : vector<1x4x1024xf32> to vector<4x1024xf32>
    %124 = arith.mulf %73, %123 : vector<4x1024xf32>
    %c5 = arith.constant 5 : index
    %c0_46 = arith.constant 0 : index
    %c0_47 = arith.constant 0 : index
    %125 = vector.load %arg1[%c5, %c0_46, %c0_47] : memref<32x4x1024xf32, #tpu.memory_space<vmem>>, vector<1x4x1024xf32>
    %126 = vector.shape_cast %125 : vector<1x4x1024xf32> to vector<4x1024xf32>
    %127 = arith.mulf %75, %126 : vector<4x1024xf32>
    %128 = arith.addf %124, %127 : vector<4x1024xf32>
    %c9 = arith.constant 9 : index
    %c0_48 = arith.constant 0 : index
    %c0_49 = arith.constant 0 : index
    %129 = vector.load %arg1[%c9, %c0_48, %c0_49] : memref<32x4x1024xf32, #tpu.memory_space<vmem>>, vector<1x4x1024xf32>
    %130 = vector.shape_cast %129 : vector<1x4x1024xf32> to vector<4x1024xf32>
    %131 = arith.mulf %77, %130 : vector<4x1024xf32>
    %132 = arith.addf %128, %131 : vector<4x1024xf32>
    %c13 = arith.constant 13 : index
    %c0_50 = arith.constant 0 : index
    %c0_51 = arith.constant 0 : index
    %133 = vector.load %arg1[%c13, %c0_50, %c0_51] : memref<32x4x1024xf32, #tpu.memory_space<vmem>>, vector<1x4x1024xf32>
    %134 = vector.shape_cast %133 : vector<1x4x1024xf32> to vector<4x1024xf32>
    %135 = arith.mulf %79, %134 : vector<4x1024xf32>
    %136 = arith.addf %132, %135 : vector<4x1024xf32>
    %c17 = arith.constant 17 : index
    %c0_52 = arith.constant 0 : index
    %c0_53 = arith.constant 0 : index
    %137 = vector.load %arg1[%c17, %c0_52, %c0_53] : memref<32x4x1024xf32, #tpu.memory_space<vmem>>, vector<1x4x1024xf32>
    %138 = vector.shape_cast %137 : vector<1x4x1024xf32> to vector<4x1024xf32>
    %139 = arith.mulf %81, %138 : vector<4x1024xf32>
    %140 = arith.addf %136, %139 : vector<4x1024xf32>
    %c21 = arith.constant 21 : index
    %c0_54 = arith.constant 0 : index
    %c0_55 = arith.constant 0 : index
    %141 = vector.load %arg1[%c21, %c0_54, %c0_55] : memref<32x4x1024xf32, #tpu.memory_space<vmem>>, vector<1x4x1024xf32>
    %142 = vector.shape_cast %141 : vector<1x4x1024xf32> to vector<4x1024xf32>
    %143 = arith.mulf %83, %142 : vector<4x1024xf32>
    %144 = arith.addf %140, %143 : vector<4x1024xf32>
    %c25 = arith.constant 25 : index
    %c0_56 = arith.constant 0 : index
    %c0_57 = arith.constant 0 : index
    %145 = vector.load %arg1[%c25, %c0_56, %c0_57] : memref<32x4x1024xf32, #tpu.memory_space<vmem>>, vector<1x4x1024xf32>
    %146 = vector.shape_cast %145 : vector<1x4x1024xf32> to vector<4x1024xf32>
    %147 = arith.mulf %85, %146 : vector<4x1024xf32>
    %148 = arith.addf %144, %147 : vector<4x1024xf32>
    %c29 = arith.constant 29 : index
    %c0_58 = arith.constant 0 : index
    %c0_59 = arith.constant 0 : index
    %149 = vector.load %arg1[%c29, %c0_58, %c0_59] : memref<32x4x1024xf32, #tpu.memory_space<vmem>>, vector<1x4x1024xf32>
    %150 = vector.shape_cast %149 : vector<1x4x1024xf32> to vector<4x1024xf32>
    %151 = arith.mulf %87, %150 : vector<4x1024xf32>
    %152 = arith.addf %148, %151 : vector<4x1024xf32>
    %c1_60 = arith.constant 1 : index
    %c0_61 = arith.constant 0 : index
    %c0_62 = arith.constant 0 : index
    %153 = vector.load %arg3[%c1_60, %c0_61, %c0_62] : memref<4x4x1024xf32, #tpu.memory_space<vmem>>, vector<1x4x1024xf32>
    %154 = vector.shape_cast %153 : vector<1x4x1024xf32> to vector<4x1024xf32>
    %155 = vector.shape_cast %152 : vector<4x1024xf32> to vector<1x4x1024xf32>
    tpu.vector_store %arg3[%c1_60, %c0_61, %c0_62], %155 {strides = array<i32>} : memref<4x4x1024xf32, #tpu.memory_space<vmem>>, vector<1x4x1024xf32>,
    %c1_63 = arith.constant 1 : index
    %c0_64 = arith.constant 0 : index
    %c0_65 = arith.constant 0 : index
    %156 = vector.load %arg2[%c1_63, %c0_64, %c0_65] : memref<6x4x1024xf32, #tpu.memory_space<vmem>>, vector<1x4x1024xf32>
    %157 = vector.shape_cast %156 : vector<1x4x1024xf32> to vector<4x1024xf32>
    %c3 = arith.constant 3 : index
    %c0_66 = arith.constant 0 : index
    %c0_67 = arith.constant 0 : index
    %158 = vector.load %arg2[%c3, %c0_66, %c0_67] : memref<6x4x1024xf32, #tpu.memory_space<vmem>>, vector<1x4x1024xf32>
    %159 = vector.shape_cast %158 : vector<1x4x1024xf32> to vector<4x1024xf32>
    %c5_68 = arith.constant 5 : index
    %c0_69 = arith.constant 0 : index
    %c0_70 = arith.constant 0 : index
    %160 = vector.load %arg2[%c5_68, %c0_69, %c0_70] : memref<6x4x1024xf32, #tpu.memory_space<vmem>>, vector<1x4x1024xf32>
    %161 = vector.shape_cast %160 : vector<1x4x1024xf32> to vector<4x1024xf32>
    %162 = math.floor %157 : vector<4x1024xf32>
    %163 = math.floor %159 : vector<4x1024xf32>
    %164 = math.floor %161 : vector<4x1024xf32>
    %165 = arith.subf %157, %162 : vector<4x1024xf32>
    %166 = arith.subf %159, %163 : vector<4x1024xf32>
    %167 = arith.subf %161, %164 : vector<4x1024xf32>
    %cst_71 = arith.constant 1.000000e+00 : f32
    %168 = vector.broadcast %cst_71 : f32 to vector<4x1024xf32>
    %169 = arith.subf %168, %165 : vector<4x1024xf32>
    %cst_72 = arith.constant 0.000000e+00 : f32
    %170 = vector.broadcast %cst_72 : f32 to vector<4x1024xf32>
    %171 = arith.cmpf oge, %162, %170 : vector<4x1024xf32>
    %cst_73 = arith.constant 1.500000e+01 : f32
    %172 = vector.broadcast %cst_73 : f32 to vector<4x1024xf32>
    %173 = arith.cmpf ole, %162, %172 : vector<4x1024xf32>
    %174 = arith.andi %171, %173 : vector<4x1024xi1>
    %175 = arith.extui %174 : vector<4x1024xi1> to vector<4x1024xi32>
    %176 = arith.sitofp %175 : vector<4x1024xi32> to vector<4x1024xf32>
    %177 = arith.mulf %169, %176 : vector<4x1024xf32>
    %cst_74 = arith.constant 1.000000e+00 : f32
    %178 = vector.broadcast %cst_74 : f32 to vector<4x1024xf32>
    %179 = arith.addf %162, %178 : vector<4x1024xf32>
    %cst_75 = arith.constant 0.000000e+00 : f32
    %180 = vector.broadcast %cst_75 : f32 to vector<4x1024xf32>
    %181 = arith.cmpf oge, %179, %180 : vector<4x1024xf32>
    %cst_76 = arith.constant 1.500000e+01 : f32
    %182 = vector.broadcast %cst_76 : f32 to vector<4x1024xf32>
    %183 = arith.cmpf ole, %179, %182 : vector<4x1024xf32>
    %184 = arith.andi %181, %183 : vector<4x1024xi1>
    %185 = arith.extui %184 : vector<4x1024xi1> to vector<4x1024xi32>
    %186 = arith.sitofp %185 : vector<4x1024xi32> to vector<4x1024xf32>
    %187 = arith.mulf %165, %186 : vector<4x1024xf32>
    %cst_77 = arith.constant 1.000000e+00 : f32
    %188 = vector.broadcast %cst_77 : f32 to vector<4x1024xf32>
    %189 = arith.subf %188, %166 : vector<4x1024xf32>
    %cst_78 = arith.constant 0.000000e+00 : f32
    %190 = vector.broadcast %cst_78 : f32 to vector<4x1024xf32>
    %191 = arith.cmpf oge, %163, %190 : vector<4x1024xf32>
    %cst_79 = arith.constant 1.500000e+01 : f32
    %192 = vector.broadcast %cst_79 : f32 to vector<4x1024xf32>
    %193 = arith.cmpf ole, %163, %192 : vector<4x1024xf32>
    %194 = arith.andi %191, %193 : vector<4x1024xi1>
    %195 = arith.extui %194 : vector<4x1024xi1> to vector<4x1024xi32>
    %196 = arith.sitofp %195 : vector<4x1024xi32> to vector<4x1024xf32>
    %197 = arith.mulf %189, %196 : vector<4x1024xf32>
    %cst_80 = arith.constant 1.000000e+00 : f32
    %198 = vector.broadcast %cst_80 : f32 to vector<4x1024xf32>
    %199 = arith.addf %163, %198 : vector<4x1024xf32>
    %cst_81 = arith.constant 0.000000e+00 : f32
    %200 = vector.broadcast %cst_81 : f32 to vector<4x1024xf32>
    %201 = arith.cmpf oge, %199, %200 : vector<4x1024xf32>
    %cst_82 = arith.constant 1.500000e+01 : f32
    %202 = vector.broadcast %cst_82 : f32 to vector<4x1024xf32>
    %203 = arith.cmpf ole, %199, %202 : vector<4x1024xf32>
    %204 = arith.andi %201, %203 : vector<4x1024xi1>
    %205 = arith.extui %204 : vector<4x1024xi1> to vector<4x1024xi32>
    %206 = arith.sitofp %205 : vector<4x1024xi32> to vector<4x1024xf32>
    %207 = arith.mulf %166, %206 : vector<4x1024xf32>
    %cst_83 = arith.constant 1.000000e+00 : f32
    %208 = vector.broadcast %cst_83 : f32 to vector<4x1024xf32>
    %209 = arith.subf %208, %167 : vector<4x1024xf32>
    %cst_84 = arith.constant 0.000000e+00 : f32
    %210 = vector.broadcast %cst_84 : f32 to vector<4x1024xf32>
    %211 = arith.cmpf oge, %164, %210 : vector<4x1024xf32>
    %cst_85 = arith.constant 1.500000e+01 : f32
    %212 = vector.broadcast %cst_85 : f32 to vector<4x1024xf32>
    %213 = arith.cmpf ole, %164, %212 : vector<4x1024xf32>
    %214 = arith.andi %211, %213 : vector<4x1024xi1>
    %215 = arith.extui %214 : vector<4x1024xi1> to vector<4x1024xi32>
    %216 = arith.sitofp %215 : vector<4x1024xi32> to vector<4x1024xf32>
    %217 = arith.mulf %209, %216 : vector<4x1024xf32>
    %cst_86 = arith.constant 1.000000e+00 : f32
    %218 = vector.broadcast %cst_86 : f32 to vector<4x1024xf32>
    %219 = arith.addf %164, %218 : vector<4x1024xf32>
    %cst_87 = arith.constant 0.000000e+00 : f32
    %220 = vector.broadcast %cst_87 : f32 to vector<4x1024xf32>
    %221 = arith.cmpf oge, %219, %220 : vector<4x1024xf32>
    %cst_88 = arith.constant 1.500000e+01 : f32
    %222 = vector.broadcast %cst_88 : f32 to vector<4x1024xf32>
    %223 = arith.cmpf ole, %219, %222 : vector<4x1024xf32>
    %224 = arith.andi %221, %223 : vector<4x1024xi1>
    %225 = arith.extui %224 : vector<4x1024xi1> to vector<4x1024xi32>
    %226 = arith.sitofp %225 : vector<4x1024xi32> to vector<4x1024xf32>
    %227 = arith.mulf %167, %226 : vector<4x1024xf32>
    %228 = arith.mulf %177, %197 : vector<4x1024xf32>
    %229 = arith.mulf %228, %217 : vector<4x1024xf32>
    %230 = arith.mulf %177, %197 : vector<4x1024xf32>
    %231 = arith.mulf %230, %227 : vector<4x1024xf32>
    %232 = arith.mulf %177, %207 : vector<4x1024xf32>
    %233 = arith.mulf %232, %217 : vector<4x1024xf32>
    %234 = arith.mulf %177, %207 : vector<4x1024xf32>
    %235 = arith.mulf %234, %227 : vector<4x1024xf32>
    %236 = arith.mulf %187, %197 : vector<4x1024xf32>
    %237 = arith.mulf %236, %217 : vector<4x1024xf32>
    %238 = arith.mulf %187, %197 : vector<4x1024xf32>
    %239 = arith.mulf %238, %227 : vector<4x1024xf32>
    %240 = arith.mulf %187, %207 : vector<4x1024xf32>
    %241 = arith.mulf %240, %217 : vector<4x1024xf32>
    %242 = arith.mulf %187, %207 : vector<4x1024xf32>
    %243 = arith.mulf %242, %227 : vector<4x1024xf32>
    %c2_89 = arith.constant 2 : index
    %c0_90 = arith.constant 0 : index
    %c0_91 = arith.constant 0 : index
    %244 = vector.load %arg1[%c2_89, %c0_90, %c0_91] : memref<32x4x1024xf32, #tpu.memory_space<vmem>>, vector<1x4x1024xf32>
    %245 = vector.shape_cast %244 : vector<1x4x1024xf32> to vector<4x1024xf32>
    %246 = arith.mulf %229, %245 : vector<4x1024xf32>
    %c6 = arith.constant 6 : index
    %c0_92 = arith.constant 0 : index
    %c0_93 = arith.constant 0 : index
    %247 = vector.load %arg1[%c6, %c0_92, %c0_93] : memref<32x4x1024xf32, #tpu.memory_space<vmem>>, vector<1x4x1024xf32>
    %248 = vector.shape_cast %247 : vector<1x4x1024xf32> to vector<4x1024xf32>
    %249 = arith.mulf %231, %248 : vector<4x1024xf32>
    %250 = arith.addf %246, %249 : vector<4x1024xf32>
    %c10 = arith.constant 10 : index
    %c0_94 = arith.constant 0 : index
    %c0_95 = arith.constant 0 : index
    %251 = vector.load %arg1[%c10, %c0_94, %c0_95] : memref<32x4x1024xf32, #tpu.memory_space<vmem>>, vector<1x4x1024xf32>
    %252 = vector.shape_cast %251 : vector<1x4x1024xf32> to vector<4x1024xf32>
    %253 = arith.mulf %233, %252 : vector<4x1024xf32>
    %254 = arith.addf %250, %253 : vector<4x1024xf32>
    %c14 = arith.constant 14 : index
    %c0_96 = arith.constant 0 : index
    %c0_97 = arith.constant 0 : index
    %255 = vector.load %arg1[%c14, %c0_96, %c0_97] : memref<32x4x1024xf32, #tpu.memory_space<vmem>>, vector<1x4x1024xf32>
    %256 = vector.shape_cast %255 : vector<1x4x1024xf32> to vector<4x1024xf32>
    %257 = arith.mulf %235, %256 : vector<4x1024xf32>
    %258 = arith.addf %254, %257 : vector<4x1024xf32>
    %c18 = arith.constant 18 : index
    %c0_98 = arith.constant 0 : index
    %c0_99 = arith.constant 0 : index
    %259 = vector.load %arg1[%c18, %c0_98, %c0_99] : memref<32x4x1024xf32, #tpu.memory_space<vmem>>, vector<1x4x1024xf32>
    %260 = vector.shape_cast %259 : vector<1x4x1024xf32> to vector<4x1024xf32>
    %261 = arith.mulf %237, %260 : vector<4x1024xf32>
    %262 = arith.addf %258, %261 : vector<4x1024xf32>
    %c22 = arith.constant 22 : index
    %c0_100 = arith.constant 0 : index
    %c0_101 = arith.constant 0 : index
    %263 = vector.load %arg1[%c22, %c0_100, %c0_101] : memref<32x4x1024xf32, #tpu.memory_space<vmem>>, vector<1x4x1024xf32>
    %264 = vector.shape_cast %263 : vector<1x4x1024xf32> to vector<4x1024xf32>
    %265 = arith.mulf %239, %264 : vector<4x1024xf32>
    %266 = arith.addf %262, %265 : vector<4x1024xf32>
    %c26 = arith.constant 26 : index
    %c0_102 = arith.constant 0 : index
    %c0_103 = arith.constant 0 : index
    %267 = vector.load %arg1[%c26, %c0_102, %c0_103] : memref<32x4x1024xf32, #tpu.memory_space<vmem>>, vector<1x4x1024xf32>
    %268 = vector.shape_cast %267 : vector<1x4x1024xf32> to vector<4x1024xf32>
    %269 = arith.mulf %241, %268 : vector<4x1024xf32>
    %270 = arith.addf %266, %269 : vector<4x1024xf32>
    %c30 = arith.constant 30 : index
    %c0_104 = arith.constant 0 : index
    %c0_105 = arith.constant 0 : index
    %271 = vector.load %arg1[%c30, %c0_104, %c0_105] : memref<32x4x1024xf32, #tpu.memory_space<vmem>>, vector<1x4x1024xf32>
    %272 = vector.shape_cast %271 : vector<1x4x1024xf32> to vector<4x1024xf32>
    %273 = arith.mulf %243, %272 : vector<4x1024xf32>
    %274 = arith.addf %270, %273 : vector<4x1024xf32>
    %c2_106 = arith.constant 2 : index
    %c0_107 = arith.constant 0 : index
    %c0_108 = arith.constant 0 : index
    %275 = vector.load %arg3[%c2_106, %c0_107, %c0_108] : memref<4x4x1024xf32, #tpu.memory_space<vmem>>, vector<1x4x1024xf32>
    %276 = vector.shape_cast %275 : vector<1x4x1024xf32> to vector<4x1024xf32>
    %277 = vector.shape_cast %274 : vector<4x1024xf32> to vector<1x4x1024xf32>
    tpu.vector_store %arg3[%c2_106, %c0_107, %c0_108], %277 {strides = array<i32>} : memref<4x4x1024xf32, #tpu.memory_space<vmem>>, vector<1x4x1024xf32>,
    %c3_109 = arith.constant 3 : index
    %c0_110 = arith.constant 0 : index
    %c0_111 = arith.constant 0 : index
    %278 = vector.load %arg1[%c3_109, %c0_110, %c0_111] : memref<32x4x1024xf32, #tpu.memory_space<vmem>>, vector<1x4x1024xf32>
    %279 = vector.shape_cast %278 : vector<1x4x1024xf32> to vector<4x1024xf32>
    %280 = arith.mulf %229, %279 : vector<4x1024xf32>
    %c7 = arith.constant 7 : index
    %c0_112 = arith.constant 0 : index
    %c0_113 = arith.constant 0 : index
    %281 = vector.load %arg1[%c7, %c0_112, %c0_113] : memref<32x4x1024xf32, #tpu.memory_space<vmem>>, vector<1x4x1024xf32>
    %282 = vector.shape_cast %281 : vector<1x4x1024xf32> to vector<4x1024xf32>
    %283 = arith.mulf %231, %282 : vector<4x1024xf32>
    %284 = arith.addf %280, %283 : vector<4x1024xf32>
    %c11 = arith.constant 11 : index
    %c0_114 = arith.constant 0 : index
    %c0_115 = arith.constant 0 : index
    %285 = vector.load %arg1[%c11, %c0_114, %c0_115] : memref<32x4x1024xf32, #tpu.memory_space<vmem>>, vector<1x4x1024xf32>
    %286 = vector.shape_cast %285 : vector<1x4x1024xf32> to vector<4x1024xf32>
    %287 = arith.mulf %233, %286 : vector<4x1024xf32>
    %288 = arith.addf %284, %287 : vector<4x1024xf32>
    %c15 = arith.constant 15 : index
    %c0_116 = arith.constant 0 : index
    %c0_117 = arith.constant 0 : index
    %289 = vector.load %arg1[%c15, %c0_116, %c0_117] : memref<32x4x1024xf32, #tpu.memory_space<vmem>>, vector<1x4x1024xf32>
    %290 = vector.shape_cast %289 : vector<1x4x1024xf32> to vector<4x1024xf32>
    %291 = arith.mulf %235, %290 : vector<4x1024xf32>
    %292 = arith.addf %288, %291 : vector<4x1024xf32>
    %c19 = arith.constant 19 : index
    %c0_118 = arith.constant 0 : index
    %c0_119 = arith.constant 0 : index
    %293 = vector.load %arg1[%c19, %c0_118, %c0_119] : memref<32x4x1024xf32, #tpu.memory_space<vmem>>, vector<1x4x1024xf32>
    %294 = vector.shape_cast %293 : vector<1x4x1024xf32> to vector<4x1024xf32>
    %295 = arith.mulf %237, %294 : vector<4x1024xf32>
    %296 = arith.addf %292, %295 : vector<4x1024xf32>
    %c23 = arith.constant 23 : index
    %c0_120 = arith.constant 0 : index
    %c0_121 = arith.constant 0 : index
    %297 = vector.load %arg1[%c23, %c0_120, %c0_121] : memref<32x4x1024xf32, #tpu.memory_space<vmem>>, vector<1x4x1024xf32>
    %298 = vector.shape_cast %297 : vector<1x4x1024xf32> to vector<4x1024xf32>
    %299 = arith.mulf %239, %298 : vector<4x1024xf32>
    %300 = arith.addf %296, %299 : vector<4x1024xf32>
    %c27 = arith.constant 27 : index
    %c0_122 = arith.constant 0 : index
    %c0_123 = arith.constant 0 : index
    %301 = vector.load %arg1[%c27, %c0_122, %c0_123] : memref<32x4x1024xf32, #tpu.memory_space<vmem>>, vector<1x4x1024xf32>
    %302 = vector.shape_cast %301 : vector<1x4x1024xf32> to vector<4x1024xf32>
    %303 = arith.mulf %241, %302 : vector<4x1024xf32>
    %304 = arith.addf %300, %303 : vector<4x1024xf32>
    %c31 = arith.constant 31 : index
    %c0_124 = arith.constant 0 : index
    %c0_125 = arith.constant 0 : index
    %305 = vector.load %arg1[%c31, %c0_124, %c0_125] : memref<32x4x1024xf32, #tpu.memory_space<vmem>>, vector<1x4x1024xf32>
    %306 = vector.shape_cast %305 : vector<1x4x1024xf32> to vector<4x1024xf32>
    %307 = arith.mulf %243, %306 : vector<4x1024xf32>
    %308 = arith.addf %304, %307 : vector<4x1024xf32>
    %c3_126 = arith.constant 3 : index
    %c0_127 = arith.constant 0 : index
    %c0_128 = arith.constant 0 : index
    %309 = vector.load %arg3[%c3_126, %c0_127, %c0_128] : memref<4x4x1024xf32, #tpu.memory_space<vmem>>, vector<1x4x1024xf32>
    %310 = vector.shape_cast %309 : vector<1x4x1024xf32> to vector<4x1024xf32>
    %311 = vector.shape_cast %308 : vector<4x1024xf32> to vector<1x4x1024xf32>
    tpu.vector_store %arg3[%c3_126, %c0_127, %c0_128], %311 {strides = array<i32>} : memref<4x4x1024xf32, #tpu.memory_space<vmem>>, vector<1x4x1024xf32>,
    return
  }
  func.func @transform_0(%arg0: i32) -> (i32, i32, i32) {
    %c0_i32 = arith.constant 0 : i32
    %c0_i32_0 = arith.constant 0 : i32
    %c0_i32_1 = arith.constant 0 : i32
    return %c0_i32, %arg0, %c0_i32_0 : i32, i32, i32
  }
  func.func @transform_1(%arg0: i32) -> (i32, i32, i32) {
    %c0_i32 = arith.constant 0 : i32
    %c0_i32_0 = arith.constant 0 : i32
    %c0_i32_1 = arith.constant 0 : i32
    return %c0_i32, %arg0, %c0_i32_0 : i32, i32, i32
  }
  func.func @transform_2(%arg0: i32) -> (i32, i32, i32) {
    %c0_i32 = arith.constant 0 : i32
    %c0_i32_0 = arith.constant 0 : i32
    %c0_i32_1 = arith.constant 0 : i32
    return %c0_i32, %arg0, %c0_i32_0 : i32, i32, i32
  }
}

</mosaic_0001>

<llo_original>
// kernel: gen_new_forward.2
$region0: #{gen_new_forward.2}
  #allocation0 [shape = 'u32[]', space=smem, size = 0x4, offset = 0x4, fixed_abs, tag = 'smem constant byte address 0x4 - core index']
  #allocation1 [shape = 'u32[144,128]{1,0:T(1,128)}', space=vmem, size = 0x12000, scoped, tag = 'internal scratch']
  %s0 = inlined_call_operand.vmem [shape: f32[8,1024], index: 0, kind: input, shape index: {}]
  %s1 = inlined_call_operand.vmem [shape: bf16[256,8], index: 1, kind: input, shape index: {}]
  %s2 = inlined_call_operand.vmem [shape: f32[256,1], index: 2, kind: input, shape index: {}]
  %s3 = inlined_call_operand.vmem [shape: bf16[256,256], index: 3, kind: input, shape index: {}]
  %s4 = inlined_call_operand.vmem [shape: f32[256,1], index: 4, kind: input, shape index: {}]
  %s5 = inlined_call_operand.vmem [shape: bf16[256,256], index: 5, kind: input, shape index: {}]
  %s6 = inlined_call_operand.vmem [shape: f32[256,1], index: 6, kind: input, shape index: {}]
  %s7 = inlined_call_operand.vmem [shape: bf16[8,256], index: 7, kind: input, shape index: {}]
  %s8 = inlined_call_operand.vmem [shape: f32[8,1], index: 8, kind: input, shape index: {}]
  %s9 = inlined_call_operand.vmem [shape: f32[8,1024], index: 9, kind: output, shape index: {}]
  %s10 = sld [smem:[#allocation0]]
  $region46: #{gen_new_forward.2} parent=0
    _
  %s12 = ssub.s32 1, %s10
  %s13 = scalar_select 0, %s12, %s10
  // Predicated region
  $region2: #{gen_new_forward.2} parent=0 // pred_check
    _
  $region3: #{gen_new_forward.2} parent=0 // pred_check_branch
    %15 = sbr.rel (0) target = $region5
  $region4: #{gen_new_forward.2} parent=0 // pred_region
    _
  $region5: #{gen_new_forward.2} parent=0 // pred_fallthru
    _
  // Predicated region
  $region6: #{gen_new_forward.2} parent=0 // pred_check
    _
  $region7: #{gen_new_forward.2} parent=0 // pred_check_branch
    %17 = sbr.rel (0) target = $region9
  $region8: #{gen_new_forward.2} parent=0 // pred_region
    _
  $region9: #{gen_new_forward.2} parent=0 // pred_fallthru
    _
  // Predicated region
  $region10: #{gen_new_forward.2} parent=0 // pred_check
    _
  $region11: #{gen_new_forward.2} parent=0 // pred_check_branch
    %19 = sbr.rel (0) target = $region13
  $region12: #{gen_new_forward.2} parent=0 // pred_region
    _
  $region13: #{gen_new_forward.2} parent=0 // pred_fallthru
    _
  // Predicated region
  $region14: #{gen_new_forward.2} parent=0 // pred_check
    _
  $region15: #{gen_new_forward.2} parent=0 // pred_check_branch
    %21 = sbr.rel (0) target = $region17
  $region16: #{gen_new_forward.2} parent=0 // pred_region
    _
  $region17: #{gen_new_forward.2} parent=0 // pred_fallthru
    _
  // Predicated region
  $region18: #{gen_new_forward.2} parent=0 // pred_check
    _
  $region19: #{gen_new_forward.2} parent=0 // pred_check_branch
    %23 = sbr.rel (0) target = $region21
  $region20: #{gen_new_forward.2} parent=0 // pred_region
    _
  $region21: #{gen_new_forward.2} parent=0 // pred_fallthru
    _
  // Predicated region
  $region22: #{gen_new_forward.2} parent=0 // pred_check
    _
  $region23: #{gen_new_forward.2} parent=0 // pred_check_branch
    %25 = sbr.rel (0) target = $region25
  $region24: #{gen_new_forward.2} parent=0 // pred_region
    _
  $region25: #{gen_new_forward.2} parent=0 // pred_fallthru
    _
  // Predicated region
  $region26: #{gen_new_forward.2} parent=0 // pred_check
    _
  $region27: #{gen_new_forward.2} parent=0 // pred_check_branch
    %27 = sbr.rel (0) target = $region29
  $region28: #{gen_new_forward.2} parent=0 // pred_region
    _
  $region29: #{gen_new_forward.2} parent=0 // pred_fallthru
    _
  // Predicated region
  $region30: #{gen_new_forward.2} parent=0 // pred_check
    _
  $region31: #{gen_new_forward.2} parent=0 // pred_check_branch
    %29 = sbr.rel (0) target = $region33
  $region32: #{gen_new_forward.2} parent=0 // pred_region
    _
  $region33: #{gen_new_forward.2} parent=0 // pred_fallthru
    _
  // Predicated region
  $region34: #{gen_new_forward.2} parent=0 // pred_check
    _
  $region35: #{gen_new_forward.2} parent=0 // pred_check_branch
    %31 = sbr.rel (0) target = $region37
  $region36: #{gen_new_forward.2} parent=0 // pred_region
    _
  $region37: #{gen_new_forward.2} parent=0 // pred_fallthru
    _
  %v33 = vld [vmem:[%s0] sm:$0xff]
  %v34 = vld [vmem:[%s0 + $0x8] sm:$0xff]
  %v35 = vld [vmem:[%s0 + $0x10] sm:$0xff]
  %v36 = vld [vmem:[%s0 + $0x18] sm:$0xff]
  %v37 = vld [vmem:[%s0 + $0x20] sm:$0xff]
  %v38 = vld [vmem:[%s0 + $0x28] sm:$0xff]
  %v39 = vld [vmem:[%s0 + $0x30] sm:$0xff]
  %v40 = vld [vmem:[%s0 + $0x38] sm:$0xff]
  %v41 = vpack.c.bf16 %v33, %v33
  %v42 = vpack.c.bf16 %v34, %v34
  %v43 = vpack.c.bf16 %v35, %v35
  %v44 = vpack.c.bf16 %v36, %v36
  %v45 = vpack.c.bf16 %v37, %v37
  %v46 = vpack.c.bf16 %v38, %v38
  %v47 = vpack.c.bf16 %v39, %v39
  %v48 = vpack.c.bf16 %v40, %v40
  %v49 = vld [vmem:[%s1] sm:$0xf]
  %v50 = vld [vmem:[%s1 + $0x4] sm:$0xf]
  %v51 = vld [vmem:[%s1 + $0x8] sm:$0xf]
  %v52 = vld [vmem:[%s1 + $0xc] sm:$0xf]
  %v53 = vld [vmem:[%s1 + $0x10] sm:$0xf]
  %v54 = vld [vmem:[%s1 + $0x14] sm:$0xf]
  %v55 = vld [vmem:[%s1 + $0x18] sm:$0xf]
  %v56 = vld [vmem:[%s1 + $0x1c] sm:$0xf]
  %v57 = vld [vmem:[%s1 + $0x20] sm:$0xf]
  %v58 = vld [vmem:[%s1 + $0x24] sm:$0xf]
  %v59 = vld [vmem:[%s1 + $0x28] sm:$0xf]
  %v60 = vld [vmem:[%s1 + $0x2c] sm:$0xf]
  %v61 = vld [vmem:[%s1 + $0x30] sm:$0xf]
  %v62 = vld [vmem:[%s1 + $0x34] sm:$0xf]
  %v63 = vld [vmem:[%s1 + $0x38] sm:$0xf]
  %v64 = vld [vmem:[%s1 + $0x3c] sm:$0xf]
  %v65 = vld [vmem:[%s1 + $0x40] sm:$0xf]
  %v66 = vld [vmem:[%s1 + $0x44] sm:$0xf]
  %v67 = vld [vmem:[%s1 + $0x48] sm:$0xf]
  %v68 = vld [vmem:[%s1 + $0x4c] sm:$0xf]
  %v69 = vld [vmem:[%s1 + $0x50] sm:$0xf]
  %v70 = vld [vmem:[%s1 + $0x54] sm:$0xf]
  %v71 = vld [vmem:[%s1 + $0x58] sm:$0xf]
  %v72 = vld [vmem:[%s1 + $0x5c] sm:$0xf]
  %v73 = vld [vmem:[%s1 + $0x60] sm:$0xf]
  %v74 = vld [vmem:[%s1 + $0x64] sm:$0xf]
  %v75 = vld [vmem:[%s1 + $0x68] sm:$0xf]
  %v76 = vld [vmem:[%s1 + $0x6c] sm:$0xf]
  %v77 = vld [vmem:[%s1 + $0x70] sm:$0xf]
  %v78 = vld [vmem:[%s1 + $0x74] sm:$0xf]
  %v79 = vld [vmem:[%s1 + $0x78] sm:$0xf]
  %v80 = vld [vmem:[%s1 + $0x7c] sm:$0xf]
  %v81 = vld [vmem:[%s2] sm:$0xff]
  %v82 = vld [vmem:[%s2 + $0x8] sm:$0xff]
  %v83 = vld [vmem:[%s2 + $0x10] sm:$0xff]
  %v84 = vld [vmem:[%s2 + $0x18] sm:$0xff]
  %v85 = vld [vmem:[%s2 + $0x20] sm:$0xff]
  %v86 = vld [vmem:[%s2 + $0x28] sm:$0xff]
  %v87 = vld [vmem:[%s2 + $0x30] sm:$0xff]
  %v88 = vld [vmem:[%s2 + $0x38] sm:$0xff]
  %v89 = vld [vmem:[%s2 + $0x40] sm:$0xff]
  %v90 = vld [vmem:[%s2 + $0x48] sm:$0xff]
  %v91 = vld [vmem:[%s2 + $0x50] sm:$0xff]
  %v92 = vld [vmem:[%s2 + $0x58] sm:$0xff]
  %v93 = vld [vmem:[%s2 + $0x60] sm:$0xff]
  %v94 = vld [vmem:[%s2 + $0x68] sm:$0xff]
  %v95 = vld [vmem:[%s2 + $0x70] sm:$0xff]
  %v96 = vld [vmem:[%s2 + $0x78] sm:$0xff]
  %v97 = vld [vmem:[%s2 + $0x80] sm:$0xff]
  %v98 = vld [vmem:[%s2 + $0x88] sm:$0xff]
  %v99 = vld [vmem:[%s2 + $0x90] sm:$0xff]
  %v100 = vld [vmem:[%s2 + $0x98] sm:$0xff]
  %v101 = vld [vmem:[%s2 + $0xa0] sm:$0xff]
  %v102 = vld [vmem:[%s2 + $0xa8] sm:$0xff]
  %v103 = vld [vmem:[%s2 + $0xb0] sm:$0xff]
  %v104 = vld [vmem:[%s2 + $0xb8] sm:$0xff]
  %v105 = vld [vmem:[%s2 + $0xc0] sm:$0xff]
  %v106 = vld [vmem:[%s2 + $0xc8] sm:$0xff]
  %v107 = vld [vmem:[%s2 + $0xd0] sm:$0xff]
  %v108 = vld [vmem:[%s2 + $0xd8] sm:$0xff]
  %v109 = vld [vmem:[%s2 + $0xe0] sm:$0xff]
  %v110 = vld [vmem:[%s2 + $0xe8] sm:$0xff]
  %v111 = vld [vmem:[%s2 + $0xf0] sm:$0xff]
  %v112 = vld [vmem:[%s2 + $0xf8] sm:$0xff]
  %114 = vset.pattern.permute.xlu0 0
  %115 = vperm.xlu0 %114, %v81
  %v116 = vpop.permute.xlu0 %115
  %119 = vset.pattern.permute.xlu0 0
  %120 = vperm.xlu0 %119, %v82
  %v121 = vpop.permute.xlu0 %120
  %124 = vset.pattern.permute.xlu0 0
  %125 = vperm.xlu0 %124, %v83
  %v126 = vpop.permute.xlu0 %125
  %129 = vset.pattern.permute.xlu0 0
  %130 = vperm.xlu0 %129, %v84
  %v131 = vpop.permute.xlu0 %130
  %134 = vset.pattern.permute.xlu0 0
  %135 = vperm.xlu0 %134, %v85
  %v136 = vpop.permute.xlu0 %135
  %139 = vset.pattern.permute.xlu0 0
  %140 = vperm.xlu0 %139, %v86
  %v141 = vpop.permute.xlu0 %140
  %144 = vset.pattern.permute.xlu0 0
  %145 = vperm.xlu0 %144, %v87
  %v146 = vpop.permute.xlu0 %145
  %149 = vset.pattern.permute.xlu0 0
  %150 = vperm.xlu0 %149, %v88
  %v151 = vpop.permute.xlu0 %150
  %154 = vset.pattern.permute.xlu0 0
  %155 = vperm.xlu0 %154, %v89
  %v156 = vpop.permute.xlu0 %155
  %159 = vset.pattern.permute.xlu0 0
  %160 = vperm.xlu0 %159, %v90
  %v161 = vpop.permute.xlu0 %160
  %164 = vset.pattern.permute.xlu0 0
  %165 = vperm.xlu0 %164, %v91
  %v166 = vpop.permute.xlu0 %165
  %169 = vset.pattern.permute.xlu0 0
  %170 = vperm.xlu0 %169, %v92
  %v171 = vpop.permute.xlu0 %170
  %174 = vset.pattern.permute.xlu0 0
  %175 = vperm.xlu0 %174, %v93
  %v176 = vpop.permute.xlu0 %175
  %179 = vset.pattern.permute.xlu0 0
  %180 = vperm.xlu0 %179, %v94
  %v181 = vpop.permute.xlu0 %180
  %184 = vset.pattern.permute.xlu0 0
  %185 = vperm.xlu0 %184, %v95
  %v186 = vpop.permute.xlu0 %185
  %189 = vset.pattern.permute.xlu0 0
  %190 = vperm.xlu0 %189, %v96
  %v191 = vpop.permute.xlu0 %190
  %194 = vset.pattern.permute.xlu0 0
  %195 = vperm.xlu0 %194, %v97
  %v196 = vpop.permute.xlu0 %195
  %199 = vset.pattern.permute.xlu0 0
  %200 = vperm.xlu0 %199, %v98
  %v201 = vpop.permute.xlu0 %200
  %204 = vset.pattern.permute.xlu0 0
  %205 = vperm.xlu0 %204, %v99
  %v206 = vpop.permute.xlu0 %205
  %209 = vset.pattern.permute.xlu0 0
  %210 = vperm.xlu0 %209, %v100
  %v211 = vpop.permute.xlu0 %210
  %214 = vset.pattern.permute.xlu0 0
  %215 = vperm.xlu0 %214, %v101
  %v216 = vpop.permute.xlu0 %215
  %219 = vset.pattern.permute.xlu0 0
  %220 = vperm.xlu0 %219, %v102
  %v221 = vpop.permute.xlu0 %220
  %224 = vset.pattern.permute.xlu0 0
  %225 = vperm.xlu0 %224, %v103
  %v226 = vpop.permute.xlu0 %225
  %229 = vset.pattern.permute.xlu0 0
  %230 = vperm.xlu0 %229, %v104
  %v231 = vpop.permute.xlu0 %230
  %234 = vset.pattern.permute.xlu0 0
  %235 = vperm.xlu0 %234, %v105
  %v236 = vpop.permute.xlu0 %235
  %239 = vset.pattern.permute.xlu0 0
  %240 = vperm.xlu0 %239, %v106
  %v241 = vpop.permute.xlu0 %240
  %244 = vset.pattern.permute.xlu0 0
  %245 = vperm.xlu0 %244, %v107
  %v246 = vpop.permute.xlu0 %245
  %249 = vset.pattern.permute.xlu0 0
  %250 = vperm.xlu0 %249, %v108
  %v251 = vpop.permute.xlu0 %250
  %254 = vset.pattern.permute.xlu0 0
  %255 = vperm.xlu0 %254, %v109
  %v256 = vpop.permute.xlu0 %255
  %259 = vset.pattern.permute.xlu0 0
  %260 = vperm.xlu0 %259, %v110
  %v261 = vpop.permute.xlu0 %260
  %264 = vset.pattern.permute.xlu0 0
  %265 = vperm.xlu0 %264, %v111
  %v266 = vpop.permute.xlu0 %265
  %269 = vset.pattern.permute.xlu0 0
  %270 = vperm.xlu0 %269, %v112
  %v271 = vpop.permute.xlu0 %270
  %v305 = vunpack.c.l.b16 %v49
  %v306 = vunpack.c.l.b16 %v50
  %v307 = vunpack.c.l.b16 %v51
  %v308 = vunpack.c.l.b16 %v52
  %v309 = vunpack.c.l.b16 %v53
  %v310 = vunpack.c.l.b16 %v54
  %v311 = vunpack.c.l.b16 %v55
  %v312 = vunpack.c.l.b16 %v56
  %v313 = vunpack.c.l.b16 %v57
  %v314 = vunpack.c.l.b16 %v58
  %v315 = vunpack.c.l.b16 %v59
  %v316 = vunpack.c.l.b16 %v60
  %v317 = vunpack.c.l.b16 %v61
  %v318 = vunpack.c.l.b16 %v62
  %v319 = vunpack.c.l.b16 %v63
  %v320 = vunpack.c.l.b16 %v64
  %v321 = vunpack.c.l.b16 %v65
  %v322 = vunpack.c.l.b16 %v66
  %v323 = vunpack.c.l.b16 %v67
  %v324 = vunpack.c.l.b16 %v68
  %v325 = vunpack.c.l.b16 %v69
  %v326 = vunpack.c.l.b16 %v70
  %v327 = vunpack.c.l.b16 %v71
  %v328 = vunpack.c.l.b16 %v72
  %v329 = vunpack.c.l.b16 %v73
  %v330 = vunpack.c.l.b16 %v74
  %v331 = vunpack.c.l.b16 %v75
  %v332 = vunpack.c.l.b16 %v76
  %v333 = vunpack.c.l.b16 %v77
  %v334 = vunpack.c.l.b16 %v78
  %v335 = vunpack.c.l.b16 %v79
  %v336 = vunpack.c.l.b16 %v80
  %v337 = vpack.c.b16 %v306, %v305
  %v338 = vpack.c.b16 %v308, %v307
  %v339 = vpack.c.b16 %v310, %v309
  %v340 = vpack.c.b16 %v312, %v311
  %v341 = vpack.c.b16 %v314, %v313
  %v342 = vpack.c.b16 %v316, %v315
  %v343 = vpack.c.b16 %v318, %v317
  %v344 = vpack.c.b16 %v320, %v319
  %v345 = vpack.c.b16 %v322, %v321
  %v346 = vpack.c.b16 %v324, %v323
  %v347 = vpack.c.b16 %v326, %v325
  %v348 = vpack.c.b16 %v328, %v327
  %v349 = vpack.c.b16 %v330, %v329
  %v350 = vpack.c.b16 %v332, %v331
  %v351 = vpack.c.b16 %v334, %v333
  %v352 = vpack.c.b16 %v336, %v335
  %vm353 = vcmask 64512
  %v355 = vsel %vm353, %v337, 0
  %v358 = vsel %vm353, %v338, 0
  %v361 = vsel %vm353, %v339, 0
  %v364 = vsel %vm353, %v340, 0
  %v367 = vsel %vm353, %v341, 0
  %v370 = vsel %vm353, %v342, 0
  %v373 = vsel %vm353, %v343, 0
  %v376 = vsel %vm353, %v344, 0
  %v379 = vsel %vm353, %v345, 0
  %v382 = vsel %vm353, %v346, 0
  %v385 = vsel %vm353, %v347, 0
  %v388 = vsel %vm353, %v348, 0
  %v391 = vsel %vm353, %v349, 0
  %v394 = vsel %vm353, %v350, 0
  %v397 = vsel %vm353, %v351, 0
  %v400 = vsel %vm353, %v352, 0
  %vm402 = vcmask 1043456
  %v404 = vsel %vm402, %v41, 0
  %v407 = vsel %vm402, %v42, 0
  %v410 = vsel %vm402, %v43, 0
  %v413 = vsel %vm402, %v44, 0
  %v416 = vsel %vm402, %v45, 0
  %v419 = vsel %vm402, %v46, 0
  %v422 = vsel %vm402, %v47, 0
  %v425 = vsel %vm402, %v48, 0
  %427 = vmatprep.subr.bf16.mxu0 %v407
  %428 = vmatpush1.bf16.msra.mxu0 %v404
  %429 = vmatprep.subr.bf16.mxu0 0
  %430 = vmatpush1.bf16.msra.mxu0 0
  %431 = vmatprep.subr.bf16.mxu0 0
  %432 = vmatpush1.bf16.msra.mxu0 0
  %433 = vmatprep.subr.bf16.mxu0 0
  %434 = vmatpush1.bf16.msra.mxu0 0
  %435 = vmatprep.subr.bf16.mxu0 0
  %436 = vmatpush1.bf16.msra.mxu0 0
  %437 = vmatprep.subr.bf16.mxu0 0
  %438 = vmatpush1.bf16.msra.mxu0 0
  %439 = vmatprep.subr.bf16.mxu0 0
  %440 = vmatpush1.bf16.msra.mxu0 0
  %441 = vmatprep.subr.bf16.mxu0 0
  %442 = vmatpush1.bf16.msra.mxu0 0
  %443 = vmatprep.subr.bf16.mxu0 0
  %444 = vmatpush1.bf16.msra.mxu0 0
  %445 = vmatprep.subr.bf16.mxu0 0
  %446 = vmatpush1.bf16.msra.mxu0 0
  %447 = vmatprep.subr.bf16.mxu0 0
  %448 = vmatpush1.bf16.msra.mxu0 0
  %449 = vmatprep.subr.bf16.mxu0 0
  %450 = vmatpush1.bf16.msra.mxu0 0
  %451 = vmatprep.subr.bf16.mxu0 0
  %452 = vmatpush1.bf16.msra.mxu0 0
  %453 = vmatprep.subr.bf16.mxu0 0
  %454 = vmatpush1.bf16.msra.mxu0 0
  %455 = vmatprep.subr.bf16.mxu0 0
  %456 = vmatpush1.bf16.msra.mxu0 0
  %457 = vmatprep.subr.bf16.mxu0 0
  %458 = vmatpush1.bf16.msra.mxu0 0
  %459 = vmatprep.mubr.bf16.mxu0 0
  %460 = vmatmul.mubr.bf16.gmra.mrb[0].mxu0 %v355
  %v461 = vpop.f32.mrb[0].mxu0
  %v462 = vadd.f32 %v116, %v461
  %v463 = vpop.f32.mrb[0].mxu0
  %v464 = vadd.f32 %v116, %v463
  %v465 = vpop.f32.mrb[0].mxu0
  %v466 = vadd.f32 %v121, %v465
  %v467 = vpop.f32.mrb[0].mxu0
  %v468 = vadd.f32 %v121, %v467
  %469 = vmatprep.mubr.bf16.mxu0 0
  %470 = vmatmul.mubr.bf16.gmra.mrb[0].mxu0 %v358
  %v471 = vpop.f32.mrb[0].mxu0
  %v472 = vadd.f32 %v126, %v471
  %v473 = vpop.f32.mrb[0].mxu0
  %v474 = vadd.f32 %v126, %v473
  %v475 = vpop.f32.mrb[0].mxu0
  %v476 = vadd.f32 %v131, %v475
  %v477 = vpop.f32.mrb[0].mxu0
  %v478 = vadd.f32 %v131, %v477
  %479 = vmatprep.mubr.bf16.mxu0 0
  %480 = vmatmul.mubr.bf16.gmra.mrb[0].mxu0 %v361
  %v481 = vpop.f32.mrb[0].mxu0
  %v482 = vadd.f32 %v136, %v481
  %v483 = vpop.f32.mrb[0].mxu0
  %v484 = vadd.f32 %v136, %v483
  %v485 = vpop.f32.mrb[0].mxu0
  %v486 = vadd.f32 %v141, %v485
  %v487 = vpop.f32.mrb[0].mxu0
  %v488 = vadd.f32 %v141, %v487
  %489 = vmatprep.mubr.bf16.mxu0 0
  %490 = vmatmul.mubr.bf16.gmra.mrb[0].mxu0 %v364
  %v491 = vpop.f32.mrb[0].mxu0
  %v492 = vadd.f32 %v146, %v491
  %v493 = vpop.f32.mrb[0].mxu0
  %v494 = vadd.f32 %v146, %v493
  %v495 = vpop.f32.mrb[0].mxu0
  %v496 = vadd.f32 %v151, %v495
  %v497 = vpop.f32.mrb[0].mxu0
  %v498 = vadd.f32 %v151, %v497
  %499 = vmatprep.mubr.bf16.mxu0 0
  %500 = vmatmul.mubr.bf16.gmra.mrb[0].mxu0 %v367
  %v501 = vpop.f32.mrb[0].mxu0
  %v502 = vadd.f32 %v156, %v501
  %v503 = vpop.f32.mrb[0].mxu0
  %v504 = vadd.f32 %v156, %v503
  %v505 = vpop.f32.mrb[0].mxu0
  %v506 = vadd.f32 %v161, %v505
  %v507 = vpop.f32.mrb[0].mxu0
  %v508 = vadd.f32 %v161, %v507
  %509 = vmatprep.mubr.bf16.mxu0 0
  %510 = vmatmul.mubr.bf16.gmra.mrb[0].mxu0 %v370
  %v511 = vpop.f32.mrb[0].mxu0
  %v512 = vadd.f32 %v166, %v511
  %v513 = vpop.f32.mrb[0].mxu0
  %v514 = vadd.f32 %v166, %v513
  %v515 = vpop.f32.mrb[0].mxu0
  %v516 = vadd.f32 %v171, %v515
  %v517 = vpop.f32.mrb[0].mxu0
  %v518 = vadd.f32 %v171, %v517
  %519 = vmatprep.mubr.bf16.mxu0 0
  %520 = vmatmul.mubr.bf16.gmra.mrb[0].mxu0 %v373
  %v521 = vpop.f32.mrb[0].mxu0
  %v522 = vadd.f32 %v176, %v521
  %v523 = vpop.f32.mrb[0].mxu0
  %v524 = vadd.f32 %v176, %v523
  %v525 = vpop.f32.mrb[0].mxu0
  %v526 = vadd.f32 %v181, %v525
  %v527 = vpop.f32.mrb[0].mxu0
  %v528 = vadd.f32 %v181, %v527
  %529 = vmatprep.mubr.bf16.mxu0 0
  %530 = vmatmul.mubr.bf16.gmra.mrb[0].mxu0 %v376
  %v531 = vpop.f32.mrb[0].mxu0
  %v532 = vadd.f32 %v186, %v531
  %v533 = vpop.f32.mrb[0].mxu0
  %v534 = vadd.f32 %v186, %v533
  %v535 = vpop.f32.mrb[0].mxu0
  %v536 = vadd.f32 %v191, %v535
  %v537 = vpop.f32.mrb[0].mxu0
  %v538 = vadd.f32 %v191, %v537
  %539 = vmatprep.mubr.bf16.mxu0 0
  %540 = vmatmul.mubr.bf16.gmra.mrb[0].mxu0 %v379
  %v541 = vpop.f32.mrb[0].mxu0
  %v542 = vadd.f32 %v196, %v541
  %v543 = vpop.f32.mrb[0].mxu0
  %v544 = vadd.f32 %v196, %v543
  %v545 = vpop.f32.mrb[0].mxu0
  %v546 = vadd.f32 %v201, %v545
  %v547 = vpop.f32.mrb[0].mxu0
  %v548 = vadd.f32 %v201, %v547
  %549 = vmatprep.mubr.bf16.mxu0 0
  %550 = vmatmul.mubr.bf16.gmra.mrb[0].mxu0 %v382
  %v551 = vpop.f32.mrb[0].mxu0
  %v552 = vadd.f32 %v206, %v551
  %v553 = vpop.f32.mrb[0].mxu0
  %v554 = vadd.f32 %v206, %v553
  %v555 = vpop.f32.mrb[0].mxu0
  %v556 = vadd.f32 %v211, %v555
  %v557 = vpop.f32.mrb[0].mxu0
  %v558 = vadd.f32 %v211, %v557
  %559 = vmatprep.mubr.bf16.mxu0 0
  %560 = vmatmul.mubr.bf16.gmra.mrb[0].mxu0 %v385
  %v561 = vpop.f32.mrb[0].mxu0
  %v562 = vadd.f32 %v216, %v561
  %v563 = vpop.f32.mrb[0].mxu0
  %v564 = vadd.f32 %v216, %v563
  %v565 = vpop.f32.mrb[0].mxu0
  %v566 = vadd.f32 %v221, %v565
  %v567 = vpop.f32.mrb[0].mxu0
  %v568 = vadd.f32 %v221, %v567
  %569 = vmatprep.mubr.bf16.mxu0 0
  %570 = vmatmul.mubr.bf16.gmra.mrb[0].mxu0 %v388
  %v571 = vpop.f32.mrb[0].mxu0
  %v572 = vadd.f32 %v226, %v571
  %v573 = vpop.f32.mrb[0].mxu0
  %v574 = vadd.f32 %v226, %v573
  %v575 = vpop.f32.mrb[0].mxu0
  %v576 = vadd.f32 %v231, %v575
  %v577 = vpop.f32.mrb[0].mxu0
  %v578 = vadd.f32 %v231, %v577
  %579 = vmatprep.mubr.bf16.mxu0 0
  %580 = vmatmul.mubr.bf16.gmra.mrb[0].mxu0 %v391
  %v581 = vpop.f32.mrb[0].mxu0
  %v582 = vadd.f32 %v236, %v581
  %v583 = vpop.f32.mrb[0].mxu0
  %v584 = vadd.f32 %v236, %v583
  %v585 = vpop.f32.mrb[0].mxu0
  %v586 = vadd.f32 %v241, %v585
  %v587 = vpop.f32.mrb[0].mxu0
  %v588 = vadd.f32 %v241, %v587
  %589 = vmatprep.mubr.bf16.mxu0 0
  %590 = vmatmul.mubr.bf16.gmra.mrb[0].mxu0 %v394
  %v591 = vpop.f32.mrb[0].mxu0
  %v592 = vadd.f32 %v246, %v591
  %v593 = vpop.f32.mrb[0].mxu0
  %v594 = vadd.f32 %v246, %v593
  %v595 = vpop.f32.mrb[0].mxu0
  %v596 = vadd.f32 %v251, %v595
  %v597 = vpop.f32.mrb[0].mxu0
  %v598 = vadd.f32 %v251, %v597
  %599 = vmatprep.mubr.bf16.mxu0 0
  %600 = vmatmul.mubr.bf16.gmra.mrb[0].mxu0 %v397
  %v601 = vpop.f32.mrb[0].mxu0
  %v602 = vadd.f32 %v256, %v601
  %v603 = vpop.f32.mrb[0].mxu0
  %v604 = vadd.f32 %v256, %v603
  %v605 = vpop.f32.mrb[0].mxu0
  %v606 = vadd.f32 %v261, %v605
  %v607 = vpop.f32.mrb[0].mxu0
  %v608 = vadd.f32 %v261, %v607
  %609 = vmatprep.mubr.bf16.mxu0 0
  %610 = vmatmul.mubr.bf16.gmra.mrb[0].mxu0 %v400
  %v611 = vpop.f32.mrb[0].mxu0
  %v612 = vadd.f32 %v266, %v611
  %v613 = vpop.f32.mrb[0].mxu0
  %v614 = vadd.f32 %v266, %v613
  %v615 = vpop.f32.mrb[0].mxu0
  %v616 = vadd.f32 %v271, %v615
  %v617 = vpop.f32.mrb[0].mxu0
  %v618 = vadd.f32 %v271, %v617
  %619 = vdwg.mxu0
  %620 = vmatprep.subr.bf16.mxu0 %v413
  %621 = vmatpush1.bf16.msra.mxu0 %v410
  %622 = vmatprep.subr.bf16.mxu0 0
  %623 = vmatpush1.bf16.msra.mxu0 0
  %624 = vmatprep.subr.bf16.mxu0 0
  %625 = vmatpush1.bf16.msra.mxu0 0
  %626 = vmatprep.subr.bf16.mxu0 0
  %627 = vmatpush1.bf16.msra.mxu0 0
  %628 = vmatprep.subr.bf16.mxu0 0
  %629 = vmatpush1.bf16.msra.mxu0 0
  %630 = vmatprep.subr.bf16.mxu0 0
  %631 = vmatpush1.bf16.msra.mxu0 0
  %632 = vmatprep.subr.bf16.mxu0 0
  %633 = vmatpush1.bf16.msra.mxu0 0
  %634 = vmatprep.subr.bf16.mxu0 0
  %635 = vmatpush1.bf16.msra.mxu0 0
  %636 = vmatprep.subr.bf16.mxu0 0
  %637 = vmatpush1.bf16.msra.mxu0 0
  %638 = vmatprep.subr.bf16.mxu0 0
  %639 = vmatpush1.bf16.msra.mxu0 0
  %640 = vmatprep.subr.bf16.mxu0 0
  %641 = vmatpush1.bf16.msra.mxu0 0
  %642 = vmatprep.subr.bf16.mxu0 0
  %643 = vmatpush1.bf16.msra.mxu0 0
  %644 = vmatprep.subr.bf16.mxu0 0
  %645 = vmatpush1.bf16.msra.mxu0 0
  %646 = vmatprep.subr.bf16.mxu0 0
  %647 = vmatpush1.bf16.msra.mxu0 0
  %648 = vmatprep.subr.bf16.mxu0 0
  %649 = vmatpush1.bf16.msra.mxu0 0
  %650 = vmatprep.subr.bf16.mxu0 0
  %651 = vmatpush1.bf16.msra.mxu0 0
  %652 = vmatprep.mubr.bf16.mxu0 0
  %653 = vmatmul.mubr.bf16.gmra.mrb[0].mxu0 %v355
  %v654 = vpop.f32.mrb[0].mxu0
  %v655 = vadd.f32 %v116, %v654
  %v656 = vpop.f32.mrb[0].mxu0
  %v657 = vadd.f32 %v116, %v656
  %v658 = vpop.f32.mrb[0].mxu0
  %v659 = vadd.f32 %v121, %v658
  %v660 = vpop.f32.mrb[0].mxu0
  %v661 = vadd.f32 %v121, %v660
  %662 = vmatprep.mubr.bf16.mxu0 0
  %663 = vmatmul.mubr.bf16.gmra.mrb[0].mxu0 %v358
  %v664 = vpop.f32.mrb[0].mxu0
  %v665 = vadd.f32 %v126, %v664
  %v666 = vpop.f32.mrb[0].mxu0
  %v667 = vadd.f32 %v126, %v666
  %v668 = vpop.f32.mrb[0].mxu0
  %v669 = vadd.f32 %v131, %v668
  %v670 = vpop.f32.mrb[0].mxu0
  %v671 = vadd.f32 %v131, %v670
  %672 = vmatprep.mubr.bf16.mxu0 0
  %673 = vmatmul.mubr.bf16.gmra.mrb[0].mxu0 %v361
  %v674 = vpop.f32.mrb[0].mxu0
  %v675 = vadd.f32 %v136, %v674
  %v676 = vpop.f32.mrb[0].mxu0
  %v677 = vadd.f32 %v136, %v676
  %v678 = vpop.f32.mrb[0].mxu0
  %v679 = vadd.f32 %v141, %v678
  %v680 = vpop.f32.mrb[0].mxu0
  %v681 = vadd.f32 %v141, %v680
  %682 = vmatprep.mubr.bf16.mxu0 0
  %683 = vmatmul.mubr.bf16.gmra.mrb[0].mxu0 %v364
  %v684 = vpop.f32.mrb[0].mxu0
  %v685 = vadd.f32 %v146, %v684
  %v686 = vpop.f32.mrb[0].mxu0
  %v687 = vadd.f32 %v146, %v686
  %v688 = vpop.f32.mrb[0].mxu0
  %v689 = vadd.f32 %v151, %v688
  %v690 = vpop.f32.mrb[0].mxu0
  %v691 = vadd.f32 %v151, %v690
  %692 = vmatprep.mubr.bf16.mxu0 0
  %693 = vmatmul.mubr.bf16.gmra.mrb[0].mxu0 %v367
  %v694 = vpop.f32.mrb[0].mxu0
  %v695 = vadd.f32 %v156, %v694
  %v696 = vpop.f32.mrb[0].mxu0
  %v697 = vadd.f32 %v156, %v696
  %v698 = vpop.f32.mrb[0].mxu0
  %v699 = vadd.f32 %v161, %v698
  %v700 = vpop.f32.mrb[0].mxu0
  %v701 = vadd.f32 %v161, %v700
  %702 = vmatprep.mubr.bf16.mxu0 0
  %703 = vmatmul.mubr.bf16.gmra.mrb[0].mxu0 %v370
  %v704 = vpop.f32.mrb[0].mxu0
  %v705 = vadd.f32 %v166, %v704
  %v706 = vpop.f32.mrb[0].mxu0
  %v707 = vadd.f32 %v166, %v706
  %v708 = vpop.f32.mrb[0].mxu0
  %v709 = vadd.f32 %v171, %v708
  %v710 = vpop.f32.mrb[0].mxu0
  %v711 = vadd.f32 %v171, %v710
  %712 = vmatprep.mubr.bf16.mxu0 0
  %713 = vmatmul.mubr.bf16.gmra.mrb[0].mxu0 %v373
  %v714 = vpop.f32.mrb[0].mxu0
  %v715 = vadd.f32 %v176, %v714
  %v716 = vpop.f32.mrb[0].mxu0
  %v717 = vadd.f32 %v176, %v716
  %v718 = vpop.f32.mrb[0].mxu0
  %v719 = vadd.f32 %v181, %v718
  %v720 = vpop.f32.mrb[0].mxu0
  %v721 = vadd.f32 %v181, %v720
  %722 = vmatprep.mubr.bf16.mxu0 0
  %723 = vmatmul.mubr.bf16.gmra.mrb[0].mxu0 %v376
  %v724 = vpop.f32.mrb[0].mxu0
  %v725 = vadd.f32 %v186, %v724
  %v726 = vpop.f32.mrb[0].mxu0
  %v727 = vadd.f32 %v186, %v726
  %v728 = vpop.f32.mrb[0].mxu0
  %v729 = vadd.f32 %v191, %v728
  %v730 = vpop.f32.mrb[0].mxu0
  %v731 = vadd.f32 %v191, %v730
  %732 = vmatprep.mubr.bf16.mxu0 0
  %733 = vmatmul.mubr.bf16.gmra.mrb[0].mxu0 %v379
  %v734 = vpop.f32.mrb[0].mxu0
  %v735 = vadd.f32 %v196, %v734
  %v736 = vpop.f32.mrb[0].mxu0
  %v737 = vadd.f32 %v196, %v736
  %v738 = vpop.f32.mrb[0].mxu0
  %v739 = vadd.f32 %v201, %v738
  %v740 = vpop.f32.mrb[0].mxu0
  %v741 = vadd.f32 %v201, %v740
  %742 = vmatprep.mubr.bf16.mxu0 0
  %743 = vmatmul.mubr.bf16.gmra.mrb[0].mxu0 %v382
  %v744 = vpop.f32.mrb[0].mxu0
  %v745 = vadd.f32 %v206, %v744
  %v746 = vpop.f32.mrb[0].mxu0
  %v747 = vadd.f32 %v206, %v746
  %v748 = vpop.f32.mrb[0].mxu0
  %v749 = vadd.f32 %v211, %v748
  %v750 = vpop.f32.mrb[0].mxu0
  %v751 = vadd.f32 %v211, %v750
  %752 = vmatprep.mubr.bf16.mxu0 0
  %753 = vmatmul.mubr.bf16.gmra.mrb[0].mxu0 %v385
  %v754 = vpop.f32.mrb[0].mxu0
  %v755 = vadd.f32 %v216, %v754
  %v756 = vpop.f32.mrb[0].mxu0
  %v757 = vadd.f32 %v216, %v756
  %v758 = vpop.f32.mrb[0].mxu0
  %v759 = vadd.f32 %v221, %v758
  %v760 = vpop.f32.mrb[0].mxu0
  %v761 = vadd.f32 %v221, %v760
  %762 = vmatprep.mubr.bf16.mxu0 0
  %763 = vmatmul.mubr.bf16.gmra.mrb[0].mxu0 %v388
  %v764 = vpop.f32.mrb[0].mxu0
  %v765 = vadd.f32 %v226, %v764
  %v766 = vpop.f32.mrb[0].mxu0
  %v767 = vadd.f32 %v226, %v766
  %v768 = vpop.f32.mrb[0].mxu0
  %v769 = vadd.f32 %v231, %v768
  %v770 = vpop.f32.mrb[0].mxu0
  %v771 = vadd.f32 %v231, %v770
  %772 = vmatprep.mubr.bf16.mxu0 0
  %773 = vmatmul.mubr.bf16.gmra.mrb[0].mxu0 %v391
  %v774 = vpop.f32.mrb[0].mxu0
  %v775 = vadd.f32 %v236, %v774
  %v776 = vpop.f32.mrb[0].mxu0
  %v777 = vadd.f32 %v236, %v776
  %v778 = vpop.f32.mrb[0].mxu0
  %v779 = vadd.f32 %v241, %v778
  %v780 = vpop.f32.mrb[0].mxu0
  %v781 = vadd.f32 %v241, %v780
  %782 = vmatprep.mubr.bf16.mxu0 0
  %783 = vmatmul.mubr.bf16.gmra.mrb[0].mxu0 %v394
  %v784 = vpop.f32.mrb[0].mxu0
  %v785 = vadd.f32 %v246, %v784
  %v786 = vpop.f32.mrb[0].mxu0
  %v787 = vadd.f32 %v246, %v786
  %v788 = vpop.f32.mrb[0].mxu0
  %v789 = vadd.f32 %v251, %v788
  %v790 = vpop.f32.mrb[0].mxu0
  %v791 = vadd.f32 %v251, %v790
  %792 = vmatprep.mubr.bf16.mxu0 0
  %793 = vmatmul.mubr.bf16.gmra.mrb[0].mxu0 %v397
  %v794 = vpop.f32.mrb[0].mxu0
  %v795 = vadd.f32 %v256, %v794
  %v796 = vpop.f32.mrb[0].mxu0
  %v797 = vadd.f32 %v256, %v796
  %v798 = vpop.f32.mrb[0].mxu0
  %v799 = vadd.f32 %v261, %v798
  %v800 = vpop.f32.mrb[0].mxu0
  %v801 = vadd.f32 %v261, %v800
  %802 = vmatprep.mubr.bf16.mxu0 0
  %803 = vmatmul.mubr.bf16.gmra.mrb[0].mxu0 %v400
  %v804 = vpop.f32.mrb[0].mxu0
  %v805 = vadd.f32 %v266, %v804
  %v806 = vpop.f32.mrb[0].mxu0
  %v807 = vadd.f32 %v266, %v806
  %v808 = vpop.f32.mrb[0].mxu0
  %v809 = vadd.f32 %v271, %v808
  %v810 = vpop.f32.mrb[0].mxu0
  %v811 = vadd.f32 %v271, %v810
  %812 = vdwg.mxu0
  %813 = vmatprep.subr.bf16.mxu0 %v419
  %814 = vmatpush1.bf16.msra.mxu0 %v416
  %815 = vmatprep.subr.bf16.mxu0 0
  %816 = vmatpush1.bf16.msra.mxu0 0
  %817 = vmatprep.subr.bf16.mxu0 0
  %818 = vmatpush1.bf16.msra.mxu0 0
  %819 = vmatprep.subr.bf16.mxu0 0
  %820 = vmatpush1.bf16.msra.mxu0 0
  %821 = vmatprep.subr.bf16.mxu0 0
  %822 = vmatpush1.bf16.msra.mxu0 0
  %823 = vmatprep.subr.bf16.mxu0 0
  %824 = vmatpush1.bf16.msra.mxu0 0
  %825 = vmatprep.subr.bf16.mxu0 0
  %826 = vmatpush1.bf16.msra.mxu0 0
  %827 = vmatprep.subr.bf16.mxu0 0
  %828 = vmatpush1.bf16.msra.mxu0 0
  %829 = vmatprep.subr.bf16.mxu0 0
  %830 = vmatpush1.bf16.msra.mxu0 0
  %831 = vmatprep.subr.bf16.mxu0 0
  %832 = vmatpush1.bf16.msra.mxu0 0
  %833 = vmatprep.subr.bf16.mxu0 0
  %834 = vmatpush1.bf16.msra.mxu0 0
  %835 = vmatprep.subr.bf16.mxu0 0
  %836 = vmatpush1.bf16.msra.mxu0 0
  %837 = vmatprep.subr.bf16.mxu0 0
  %838 = vmatpush1.bf16.msra.mxu0 0
  %839 = vmatprep.subr.bf16.mxu0 0
  %840 = vmatpush1.bf16.msra.mxu0 0
  %841 = vmatprep.subr.bf16.mxu0 0
  %842 = vmatpush1.bf16.msra.mxu0 0
  %843 = vmatprep.subr.bf16.mxu0 0
  %844 = vmatpush1.bf16.msra.mxu0 0
  %845 = vmatprep.mubr.bf16.mxu0 0
  %846 = vmatmul.mubr.bf16.gmra.mrb[0].mxu0 %v355
  %v847 = vpop.f32.mrb[0].mxu0
  %v848 = vadd.f32 %v116, %v847
  %v849 = vpop.f32.mrb[0].mxu0
  %v850 = vadd.f32 %v116, %v849
  %v851 = vpop.f32.mrb[0].mxu0
  %v852 = vadd.f32 %v121, %v851
  %v853 = vpop.f32.mrb[0].mxu0
  %v854 = vadd.f32 %v121, %v853
  %855 = vmatprep.mubr.bf16.mxu0 0
  %856 = vmatmul.mubr.bf16.gmra.mrb[0].mxu0 %v358
  %v857 = vpop.f32.mrb[0].mxu0
  %v858 = vadd.f32 %v126, %v857
  %v859 = vpop.f32.mrb[0].mxu0
  %v860 = vadd.f32 %v126, %v859
  %v861 = vpop.f32.mrb[0].mxu0
  %v862 = vadd.f32 %v131, %v861
  %v863 = vpop.f32.mrb[0].mxu0
  %v864 = vadd.f32 %v131, %v863
  %865 = vmatprep.mubr.bf16.mxu0 0
  %866 = vmatmul.mubr.bf16.gmra.mrb[0].mxu0 %v361
  %v867 = vpop.f32.mrb[0].mxu0
  %v868 = vadd.f32 %v136, %v867
  %v869 = vpop.f32.mrb[0].mxu0
  %v870 = vadd.f32 %v136, %v869
  %v871 = vpop.f32.mrb[0].mxu0
  %v872 = vadd.f32 %v141, %v871
  %v873 = vpop.f32.mrb[0].mxu0
  %v874 = vadd.f32 %v141, %v873
  %875 = vmatprep.mubr.bf16.mxu0 0
  %876 = vmatmul.mubr.bf16.gmra.mrb[0].mxu0 %v364
  %v877 = vpop.f32.mrb[0].mxu0
  %v878 = vadd.f32 %v146, %v877
  %v879 = vpop.f32.mrb[0].mxu0
  %v880 = vadd.f32 %v146, %v879
  %v881 = vpop.f32.mrb[0].mxu0
  %v882 = vadd.f32 %v151, %v881
  %v883 = vpop.f32.mrb[0].mxu0
  %v884 = vadd.f32 %v151, %v883
  %885 = vmatprep.mubr.bf16.mxu0 0
  %886 = vmatmul.mubr.bf16.gmra.mrb[0].mxu0 %v367
  %v887 = vpop.f32.mrb[0].mxu0
  %v888 = vadd.f32 %v156, %v887
  %v889 = vpop.f32.mrb[0].mxu0
  %v890 = vadd.f32 %v156, %v889
  %v891 = vpop.f32.mrb[0].mxu0
  %v892 = vadd.f32 %v161, %v891
  %v893 = vpop.f32.mrb[0].mxu0
  %v894 = vadd.f32 %v161, %v893
  %895 = vmatprep.mubr.bf16.mxu0 0
  %896 = vmatmul.mubr.bf16.gmra.mrb[0].mxu0 %v370
  %v897 = vpop.f32.mrb[0].mxu0
  %v898 = vadd.f32 %v166, %v897
  %v899 = vpop.f32.mrb[0].mxu0
  %v900 = vadd.f32 %v166, %v899
  %v901 = vpop.f32.mrb[0].mxu0
  %v902 = vadd.f32 %v171, %v901
  %v903 = vpop.f32.mrb[0].mxu0
  %v904 = vadd.f32 %v171, %v903
  %905 = vmatprep.mubr.bf16.mxu0 0
  %906 = vmatmul.mubr.bf16.gmra.mrb[0].mxu0 %v373
  %v907 = vpop.f32.mrb[0].mxu0
  %v908 = vadd.f32 %v176, %v907
  %v909 = vpop.f32.mrb[0].mxu0
  %v910 = vadd.f32 %v176, %v909
  %v911 = vpop.f32.mrb[0].mxu0
  %v912 = vadd.f32 %v181, %v911
  %v913 = vpop.f32.mrb[0].mxu0
  %v914 = vadd.f32 %v181, %v913
  %915 = vmatprep.mubr.bf16.mxu0 0
  %916 = vmatmul.mubr.bf16.gmra.mrb[0].mxu0 %v376
  %v917 = vpop.f32.mrb[0].mxu0
  %v918 = vadd.f32 %v186, %v917
  %v919 = vpop.f32.mrb[0].mxu0
  %v920 = vadd.f32 %v186, %v919
  %v921 = vpop.f32.mrb[0].mxu0
  %v922 = vadd.f32 %v191, %v921
  %v923 = vpop.f32.mrb[0].mxu0
  %v924 = vadd.f32 %v191, %v923
  %925 = vmatprep.mubr.bf16.mxu0 0
  %926 = vmatmul.mubr.bf16.gmra.mrb[0].mxu0 %v379
  %v927 = vpop.f32.mrb[0].mxu0
  %v928 = vadd.f32 %v196, %v927
  %v929 = vpop.f32.mrb[0].mxu0
  %v930 = vadd.f32 %v196, %v929
  %v931 = vpop.f32.mrb[0].mxu0
  %v932 = vadd.f32 %v201, %v931
  %v933 = vpop.f32.mrb[0].mxu0
  %v934 = vadd.f32 %v201, %v933
  %935 = vmatprep.mubr.bf16.mxu0 0
  %936 = vmatmul.mubr.bf16.gmra.mrb[0].mxu0 %v382
  %v937 = vpop.f32.mrb[0].mxu0
  %v938 = vadd.f32 %v206, %v937
  %v939 = vpop.f32.mrb[0].mxu0
  %v940 = vadd.f32 %v206, %v939
  %v941 = vpop.f32.mrb[0].mxu0
  %v942 = vadd.f32 %v211, %v941
  %v943 = vpop.f32.mrb[0].mxu0
  %v944 = vadd.f32 %v211, %v943
  %945 = vmatprep.mubr.bf16.mxu0 0
  %946 = vmatmul.mubr.bf16.gmra.mrb[0].mxu0 %v385
  %v947 = vpop.f32.mrb[0].mxu0
  %v948 = vadd.f32 %v216, %v947
  %v949 = vpop.f32.mrb[0].mxu0
  %v950 = vadd.f32 %v216, %v949
  %v951 = vpop.f32.mrb[0].mxu0
  %v952 = vadd.f32 %v221, %v951
  %v953 = vpop.f32.mrb[0].mxu0
  %v954 = vadd.f32 %v221, %v953
  %955 = vmatprep.mubr.bf16.mxu0 0
  %956 = vmatmul.mubr.bf16.gmra.mrb[0].mxu0 %v388
  %v957 = vpop.f32.mrb[0].mxu0
  %v958 = vadd.f32 %v226, %v957
  %v959 = vpop.f32.mrb[0].mxu0
  %v960 = vadd.f32 %v226, %v959
  %v961 = vpop.f32.mrb[0].mxu0
  %v962 = vadd.f32 %v231, %v961
  %v963 = vpop.f32.mrb[0].mxu0
  %v964 = vadd.f32 %v231, %v963
  %965 = vmatprep.mubr.bf16.mxu0 0
  %966 = vmatmul.mubr.bf16.gmra.mrb[0].mxu0 %v391
  %v967 = vpop.f32.mrb[0].mxu0
  %v968 = vadd.f32 %v236, %v967
  %v969 = vpop.f32.mrb[0].mxu0
  %v970 = vadd.f32 %v236, %v969
  %v971 = vpop.f32.mrb[0].mxu0
  %v972 = vadd.f32 %v241, %v971
  %v973 = vpop.f32.mrb[0].mxu0
  %v974 = vadd.f32 %v241, %v973
  %975 = vmatprep.mubr.bf16.mxu0 0
  %976 = vmatmul.mubr.bf16.gmra.mrb[0].mxu0 %v394
  %v977 = vpop.f32.mrb[0].mxu0
  %v978 = vadd.f32 %v246, %v977
  %v979 = vpop.f32.mrb[0].mxu0
  %v980 = vadd.f32 %v246, %v979
  %v981 = vpop.f32.mrb[0].mxu0
  %v982 = vadd.f32 %v251, %v981
  %v983 = vpop.f32.mrb[0].mxu0
  %v984 = vadd.f32 %v251, %v983
  %985 = vmatprep.mubr.bf16.mxu0 0
  %986 = vmatmul.mubr.bf16.gmra.mrb[0].mxu0 %v397
  %v987 = vpop.f32.mrb[0].mxu0
  %v988 = vadd.f32 %v256, %v987
  %v989 = vpop.f32.mrb[0].mxu0
  %v990 = vadd.f32 %v256, %v989
  %v991 = vpop.f32.mrb[0].mxu0
  %v992 = vadd.f32 %v261, %v991
  %v993 = vpop.f32.mrb[0].mxu0
  %v994 = vadd.f32 %v261, %v993
  %995 = vmatprep.mubr.bf16.mxu0 0
  %996 = vmatmul.mubr.bf16.gmra.mrb[0].mxu0 %v400
  %v997 = vpop.f32.mrb[0].mxu0
  %v998 = vadd.f32 %v266, %v997
  %v999 = vpop.f32.mrb[0].mxu0
  %v1000 = vadd.f32 %v266, %v999
  %v1001 = vpop.f32.mrb[0].mxu0
  %v1002 = vadd.f32 %v271, %v1001
  %v1003 = vpop.f32.mrb[0].mxu0
  %v1004 = vadd.f32 %v271, %v1003
  %1005 = vdwg.mxu0
  %1006 = vmatprep.subr.bf16.mxu0 %v425
  %1007 = vmatpush1.bf16.msra.mxu0 %v422
  %1008 = vmatprep.subr.bf16.mxu0 0
  %1009 = vmatpush1.bf16.msra.mxu0 0
  %1010 = vmatprep.subr.bf16.mxu0 0
  %1011 = vmatpush1.bf16.msra.mxu0 0
  %1012 = vmatprep.subr.bf16.mxu0 0
  %1013 = vmatpush1.bf16.msra.mxu0 0
  %1014 = vmatprep.subr.bf16.mxu0 0
  %1015 = vmatpush1.bf16.msra.mxu0 0
  %1016 = vmatprep.subr.bf16.mxu0 0
  %1017 = vmatpush1.bf16.msra.mxu0 0
  %1018 = vmatprep.subr.bf16.mxu0 0
  %1019 = vmatpush1.bf16.msra.mxu0 0
  %1020 = vmatprep.subr.bf16.mxu0 0
  %1021 = vmatpush1.bf16.msra.mxu0 0
  %1022 = vmatprep.subr.bf16.mxu0 0
  %1023 = vmatpush1.bf16.msra.mxu0 0
  %1024 = vmatprep.subr.bf16.mxu0 0
  %1025 = vmatpush1.bf16.msra.mxu0 0
  %1026 = vmatprep.subr.bf16.mxu0 0
  %1027 = vmatpush1.bf16.msra.mxu0 0
  %1028 = vmatprep.subr.bf16.mxu0 0
  %1029 = vmatpush1.bf16.msra.mxu0 0
  %1030 = vmatprep.subr.bf16.mxu0 0
  %1031 = vmatpush1.bf16.msra.mxu0 0
  %1032 = vmatprep.subr.bf16.mxu0 0
  %1033 = vmatpush1.bf16.msra.mxu0 0
  %1034 = vmatprep.subr.bf16.mxu0 0
  %1035 = vmatpush1.bf16.msra.mxu0 0
  %1036 = vmatprep.subr.bf16.mxu0 0
  %1037 = vmatpush1.bf16.msra.mxu0 0
  %1038 = vmatprep.mubr.bf16.mxu0 0
  %1039 = vmatmul.mubr.bf16.gmra.mrb[0].mxu0 %v355
  %v1040 = vpop.f32.mrb[0].mxu0
  %v1041 = vadd.f32 %v116, %v1040
  %v1042 = vpop.f32.mrb[0].mxu0
  %v1043 = vadd.f32 %v116, %v1042
  %v1044 = vpop.f32.mrb[0].mxu0
  %v1045 = vadd.f32 %v121, %v1044
  %v1046 = vpop.f32.mrb[0].mxu0
  %v1047 = vadd.f32 %v121, %v1046
  %1048 = vmatprep.mubr.bf16.mxu0 0
  %1049 = vmatmul.mubr.bf16.gmra.mrb[0].mxu0 %v358
  %v1050 = vpop.f32.mrb[0].mxu0
  %v1051 = vadd.f32 %v126, %v1050
  %v1052 = vpop.f32.mrb[0].mxu0
  %v1053 = vadd.f32 %v126, %v1052
  %v1054 = vpop.f32.mrb[0].mxu0
  %v1055 = vadd.f32 %v131, %v1054
  %v1056 = vpop.f32.mrb[0].mxu0
  %v1057 = vadd.f32 %v131, %v1056
  %1058 = vmatprep.mubr.bf16.mxu0 0
  %1059 = vmatmul.mubr.bf16.gmra.mrb[0].mxu0 %v361
  %v1060 = vpop.f32.mrb[0].mxu0
  %v1061 = vadd.f32 %v136, %v1060
  %v1062 = vpop.f32.mrb[0].mxu0
  %v1063 = vadd.f32 %v136, %v1062
  %v1064 = vpop.f32.mrb[0].mxu0
  %v1065 = vadd.f32 %v141, %v1064
  %v1066 = vpop.f32.mrb[0].mxu0
  %v1067 = vadd.f32 %v141, %v1066
  %1068 = vmatprep.mubr.bf16.mxu0 0
  %1069 = vmatmul.mubr.bf16.gmra.mrb[0].mxu0 %v364
  %v1070 = vpop.f32.mrb[0].mxu0
  %v1071 = vadd.f32 %v146, %v1070
  %v1072 = vpop.f32.mrb[0].mxu0
  %v1073 = vadd.f32 %v146, %v1072
  %v1074 = vpop.f32.mrb[0].mxu0
  %v1075 = vadd.f32 %v151, %v1074
  %v1076 = vpop.f32.mrb[0].mxu0
  %v1077 = vadd.f32 %v151, %v1076
  %1078 = vmatprep.mubr.bf16.mxu0 0
  %1079 = vmatmul.mubr.bf16.gmra.mrb[0].mxu0 %v367
  %v1080 = vpop.f32.mrb[0].mxu0
  %v1081 = vadd.f32 %v156, %v1080
  %v1082 = vpop.f32.mrb[0].mxu0
  %v1083 = vadd.f32 %v156, %v1082
  %v1084 = vpop.f32.mrb[0].mxu0
  %v1085 = vadd.f32 %v161, %v1084
  %v1086 = vpop.f32.mrb[0].mxu0
  %v1087 = vadd.f32 %v161, %v1086
  %1088 = vmatprep.mubr.bf16.mxu0 0
  %1089 = vmatmul.mubr.bf16.gmra.mrb[0].mxu0 %v370
  %v1090 = vpop.f32.mrb[0].mxu0
  %v1091 = vadd.f32 %v166, %v1090
  %v1092 = vpop.f32.mrb[0].mxu0
  %v1093 = vadd.f32 %v166, %v1092
  %v1094 = vpop.f32.mrb[0].mxu0
  %v1095 = vadd.f32 %v171, %v1094
  %v1096 = vpop.f32.mrb[0].mxu0
  %v1097 = vadd.f32 %v171, %v1096
  %1098 = vmatprep.mubr.bf16.mxu0 0
  %1099 = vmatmul.mubr.bf16.gmra.mrb[0].mxu0 %v373
  %v1100 = vpop.f32.mrb[0].mxu0
  %v1101 = vadd.f32 %v176, %v1100
  %v1102 = vpop.f32.mrb[0].mxu0
  %v1103 = vadd.f32 %v176, %v1102
  %v1104 = vpop.f32.mrb[0].mxu0
  %v1105 = vadd.f32 %v181, %v1104
  %v1106 = vpop.f32.mrb[0].mxu0
  %v1107 = vadd.f32 %v181, %v1106
  %1108 = vmatprep.mubr.bf16.mxu0 0
  %1109 = vmatmul.mubr.bf16.gmra.mrb[0].mxu0 %v376
  %v1110 = vpop.f32.mrb[0].mxu0
  %v1111 = vadd.f32 %v186, %v1110
  %v1112 = vpop.f32.mrb[0].mxu0
  %v1113 = vadd.f32 %v186, %v1112
  %v1114 = vpop.f32.mrb[0].mxu0
  %v1115 = vadd.f32 %v191, %v1114
  %v1116 = vpop.f32.mrb[0].mxu0
  %v1117 = vadd.f32 %v191, %v1116
  %1118 = vmatprep.mubr.bf16.mxu0 0
  %1119 = vmatmul.mubr.bf16.gmra.mrb[0].mxu0 %v379
  %v1120 = vpop.f32.mrb[0].mxu0
  %v1121 = vadd.f32 %v196, %v1120
  %v1122 = vpop.f32.mrb[0].mxu0
  %v1123 = vadd.f32 %v196, %v1122
  %v1124 = vpop.f32.mrb[0].mxu0
  %v1125 = vadd.f32 %v201, %v1124
  %v1126 = vpop.f32.mrb[0].mxu0
  %v1127 = vadd.f32 %v201, %v1126
  %1128 = vmatprep.mubr.bf16.mxu0 0
  %1129 = vmatmul.mubr.bf16.gmra.mrb[0].mxu0 %v382
  %v1130 = vpop.f32.mrb[0].mxu0
  %v1131 = vadd.f32 %v206, %v1130
  %v1132 = vpop.f32.mrb[0].mxu0
  %v1133 = vadd.f32 %v206, %v1132
  %v1134 = vpop.f32.mrb[0].mxu0
  %v1135 = vadd.f32 %v211, %v1134
  %v1136 = vpop.f32.mrb[0].mxu0
  %v1137 = vadd.f32 %v211, %v1136
  %1138 = vmatprep.mubr.bf16.mxu0 0
  %1139 = vmatmul.mubr.bf16.gmra.mrb[0].mxu0 %v385
  %v1140 = vpop.f32.mrb[0].mxu0
  %v1141 = vadd.f32 %v216, %v1140
  %v1142 = vpop.f32.mrb[0].mxu0
  %v1143 = vadd.f32 %v216, %v1142
  %v1144 = vpop.f32.mrb[0].mxu0
  %v1145 = vadd.f32 %v221, %v1144
  %v1146 = vpop.f32.mrb[0].mxu0
  %v1147 = vadd.f32 %v221, %v1146
  %1148 = vmatprep.mubr.bf16.mxu0 0
  %1149 = vmatmul.mubr.bf16.gmra.mrb[0].mxu0 %v388
  %v1150 = vpop.f32.mrb[0].mxu0
  %v1151 = vadd.f32 %v226, %v1150
  %v1152 = vpop.f32.mrb[0].mxu0
  %v1153 = vadd.f32 %v226, %v1152
  %v1154 = vpop.f32.mrb[0].mxu0
  %v1155 = vadd.f32 %v231, %v1154
  %v1156 = vpop.f32.mrb[0].mxu0
  %v1157 = vadd.f32 %v231, %v1156
  %1158 = vmatprep.mubr.bf16.mxu0 0
  %1159 = vmatmul.mubr.bf16.gmra.mrb[0].mxu0 %v391
  %v1160 = vpop.f32.mrb[0].mxu0
  %v1161 = vadd.f32 %v236, %v1160
  %v1162 = vpop.f32.mrb[0].mxu0
  %v1163 = vadd.f32 %v236, %v1162
  %v1164 = vpop.f32.mrb[0].mxu0
  %v1165 = vadd.f32 %v241, %v1164
  %v1166 = vpop.f32.mrb[0].mxu0
  %v1167 = vadd.f32 %v241, %v1166
  %1168 = vmatprep.mubr.bf16.mxu0 0
  %1169 = vmatmul.mubr.bf16.gmra.mrb[0].mxu0 %v394
  %v1170 = vpop.f32.mrb[0].mxu0
  %v1171 = vadd.f32 %v246, %v1170
  %v1172 = vpop.f32.mrb[0].mxu0
  %v1173 = vadd.f32 %v246, %v1172
  %v1174 = vpop.f32.mrb[0].mxu0
  %v1175 = vadd.f32 %v251, %v1174
  %v1176 = vpop.f32.mrb[0].mxu0
  %v1177 = vadd.f32 %v251, %v1176
  %1178 = vmatprep.mubr.bf16.mxu0 0
  %1179 = vmatmul.mubr.bf16.gmra.mrb[0].mxu0 %v397
  %v1180 = vpop.f32.mrb[0].mxu0
  %v1181 = vadd.f32 %v256, %v1180
  %v1182 = vpop.f32.mrb[0].mxu0
  %v1183 = vadd.f32 %v256, %v1182
  %v1184 = vpop.f32.mrb[0].mxu0
  %v1185 = vadd.f32 %v261, %v1184
  %v1186 = vpop.f32.mrb[0].mxu0
  %v1187 = vadd.f32 %v261, %v1186
  %1188 = vmatprep.mubr.bf16.mxu0 0
  %1189 = vmatmul.mubr.bf16.gmra.mrb[0].mxu0 %v400
  %v1190 = vpop.f32.mrb[0].mxu0
  %v1191 = vadd.f32 %v266, %v1190
  %v1192 = vpop.f32.mrb[0].mxu0
  %v1193 = vadd.f32 %v266, %v1192
  %v1194 = vpop.f32.mrb[0].mxu0
  %v1195 = vadd.f32 %v271, %v1194
  %v1196 = vpop.f32.mrb[0].mxu0
  %v1197 = vadd.f32 %v271, %v1196
  %1198 = vdwg.mxu0
  %v1199 = vmax.f32 %v462, 0.0
  %v1200 = vmax.f32 %v464, 0.0
  %v1201 = vmax.f32 %v655, 0.0
  %v1202 = vmax.f32 %v657, 0.0
  %v1203 = vmax.f32 %v848, 0.0
  %v1204 = vmax.f32 %v850, 0.0
  %v1205 = vmax.f32 %v1041, 0.0
  %v1206 = vmax.f32 %v1043, 0.0
  %v1207 = vmax.f32 %v466, 0.0
  %v1208 = vmax.f32 %v468, 0.0
  %v1209 = vmax.f32 %v659, 0.0
  %v1210 = vmax.f32 %v661, 0.0
  %v1211 = vmax.f32 %v852, 0.0
  %v1212 = vmax.f32 %v854, 0.0
  %v1213 = vmax.f32 %v1045, 0.0
  %v1214 = vmax.f32 %v1047, 0.0
  %v1215 = vmax.f32 %v472, 0.0
  %v1216 = vmax.f32 %v474, 0.0
  %v1217 = vmax.f32 %v665, 0.0
  %v1218 = vmax.f32 %v667, 0.0
  %v1219 = vmax.f32 %v858, 0.0
  %v1220 = vmax.f32 %v860, 0.0
  %v1221 = vmax.f32 %v1051, 0.0
  %v1222 = vmax.f32 %v1053, 0.0
  %v1223 = vmax.f32 %v476, 0.0
  %v1224 = vmax.f32 %v478, 0.0
  %v1225 = vmax.f32 %v669, 0.0
  %v1226 = vmax.f32 %v671, 0.0
  %v1227 = vmax.f32 %v862, 0.0
  %v1228 = vmax.f32 %v864, 0.0
  %v1229 = vmax.f32 %v1055, 0.0
  %v1230 = vmax.f32 %v1057, 0.0
  %v1231 = vmax.f32 %v482, 0.0
  %v1232 = vmax.f32 %v484, 0.0
  %v1233 = vmax.f32 %v675, 0.0
  %v1234 = vmax.f32 %v677, 0.0
  %v1235 = vmax.f32 %v868, 0.0
  %v1236 = vmax.f32 %v870, 0.0
  %v1237 = vmax.f32 %v1061, 0.0
  %v1238 = vmax.f32 %v1063, 0.0
  %v1239 = vmax.f32 %v486, 0.0
  %v1240 = vmax.f32 %v488, 0.0
  %v1241 = vmax.f32 %v679, 0.0
  %v1242 = vmax.f32 %v681, 0.0
  %v1243 = vmax.f32 %v872, 0.0
  %v1244 = vmax.f32 %v874, 0.0
  %v1245 = vmax.f32 %v1065, 0.0
  %v1246 = vmax.f32 %v1067, 0.0
  %v1247 = vmax.f32 %v492, 0.0
  %v1248 = vmax.f32 %v494, 0.0
  %v1249 = vmax.f32 %v685, 0.0
  %v1250 = vmax.f32 %v687, 0.0
  %v1251 = vmax.f32 %v878, 0.0
  %v1252 = vmax.f32 %v880, 0.0
  %v1253 = vmax.f32 %v1071, 0.0
  %v1254 = vmax.f32 %v1073, 0.0
  %v1255 = vmax.f32 %v496, 0.0
  %v1256 = vmax.f32 %v498, 0.0
  %v1257 = vmax.f32 %v689, 0.0
  %v1258 = vmax.f32 %v691, 0.0
  %v1259 = vmax.f32 %v882, 0.0
  %v1260 = vmax.f32 %v884, 0.0
  %v1261 = vmax.f32 %v1075, 0.0
  %v1262 = vmax.f32 %v1077, 0.0
  %v1263 = vmax.f32 %v502, 0.0
  %v1264 = vmax.f32 %v504, 0.0
  %v1265 = vmax.f32 %v695, 0.0
  %v1266 = vmax.f32 %v697, 0.0
  %v1267 = vmax.f32 %v888, 0.0
  %v1268 = vmax.f32 %v890, 0.0
  %v1269 = vmax.f32 %v1081, 0.0
  %v1270 = vmax.f32 %v1083, 0.0
  %v1271 = vmax.f32 %v506, 0.0
  %v1272 = vmax.f32 %v508, 0.0
  %v1273 = vmax.f32 %v699, 0.0
  %v1274 = vmax.f32 %v701, 0.0
  %v1275 = vmax.f32 %v892, 0.0
  %v1276 = vmax.f32 %v894, 0.0
  %v1277 = vmax.f32 %v1085, 0.0
  %v1278 = vmax.f32 %v1087, 0.0
  %v1279 = vmax.f32 %v512, 0.0
  %v1280 = vmax.f32 %v514, 0.0
  %v1281 = vmax.f32 %v705, 0.0
  %v1282 = vmax.f32 %v707, 0.0
  %v1283 = vmax.f32 %v898, 0.0
  %v1284 = vmax.f32 %v900, 0.0
  %v1285 = vmax.f32 %v1091, 0.0
  %v1286 = vmax.f32 %v1093, 0.0
  %v1287 = vmax.f32 %v516, 0.0
  %v1288 = vmax.f32 %v518, 0.0
  %v1289 = vmax.f32 %v709, 0.0
  %v1290 = vmax.f32 %v711, 0.0
  %v1291 = vmax.f32 %v902, 0.0
  %v1292 = vmax.f32 %v904, 0.0
  %v1293 = vmax.f32 %v1095, 0.0
  %v1294 = vmax.f32 %v1097, 0.0
  %v1295 = vmax.f32 %v522, 0.0
  %v1296 = vmax.f32 %v524, 0.0
  %v1297 = vmax.f32 %v715, 0.0
  %v1298 = vmax.f32 %v717, 0.0
  %v1299 = vmax.f32 %v908, 0.0
  %v1300 = vmax.f32 %v910, 0.0
  %v1301 = vmax.f32 %v1101, 0.0
  %v1302 = vmax.f32 %v1103, 0.0
  %v1303 = vmax.f32 %v526, 0.0
  %v1304 = vmax.f32 %v528, 0.0
  %v1305 = vmax.f32 %v719, 0.0
  %v1306 = vmax.f32 %v721, 0.0
  %v1307 = vmax.f32 %v912, 0.0
  %v1308 = vmax.f32 %v914, 0.0
  %v1309 = vmax.f32 %v1105, 0.0
  %v1310 = vmax.f32 %v1107, 0.0
  %v1311 = vmax.f32 %v532, 0.0
  %v1312 = vmax.f32 %v534, 0.0
  %v1313 = vmax.f32 %v725, 0.0
  %v1314 = vmax.f32 %v727, 0.0
  %v1315 = vmax.f32 %v918, 0.0
  %v1316 = vmax.f32 %v920, 0.0
  %v1317 = vmax.f32 %v1111, 0.0
  %v1318 = vmax.f32 %v1113, 0.0
  %v1319 = vmax.f32 %v536, 0.0
  %v1320 = vmax.f32 %v538, 0.0
  %v1321 = vmax.f32 %v729, 0.0
  %v1322 = vmax.f32 %v731, 0.0
  %v1323 = vmax.f32 %v922, 0.0
  %v1324 = vmax.f32 %v924, 0.0
  %v1325 = vmax.f32 %v1115, 0.0
  %v1326 = vmax.f32 %v1117, 0.0
  %v1327 = vmax.f32 %v542, 0.0
  %v1328 = vmax.f32 %v544, 0.0
  %v1329 = vmax.f32 %v735, 0.0
  %v1330 = vmax.f32 %v737, 0.0
  %v1331 = vmax.f32 %v928, 0.0
  %v1332 = vmax.f32 %v930, 0.0
  %v1333 = vmax.f32 %v1121, 0.0
  %v1334 = vmax.f32 %v1123, 0.0
  %v1335 = vmax.f32 %v546, 0.0
  %v1336 = vmax.f32 %v548, 0.0
  %v1337 = vmax.f32 %v739, 0.0
  %v1338 = vmax.f32 %v741, 0.0
  %v1339 = vmax.f32 %v932, 0.0
  %v1340 = vmax.f32 %v934, 0.0
  %v1341 = vmax.f32 %v1125, 0.0
  %v1342 = vmax.f32 %v1127, 0.0
  %v1343 = vmax.f32 %v552, 0.0
  %v1344 = vmax.f32 %v554, 0.0
  %v1345 = vmax.f32 %v745, 0.0
  %v1346 = vmax.f32 %v747, 0.0
  %v1347 = vmax.f32 %v938, 0.0
  %v1348 = vmax.f32 %v940, 0.0
  %v1349 = vmax.f32 %v1131, 0.0
  %v1350 = vmax.f32 %v1133, 0.0
  %v1351 = vmax.f32 %v556, 0.0
  %v1352 = vmax.f32 %v558, 0.0
  %v1353 = vmax.f32 %v749, 0.0
  %v1354 = vmax.f32 %v751, 0.0
  %v1355 = vmax.f32 %v942, 0.0
  %v1356 = vmax.f32 %v944, 0.0
  %v1357 = vmax.f32 %v1135, 0.0
  %v1358 = vmax.f32 %v1137, 0.0
  %v1359 = vmax.f32 %v562, 0.0
  %v1360 = vmax.f32 %v564, 0.0
  %v1361 = vmax.f32 %v755, 0.0
  %v1362 = vmax.f32 %v757, 0.0
  %v1363 = vmax.f32 %v948, 0.0
  %v1364 = vmax.f32 %v950, 0.0
  %v1365 = vmax.f32 %v1141, 0.0
  %v1366 = vmax.f32 %v1143, 0.0
  %v1367 = vmax.f32 %v566, 0.0
  %v1368 = vmax.f32 %v568, 0.0
  %v1369 = vmax.f32 %v759, 0.0
  %v1370 = vmax.f32 %v761, 0.0
  %v1371 = vmax.f32 %v952, 0.0
  %v1372 = vmax.f32 %v954, 0.0
  %v1373 = vmax.f32 %v1145, 0.0
  %v1374 = vmax.f32 %v1147, 0.0
  %v1375 = vmax.f32 %v572, 0.0
  %v1376 = vmax.f32 %v574, 0.0
  %v1377 = vmax.f32 %v765, 0.0
  %v1378 = vmax.f32 %v767, 0.0
  %v1379 = vmax.f32 %v958, 0.0
  %v1380 = vmax.f32 %v960, 0.0
  %v1381 = vmax.f32 %v1151, 0.0
  %v1382 = vmax.f32 %v1153, 0.0
  %v1383 = vmax.f32 %v576, 0.0
  %v1384 = vmax.f32 %v578, 0.0
  %v1385 = vmax.f32 %v769, 0.0
  %v1386 = vmax.f32 %v771, 0.0
  %v1387 = vmax.f32 %v962, 0.0
  %v1388 = vmax.f32 %v964, 0.0
  %v1389 = vmax.f32 %v1155, 0.0
  %v1390 = vmax.f32 %v1157, 0.0
  %v1391 = vmax.f32 %v582, 0.0
  %v1392 = vmax.f32 %v584, 0.0
  %v1393 = vmax.f32 %v775, 0.0
  %v1394 = vmax.f32 %v777, 0.0
  %v1395 = vmax.f32 %v968, 0.0
  %v1396 = vmax.f32 %v970, 0.0
  %v1397 = vmax.f32 %v1161, 0.0
  %v1398 = vmax.f32 %v1163, 0.0
  %v1399 = vmax.f32 %v586, 0.0
  %v1400 = vmax.f32 %v588, 0.0
  %v1401 = vmax.f32 %v779, 0.0
  %v1402 = vmax.f32 %v781, 0.0
  %v1403 = vmax.f32 %v972, 0.0
  %v1404 = vmax.f32 %v974, 0.0
  %v1405 = vmax.f32 %v1165, 0.0
  %v1406 = vmax.f32 %v1167, 0.0
  %v1407 = vmax.f32 %v592, 0.0
  %v1408 = vmax.f32 %v594, 0.0
  %v1409 = vmax.f32 %v785, 0.0
  %v1410 = vmax.f32 %v787, 0.0
  %v1411 = vmax.f32 %v978, 0.0
  %v1412 = vmax.f32 %v980, 0.0
  %v1413 = vmax.f32 %v1171, 0.0
  %v1414 = vmax.f32 %v1173, 0.0
  %v1415 = vmax.f32 %v596, 0.0
  %v1416 = vmax.f32 %v598, 0.0
  %v1417 = vmax.f32 %v789, 0.0
  %v1418 = vmax.f32 %v791, 0.0
  %v1419 = vmax.f32 %v982, 0.0
  %v1420 = vmax.f32 %v984, 0.0
  %v1421 = vmax.f32 %v1175, 0.0
  %v1422 = vmax.f32 %v1177, 0.0
  %v1423 = vmax.f32 %v602, 0.0
  %v1424 = vmax.f32 %v604, 0.0
  %v1425 = vmax.f32 %v795, 0.0
  %v1426 = vmax.f32 %v797, 0.0
  %v1427 = vmax.f32 %v988, 0.0
  %v1428 = vmax.f32 %v990, 0.0
  %v1429 = vmax.f32 %v1181, 0.0
  %v1430 = vmax.f32 %v1183, 0.0
  %v1431 = vmax.f32 %v606, 0.0
  %v1432 = vmax.f32 %v608, 0.0
  %v1433 = vmax.f32 %v799, 0.0
  %v1434 = vmax.f32 %v801, 0.0
  %v1435 = vmax.f32 %v992, 0.0
  %v1436 = vmax.f32 %v994, 0.0
  %v1437 = vmax.f32 %v1185, 0.0
  %v1438 = vmax.f32 %v1187, 0.0
  %v1439 = vmax.f32 %v612, 0.0
  %v1440 = vmax.f32 %v614, 0.0
  %v1441 = vmax.f32 %v805, 0.0
  %v1442 = vmax.f32 %v807, 0.0
  %v1443 = vmax.f32 %v998, 0.0
  %v1444 = vmax.f32 %v1000, 0.0
  %v1445 = vmax.f32 %v1191, 0.0
  %v1446 = vmax.f32 %v1193, 0.0
  %v1447 = vmax.f32 %v616, 0.0
  %v1448 = vmax.f32 %v618, 0.0
  %v1449 = vmax.f32 %v809, 0.0
  %v1450 = vmax.f32 %v811, 0.0
  %v1451 = vmax.f32 %v1002, 0.0
  %v1452 = vmax.f32 %v1004, 0.0
  %v1453 = vmax.f32 %v1195, 0.0
  %v1454 = vmax.f32 %v1197, 0.0
  %v1455 = vld [vmem:[%s3] sm:$0xff]
  %v1456 = vld [vmem:[%s3 + $0x8] sm:$0xff]
  %v1457 = vld [vmem:[%s3 + $0x10] sm:$0xff]
  %v1458 = vld [vmem:[%s3 + $0x18] sm:$0xff]
  %v1459 = vld [vmem:[%s3 + $0x20] sm:$0xff]
  %v1460 = vld [vmem:[%s3 + $0x28] sm:$0xff]
  %v1461 = vld [vmem:[%s3 + $0x30] sm:$0xff]
  %v1462 = vld [vmem:[%s3 + $0x38] sm:$0xff]
  %v1463 = vld [vmem:[%s3 + $0x40] sm:$0xff]
  %v1464 = vld [vmem:[%s3 + $0x48] sm:$0xff]
  %v1465 = vld [vmem:[%s3 + $0x50] sm:$0xff]
  %v1466 = vld [vmem:[%s3 + $0x58] sm:$0xff]
  %v1467 = vld [vmem:[%s3 + $0x60] sm:$0xff]
  %v1468 = vld [vmem:[%s3 + $0x68] sm:$0xff]
  %v1469 = vld [vmem:[%s3 + $0x70] sm:$0xff]
  %v1470 = vld [vmem:[%s3 + $0x78] sm:$0xff]
  %v1471 = vld [vmem:[%s3 + $0x80] sm:$0xff]
  %v1472 = vld [vmem:[%s3 + $0x88] sm:$0xff]
  %v1473 = vld [vmem:[%s3 + $0x90] sm:$0xff]
  %v1474 = vld [vmem:[%s3 + $0x98] sm:$0xff]
  %v1475 = vld [vmem:[%s3 + $0xa0] sm:$0xff]
  %v1476 = vld [vmem:[%s3 + $0xa8] sm:$0xff]
  %v1477 = vld [vmem:[%s3 + $0xb0] sm:$0xff]
  %v1478 = vld [vmem:[%s3 + $0xb8] sm:$0xff]
  %v1479 = vld [vmem:[%s3 + $0xc0] sm:$0xff]
  %v1480 = vld [vmem:[%s3 + $0xc8] sm:$0xff]
  %v1481 = vld [vmem:[%s3 + $0xd0] sm:$0xff]
  %v1482 = vld [vmem:[%s3 + $0xd8] sm:$0xff]
  %v1483 = vld [vmem:[%s3 + $0xe0] sm:$0xff]
  %v1484 = vld [vmem:[%s3 + $0xe8] sm:$0xff]
  %v1485 = vld [vmem:[%s3 + $0xf0] sm:$0xff]
  %v1486 = vld [vmem:[%s3 + $0xf8] sm:$0xff]
  %v1487 = vpack.c.bf16 %v1207, %v1199
  %v1488 = vpack.c.bf16 %v1208, %v1200
  %v1489 = vpack.c.bf16 %v1209, %v1201
  %v1490 = vpack.c.bf16 %v1210, %v1202
  %v1491 = vpack.c.bf16 %v1211, %v1203
  %v1492 = vpack.c.bf16 %v1212, %v1204
  %v1493 = vpack.c.bf16 %v1213, %v1205
  %v1494 = vpack.c.bf16 %v1214, %v1206
  %v1495 = vpack.c.bf16 %v1223, %v1215
  %v1496 = vpack.c.bf16 %v1224, %v1216
  %v1497 = vpack.c.bf16 %v1225, %v1217
  %v1498 = vpack.c.bf16 %v1226, %v1218
  %v1499 = vpack.c.bf16 %v1227, %v1219
  %v1500 = vpack.c.bf16 %v1228, %v1220
  %v1501 = vpack.c.bf16 %v1229, %v1221
  %v1502 = vpack.c.bf16 %v1230, %v1222
  %v1503 = vpack.c.bf16 %v1239, %v1231
  %v1504 = vpack.c.bf16 %v1240, %v1232
  %v1505 = vpack.c.bf16 %v1241, %v1233
  %v1506 = vpack.c.bf16 %v1242, %v1234
  %v1507 = vpack.c.bf16 %v1243, %v1235
  %v1508 = vpack.c.bf16 %v1244, %v1236
  %v1509 = vpack.c.bf16 %v1245, %v1237
  %v1510 = vpack.c.bf16 %v1246, %v1238
  %v1511 = vpack.c.bf16 %v1255, %v1247
  %v1512 = vpack.c.bf16 %v1256, %v1248
  %v1513 = vpack.c.bf16 %v1257, %v1249
  %v1514 = vpack.c.bf16 %v1258, %v1250
  %v1515 = vpack.c.bf16 %v1259, %v1251
  %v1516 = vpack.c.bf16 %v1260, %v1252
  %v1517 = vpack.c.bf16 %v1261, %v1253
  %v1518 = vpack.c.bf16 %v1262, %v1254
  %v1519 = vpack.c.bf16 %v1271, %v1263
  %v1520 = vpack.c.bf16 %v1272, %v1264
  %v1521 = vpack.c.bf16 %v1273, %v1265
  %v1522 = vpack.c.bf16 %v1274, %v1266
  %v1523 = vpack.c.bf16 %v1275, %v1267
  %v1524 = vpack.c.bf16 %v1276, %v1268
  %v1525 = vpack.c.bf16 %v1277, %v1269
  %v1526 = vpack.c.bf16 %v1278, %v1270
  %v1527 = vpack.c.bf16 %v1287, %v1279
  %v1528 = vpack.c.bf16 %v1288, %v1280
  %v1529 = vpack.c.bf16 %v1289, %v1281
  %v1530 = vpack.c.bf16 %v1290, %v1282
  %v1531 = vpack.c.bf16 %v1291, %v1283
  %v1532 = vpack.c.bf16 %v1292, %v1284
  %v1533 = vpack.c.bf16 %v1293, %v1285
  %v1534 = vpack.c.bf16 %v1294, %v1286
  %v1535 = vpack.c.bf16 %v1303, %v1295
  %v1536 = vpack.c.bf16 %v1304, %v1296
  %v1537 = vpack.c.bf16 %v1305, %v1297
  %v1538 = vpack.c.bf16 %v1306, %v1298
  %v1539 = vpack.c.bf16 %v1307, %v1299
  %v1540 = vpack.c.bf16 %v1308, %v1300
  %v1541 = vpack.c.bf16 %v1309, %v1301
  %v1542 = vpack.c.bf16 %v1310, %v1302
  %v1543 = vpack.c.bf16 %v1319, %v1311
  %v1544 = vpack.c.bf16 %v1320, %v1312
  %v1545 = vpack.c.bf16 %v1321, %v1313
  %v1546 = vpack.c.bf16 %v1322, %v1314
  %v1547 = vpack.c.bf16 %v1323, %v1315
  %v1548 = vpack.c.bf16 %v1324, %v1316
  %v1549 = vpack.c.bf16 %v1325, %v1317
  %v1550 = vpack.c.bf16 %v1326, %v1318
  %v1551 = vpack.c.bf16 %v1335, %v1327
  %v1552 = vpack.c.bf16 %v1336, %v1328
  %v1553 = vpack.c.bf16 %v1337, %v1329
  %v1554 = vpack.c.bf16 %v1338, %v1330
  %v1555 = vpack.c.bf16 %v1339, %v1331
  %v1556 = vpack.c.bf16 %v1340, %v1332
  %v1557 = vpack.c.bf16 %v1341, %v1333
  %v1558 = vpack.c.bf16 %v1342, %v1334
  %v1559 = vpack.c.bf16 %v1351, %v1343
  %v1560 = vpack.c.bf16 %v1352, %v1344
  %v1561 = vpack.c.bf16 %v1353, %v1345
  %v1562 = vpack.c.bf16 %v1354, %v1346
  %v1563 = vpack.c.bf16 %v1355, %v1347
  %v1564 = vpack.c.bf16 %v1356, %v1348
  %v1565 = vpack.c.bf16 %v1357, %v1349
  %v1566 = vpack.c.bf16 %v1358, %v1350
  %v1567 = vpack.c.bf16 %v1367, %v1359
  %v1568 = vpack.c.bf16 %v1368, %v1360
  %v1569 = vpack.c.bf16 %v1369, %v1361
  %v1570 = vpack.c.bf16 %v1370, %v1362
  %v1571 = vpack.c.bf16 %v1371, %v1363
  %v1572 = vpack.c.bf16 %v1372, %v1364
  %v1573 = vpack.c.bf16 %v1373, %v1365
  %v1574 = vpack.c.bf16 %v1374, %v1366
  %v1575 = vpack.c.bf16 %v1383, %v1375
  %v1576 = vpack.c.bf16 %v1384, %v1376
  %v1577 = vpack.c.bf16 %v1385, %v1377
  %v1578 = vpack.c.bf16 %v1386, %v1378
  %v1579 = vpack.c.bf16 %v1387, %v1379
  %v1580 = vpack.c.bf16 %v1388, %v1380
  %v1581 = vpack.c.bf16 %v1389, %v1381
  %v1582 = vpack.c.bf16 %v1390, %v1382
  %v1583 = vpack.c.bf16 %v1399, %v1391
  %v1584 = vpack.c.bf16 %v1400, %v1392
  %v1585 = vpack.c.bf16 %v1401, %v1393
  %v1586 = vpack.c.bf16 %v1402, %v1394
  %v1587 = vpack.c.bf16 %v1403, %v1395
  %v1588 = vpack.c.bf16 %v1404, %v1396
  %v1589 = vpack.c.bf16 %v1405, %v1397
  %v1590 = vpack.c.bf16 %v1406, %v1398
  %v1591 = vpack.c.bf16 %v1415, %v1407
  %v1592 = vpack.c.bf16 %v1416, %v1408
  %v1593 = vpack.c.bf16 %v1417, %v1409
  %v1594 = vpack.c.bf16 %v1418, %v1410
  %v1595 = vpack.c.bf16 %v1419, %v1411
  %v1596 = vpack.c.bf16 %v1420, %v1412
  %v1597 = vpack.c.bf16 %v1421, %v1413
  %v1598 = vpack.c.bf16 %v1422, %v1414
  %v1599 = vpack.c.bf16 %v1431, %v1423
  %v1600 = vpack.c.bf16 %v1432, %v1424
  %v1601 = vpack.c.bf16 %v1433, %v1425
  %v1602 = vpack.c.bf16 %v1434, %v1426
  %v1603 = vpack.c.bf16 %v1435, %v1427
  %v1604 = vpack.c.bf16 %v1436, %v1428
  %v1605 = vpack.c.bf16 %v1437, %v1429
  %v1606 = vpack.c.bf16 %v1438, %v1430
  %v1607 = vpack.c.bf16 %v1447, %v1439
  %v1608 = vpack.c.bf16 %v1448, %v1440
  %v1609 = vpack.c.bf16 %v1449, %v1441
  %v1610 = vpack.c.bf16 %v1450, %v1442
  %v1611 = vpack.c.bf16 %v1451, %v1443
  %v1612 = vpack.c.bf16 %v1452, %v1444
  %v1613 = vpack.c.bf16 %v1453, %v1445
  %v1614 = vpack.c.bf16 %v1454, %v1446
  %v1615 = vld [vmem:[%s4] sm:$0xff]
  %v1616 = vld [vmem:[%s4 + $0x8] sm:$0xff]
  %v1617 = vld [vmem:[%s4 + $0x10] sm:$0xff]
  %v1618 = vld [vmem:[%s4 + $0x18] sm:$0xff]
  %v1619 = vld [vmem:[%s4 + $0x20] sm:$0xff]
  %v1620 = vld [vmem:[%s4 + $0x28] sm:$0xff]
  %v1621 = vld [vmem:[%s4 + $0x30] sm:$0xff]
  %v1622 = vld [vmem:[%s4 + $0x38] sm:$0xff]
  %v1623 = vld [vmem:[%s4 + $0x40] sm:$0xff]
  %v1624 = vld [vmem:[%s4 + $0x48] sm:$0xff]
  %v1625 = vld [vmem:[%s4 + $0x50] sm:$0xff]
  %v1626 = vld [vmem:[%s4 + $0x58] sm:$0xff]
  %v1627 = vld [vmem:[%s4 + $0x60] sm:$0xff]
  %v1628 = vld [vmem:[%s4 + $0x68] sm:$0xff]
  %v1629 = vld [vmem:[%s4 + $0x70] sm:$0xff]
  %v1630 = vld [vmem:[%s4 + $0x78] sm:$0xff]
  %v1631 = vld [vmem:[%s4 + $0x80] sm:$0xff]
  %v1632 = vld [vmem:[%s4 + $0x88] sm:$0xff]
  %v1633 = vld [vmem:[%s4 + $0x90] sm:$0xff]
  %v1634 = vld [vmem:[%s4 + $0x98] sm:$0xff]
  %v1635 = vld [vmem:[%s4 + $0xa0] sm:$0xff]
  %v1636 = vld [vmem:[%s4 + $0xa8] sm:$0xff]
  %v1637 = vld [vmem:[%s4 + $0xb0] sm:$0xff]
  %v1638 = vld [vmem:[%s4 + $0xb8] sm:$0xff]
  %v1639 = vld [vmem:[%s4 + $0xc0] sm:$0xff]
  %v1640 = vld [vmem:[%s4 + $0xc8] sm:$0xff]
  %v1641 = vld [vmem:[%s4 + $0xd0] sm:$0xff]
  %v1642 = vld [vmem:[%s4 + $0xd8] sm:$0xff]
  %v1643 = vld [vmem:[%s4 + $0xe0] sm:$0xff]
  %v1644 = vld [vmem:[%s4 + $0xe8] sm:$0xff]
  %v1645 = vld [vmem:[%s4 + $0xf0] sm:$0xff]
  %v1646 = vld [vmem:[%s4 + $0xf8] sm:$0xff]
  %1648 = vset.pattern.permute.xlu0 0
  %1649 = vperm.xlu0 %1648, %v1615
  %v1650 = vpop.permute.xlu0 %1649
  %1653 = vset.pattern.permute.xlu0 0
  %1654 = vperm.xlu0 %1653, %v1616
  %v1655 = vpop.permute.xlu0 %1654
  %1658 = vset.pattern.permute.xlu0 0
  %1659 = vperm.xlu0 %1658, %v1617
  %v1660 = vpop.permute.xlu0 %1659
  %1663 = vset.pattern.permute.xlu0 0
  %1664 = vperm.xlu0 %1663, %v1618
  %v1665 = vpop.permute.xlu0 %1664
  %1668 = vset.pattern.permute.xlu0 0
  %1669 = vperm.xlu0 %1668, %v1619
  %v1670 = vpop.permute.xlu0 %1669
  %1673 = vset.pattern.permute.xlu0 0
  %1674 = vperm.xlu0 %1673, %v1620
  %v1675 = vpop.permute.xlu0 %1674
  %1678 = vset.pattern.permute.xlu0 0
  %1679 = vperm.xlu0 %1678, %v1621
  %v1680 = vpop.permute.xlu0 %1679
  %1683 = vset.pattern.permute.xlu0 0
  %1684 = vperm.xlu0 %1683, %v1622
  %v1685 = vpop.permute.xlu0 %1684
  %1688 = vset.pattern.permute.xlu0 0
  %1689 = vperm.xlu0 %1688, %v1623
  %v1690 = vpop.permute.xlu0 %1689
  %1693 = vset.pattern.permute.xlu0 0
  %1694 = vperm.xlu0 %1693, %v1624
  %v1695 = vpop.permute.xlu0 %1694
  %1698 = vset.pattern.permute.xlu0 0
  %1699 = vperm.xlu0 %1698, %v1625
  %v1700 = vpop.permute.xlu0 %1699
  %1703 = vset.pattern.permute.xlu0 0
  %1704 = vperm.xlu0 %1703, %v1626
  %v1705 = vpop.permute.xlu0 %1704
  %1708 = vset.pattern.permute.xlu0 0
  %1709 = vperm.xlu0 %1708, %v1627
  %v1710 = vpop.permute.xlu0 %1709
  %1713 = vset.pattern.permute.xlu0 0
  %1714 = vperm.xlu0 %1713, %v1628
  %v1715 = vpop.permute.xlu0 %1714
  %1718 = vset.pattern.permute.xlu0 0
  %1719 = vperm.xlu0 %1718, %v1629
  %v1720 = vpop.permute.xlu0 %1719
  %1723 = vset.pattern.permute.xlu0 0
  %1724 = vperm.xlu0 %1723, %v1630
  %v1725 = vpop.permute.xlu0 %1724
  %1728 = vset.pattern.permute.xlu0 0
  %1729 = vperm.xlu0 %1728, %v1631
  %v1730 = vpop.permute.xlu0 %1729
  %1733 = vset.pattern.permute.xlu0 0
  %1734 = vperm.xlu0 %1733, %v1632
  %v1735 = vpop.permute.xlu0 %1734
  %1738 = vset.pattern.permute.xlu0 0
  %1739 = vperm.xlu0 %1738, %v1633
  %v1740 = vpop.permute.xlu0 %1739
  %1743 = vset.pattern.permute.xlu0 0
  %1744 = vperm.xlu0 %1743, %v1634
  %v1745 = vpop.permute.xlu0 %1744
  %1748 = vset.pattern.permute.xlu0 0
  %1749 = vperm.xlu0 %1748, %v1635
  %v1750 = vpop.permute.xlu0 %1749
  %1753 = vset.pattern.permute.xlu0 0
  %1754 = vperm.xlu0 %1753, %v1636
  %v1755 = vpop.permute.xlu0 %1754
  %1758 = vset.pattern.permute.xlu0 0
  %1759 = vperm.xlu0 %1758, %v1637
  %v1760 = vpop.permute.xlu0 %1759
  %1763 = vset.pattern.permute.xlu0 0
  %1764 = vperm.xlu0 %1763, %v1638
  %v1765 = vpop.permute.xlu0 %1764
  %1768 = vset.pattern.permute.xlu0 0
  %1769 = vperm.xlu0 %1768, %v1639
  %v1770 = vpop.permute.xlu0 %1769
  %1773 = vset.pattern.permute.xlu0 0
  %1774 = vperm.xlu0 %1773, %v1640
  %v1775 = vpop.permute.xlu0 %1774
  %1778 = vset.pattern.permute.xlu0 0
  %1779 = vperm.xlu0 %1778, %v1641
  %v1780 = vpop.permute.xlu0 %1779
  %1783 = vset.pattern.permute.xlu0 0
  %1784 = vperm.xlu0 %1783, %v1642
  %v1785 = vpop.permute.xlu0 %1784
  %1788 = vset.pattern.permute.xlu0 0
  %1789 = vperm.xlu0 %1788, %v1643
  %v1790 = vpop.permute.xlu0 %1789
  %1793 = vset.pattern.permute.xlu0 0
  %1794 = vperm.xlu0 %1793, %v1644
  %v1795 = vpop.permute.xlu0 %1794
  %1798 = vset.pattern.permute.xlu0 0
  %1799 = vperm.xlu0 %1798, %v1645
  %v1800 = vpop.permute.xlu0 %1799
  %1803 = vset.pattern.permute.xlu0 0
  %1804 = vperm.xlu0 %1803, %v1646
  %v1805 = vpop.permute.xlu0 %1804
  %v1839 = vunpack.c.l.b16 %v1455
  %v1840 = vunpack.c.h.b16 %v1455
  %v1841 = vunpack.c.l.b16 %v1456
  %v1842 = vunpack.c.h.b16 %v1456
  %v1843 = vunpack.c.l.b16 %v1457
  %v1844 = vunpack.c.h.b16 %v1457
  %v1845 = vunpack.c.l.b16 %v1458
  %v1846 = vunpack.c.h.b16 %v1458
  %v1847 = vunpack.c.l.b16 %v1459
  %v1848 = vunpack.c.h.b16 %v1459
  %v1849 = vunpack.c.l.b16 %v1460
  %v1850 = vunpack.c.h.b16 %v1460
  %v1851 = vunpack.c.l.b16 %v1461
  %v1852 = vunpack.c.h.b16 %v1461
  %v1853 = vunpack.c.l.b16 %v1462
  %v1854 = vunpack.c.h.b16 %v1462
  %v1855 = vunpack.c.l.b16 %v1463
  %v1856 = vunpack.c.h.b16 %v1463
  %v1857 = vunpack.c.l.b16 %v1464
  %v1858 = vunpack.c.h.b16 %v1464
  %v1859 = vunpack.c.l.b16 %v1465
  %v1860 = vunpack.c.h.b16 %v1465
  %v1861 = vunpack.c.l.b16 %v1466
  %v1862 = vunpack.c.h.b16 %v1466
  %v1863 = vunpack.c.l.b16 %v1467
  %v1864 = vunpack.c.h.b16 %v1467
  %v1865 = vunpack.c.l.b16 %v1468
  %v1866 = vunpack.c.h.b16 %v1468
  %v1867 = vunpack.c.l.b16 %v1469
  %v1868 = vunpack.c.h.b16 %v1469
  %v1869 = vunpack.c.l.b16 %v1470
  %v1870 = vunpack.c.h.b16 %v1470
  %v1871 = vunpack.c.l.b16 %v1471
  %v1872 = vunpack.c.h.b16 %v1471
  %v1873 = vunpack.c.l.b16 %v1472
  %v1874 = vunpack.c.h.b16 %v1472
  %v1875 = vunpack.c.l.b16 %v1473
  %v1876 = vunpack.c.h.b16 %v1473
  %v1877 = vunpack.c.l.b16 %v1474
  %v1878 = vunpack.c.h.b16 %v1474
  %v1879 = vunpack.c.l.b16 %v1475
  %v1880 = vunpack.c.h.b16 %v1475
  %v1881 = vunpack.c.l.b16 %v1476
  %v1882 = vunpack.c.h.b16 %v1476
  %v1883 = vunpack.c.l.b16 %v1477
  %v1884 = vunpack.c.h.b16 %v1477
  %v1885 = vunpack.c.l.b16 %v1478
  %v1886 = vunpack.c.h.b16 %v1478
  %v1887 = vunpack.c.l.b16 %v1479
  %v1888 = vunpack.c.h.b16 %v1479
  %v1889 = vunpack.c.l.b16 %v1480
  %v1890 = vunpack.c.h.b16 %v1480
  %v1891 = vunpack.c.l.b16 %v1481
  %v1892 = vunpack.c.h.b16 %v1481
  %v1893 = vunpack.c.l.b16 %v1482
  %v1894 = vunpack.c.h.b16 %v1482
  %v1895 = vunpack.c.l.b16 %v1483
  %v1896 = vunpack.c.h.b16 %v1483
  %v1897 = vunpack.c.l.b16 %v1484
  %v1898 = vunpack.c.h.b16 %v1484
  %v1899 = vunpack.c.l.b16 %v1485
  %v1900 = vunpack.c.h.b16 %v1485
  %v1901 = vunpack.c.l.b16 %v1486
  %v1902 = vunpack.c.h.b16 %v1486
  %v1903 = vpack.c.b16 %v1841, %v1839
  %v1904 = vpack.c.b16 %v1842, %v1840
  %v1905 = vpack.c.b16 %v1845, %v1843
  %v1906 = vpack.c.b16 %v1846, %v1844
  %v1907 = vpack.c.b16 %v1849, %v1847
  %v1908 = vpack.c.b16 %v1850, %v1848
  %v1909 = vpack.c.b16 %v1853, %v1851
  %v1910 = vpack.c.b16 %v1854, %v1852
  %v1911 = vpack.c.b16 %v1857, %v1855
  %v1912 = vpack.c.b16 %v1858, %v1856
  %v1913 = vpack.c.b16 %v1861, %v1859
  %v1914 = vpack.c.b16 %v1862, %v1860
  %v1915 = vpack.c.b16 %v1865, %v1863
  %v1916 = vpack.c.b16 %v1866, %v1864
  %v1917 = vpack.c.b16 %v1869, %v1867
  %v1918 = vpack.c.b16 %v1870, %v1868
  %v1919 = vpack.c.b16 %v1873, %v1871
  %v1920 = vpack.c.b16 %v1874, %v1872
  %v1921 = vpack.c.b16 %v1877, %v1875
  %v1922 = vpack.c.b16 %v1878, %v1876
  %v1923 = vpack.c.b16 %v1881, %v1879
  %v1924 = vpack.c.b16 %v1882, %v1880
  %v1925 = vpack.c.b16 %v1885, %v1883
  %v1926 = vpack.c.b16 %v1886, %v1884
  %v1927 = vpack.c.b16 %v1889, %v1887
  %v1928 = vpack.c.b16 %v1890, %v1888
  %v1929 = vpack.c.b16 %v1893, %v1891
  %v1930 = vpack.c.b16 %v1894, %v1892
  %v1931 = vpack.c.b16 %v1897, %v1895
  %v1932 = vpack.c.b16 %v1898, %v1896
  %v1933 = vpack.c.b16 %v1901, %v1899
  %v1934 = vpack.c.b16 %v1902, %v1900
  %1967 = vmatprep.subr.bf16.mxu0 %v1488
  %1968 = vmatpush1.bf16.msra.mxu0 %v1487
  %1969 = vmatprep.subr.bf16.mxu0 %v1496
  %1970 = vmatpush1.bf16.msra.mxu0 %v1495
  %1971 = vmatprep.subr.bf16.mxu0 %v1504
  %1972 = vmatpush1.bf16.msra.mxu0 %v1503
  %1973 = vmatprep.subr.bf16.mxu0 %v1512
  %1974 = vmatpush1.bf16.msra.mxu0 %v1511
  %1975 = vmatprep.subr.bf16.mxu0 %v1520
  %1976 = vmatpush1.bf16.msra.mxu0 %v1519
  %1977 = vmatprep.subr.bf16.mxu0 %v1528
  %1978 = vmatpush1.bf16.msra.mxu0 %v1527
  %1979 = vmatprep.subr.bf16.mxu0 %v1536
  %1980 = vmatpush1.bf16.msra.mxu0 %v1535
  %1981 = vmatprep.subr.bf16.mxu0 %v1544
  %1982 = vmatpush1.bf16.msra.mxu0 %v1543
  %1983 = vmatprep.subr.bf16.mxu0 %v1552
  %1984 = vmatpush1.bf16.msra.mxu0 %v1551
  %1985 = vmatprep.subr.bf16.mxu0 %v1560
  %1986 = vmatpush1.bf16.msra.mxu0 %v1559
  %1987 = vmatprep.subr.bf16.mxu0 %v1568
  %1988 = vmatpush1.bf16.msra.mxu0 %v1567
  %1989 = vmatprep.subr.bf16.mxu0 %v1576
  %1990 = vmatpush1.bf16.msra.mxu0 %v1575
  %1991 = vmatprep.subr.bf16.mxu0 %v1584
  %1992 = vmatpush1.bf16.msra.mxu0 %v1583
  %1993 = vmatprep.subr.bf16.mxu0 %v1592
  %1994 = vmatpush1.bf16.msra.mxu0 %v1591
  %1995 = vmatprep.subr.bf16.mxu0 %v1600
  %1996 = vmatpush1.bf16.msra.mxu0 %v1599
  %1997 = vmatprep.subr.bf16.mxu0 %v1608
  %1998 = vmatpush1.bf16.msra.mxu0 %v1607
  %1999 = vmatprep.mubr.bf16.mxu0 %v1904
  %2000 = vmatmul.mubr.bf16.gmra.mrb[0].mxu0 %v1903
  %v2001 = vpop.f32.mrb[0].mxu0
  %v2002 = vadd.f32 %v1650, %v2001
  %v2003 = vpop.f32.mrb[0].mxu0
  %v2004 = vadd.f32 %v1650, %v2003
  %v2005 = vpop.f32.mrb[0].mxu0
  %v2006 = vadd.f32 %v1655, %v2005
  %v2007 = vpop.f32.mrb[0].mxu0
  %v2008 = vadd.f32 %v1655, %v2007
  %2009 = vmatprep.mubr.bf16.mxu0 %v1906
  %2010 = vmatmul.mubr.bf16.gmra.mrb[0].mxu0 %v1905
  %v2011 = vpop.f32.mrb[0].mxu0
  %v2012 = vadd.f32 %v1660, %v2011
  %v2013 = vpop.f32.mrb[0].mxu0
  %v2014 = vadd.f32 %v1660, %v2013
  %v2015 = vpop.f32.mrb[0].mxu0
  %v2016 = vadd.f32 %v1665, %v2015
  %v2017 = vpop.f32.mrb[0].mxu0
  %v2018 = vadd.f32 %v1665, %v2017
  %2019 = vmatprep.mubr.bf16.mxu0 %v1908
  %2020 = vmatmul.mubr.bf16.gmra.mrb[0].mxu0 %v1907
  %v2021 = vpop.f32.mrb[0].mxu0
  %v2022 = vadd.f32 %v1670, %v2021
  %v2023 = vpop.f32.mrb[0].mxu0
  %v2024 = vadd.f32 %v1670, %v2023
  %v2025 = vpop.f32.mrb[0].mxu0
  %v2026 = vadd.f32 %v1675, %v2025
  %v2027 = vpop.f32.mrb[0].mxu0
  %v2028 = vadd.f32 %v1675, %v2027
  %2029 = vmatprep.mubr.bf16.mxu0 %v1910
  %2030 = vmatmul.mubr.bf16.gmra.mrb[0].mxu0 %v1909
  %v2031 = vpop.f32.mrb[0].mxu0
  %v2032 = vadd.f32 %v1680, %v2031
  %v2033 = vpop.f32.mrb[0].mxu0
  %v2034 = vadd.f32 %v1680, %v2033
  %v2035 = vpop.f32.mrb[0].mxu0
  %v2036 = vadd.f32 %v1685, %v2035
  %v2037 = vpop.f32.mrb[0].mxu0
  %v2038 = vadd.f32 %v1685, %v2037
  %2039 = vmatprep.mubr.bf16.mxu0 %v1912
  %2040 = vmatmul.mubr.bf16.gmra.mrb[0].mxu0 %v1911
  %v2041 = vpop.f32.mrb[0].mxu0
  %v2042 = vadd.f32 %v1690, %v2041
  %v2043 = vpop.f32.mrb[0].mxu0
  %v2044 = vadd.f32 %v1690, %v2043
  %v2045 = vpop.f32.mrb[0].mxu0
  %v2046 = vadd.f32 %v1695, %v2045
  %v2047 = vpop.f32.mrb[0].mxu0
  %v2048 = vadd.f32 %v1695, %v2047
  %2049 = vmatprep.mubr.bf16.mxu0 %v1914
  %2050 = vmatmul.mubr.bf16.gmra.mrb[0].mxu0 %v1913
  %v2051 = vpop.f32.mrb[0].mxu0
  %v2052 = vadd.f32 %v1700, %v2051
  %v2053 = vpop.f32.mrb[0].mxu0
  %v2054 = vadd.f32 %v1700, %v2053
  %v2055 = vpop.f32.mrb[0].mxu0
  %v2056 = vadd.f32 %v1705, %v2055
  %v2057 = vpop.f32.mrb[0].mxu0
  %v2058 = vadd.f32 %v1705, %v2057
  %2059 = vmatprep.mubr.bf16.mxu0 %v1916
  %2060 = vmatmul.mubr.bf16.gmra.mrb[0].mxu0 %v1915
  %v2061 = vpop.f32.mrb[0].mxu0
  %v2062 = vadd.f32 %v1710, %v2061
  %v2063 = vpop.f32.mrb[0].mxu0
  %v2064 = vadd.f32 %v1710, %v2063
  %v2065 = vpop.f32.mrb[0].mxu0
  %v2066 = vadd.f32 %v1715, %v2065
  %v2067 = vpop.f32.mrb[0].mxu0
  %v2068 = vadd.f32 %v1715, %v2067
  %2069 = vmatprep.mubr.bf16.mxu0 %v1918
  %2070 = vmatmul.mubr.bf16.gmra.mrb[0].mxu0 %v1917
  %v2071 = vpop.f32.mrb[0].mxu0
  %v2072 = vadd.f32 %v1720, %v2071
  %v2073 = vpop.f32.mrb[0].mxu0
  %v2074 = vadd.f32 %v1720, %v2073
  %v2075 = vpop.f32.mrb[0].mxu0
  %v2076 = vadd.f32 %v1725, %v2075
  %v2077 = vpop.f32.mrb[0].mxu0
  %v2078 = vadd.f32 %v1725, %v2077
  %2079 = vmatprep.mubr.bf16.mxu0 %v1920
  %2080 = vmatmul.mubr.bf16.gmra.mrb[0].mxu0 %v1919
  %v2081 = vpop.f32.mrb[0].mxu0
  %v2082 = vadd.f32 %v1730, %v2081
  %v2083 = vpop.f32.mrb[0].mxu0
  %v2084 = vadd.f32 %v1730, %v2083
  %v2085 = vpop.f32.mrb[0].mxu0
  %v2086 = vadd.f32 %v1735, %v2085
  %v2087 = vpop.f32.mrb[0].mxu0
  %v2088 = vadd.f32 %v1735, %v2087
  %2089 = vmatprep.mubr.bf16.mxu0 %v1922
  %2090 = vmatmul.mubr.bf16.gmra.mrb[0].mxu0 %v1921
  %v2091 = vpop.f32.mrb[0].mxu0
  %v2092 = vadd.f32 %v1740, %v2091
  %v2093 = vpop.f32.mrb[0].mxu0
  %v2094 = vadd.f32 %v1740, %v2093
  %v2095 = vpop.f32.mrb[0].mxu0
  %v2096 = vadd.f32 %v1745, %v2095
  %v2097 = vpop.f32.mrb[0].mxu0
  %v2098 = vadd.f32 %v1745, %v2097
  %2099 = vmatprep.mubr.bf16.mxu0 %v1924
  %2100 = vmatmul.mubr.bf16.gmra.mrb[0].mxu0 %v1923
  %v2101 = vpop.f32.mrb[0].mxu0
  %v2102 = vadd.f32 %v1750, %v2101
  %v2103 = vpop.f32.mrb[0].mxu0
  %v2104 = vadd.f32 %v1750, %v2103
  %v2105 = vpop.f32.mrb[0].mxu0
  %v2106 = vadd.f32 %v1755, %v2105
  %v2107 = vpop.f32.mrb[0].mxu0
  %v2108 = vadd.f32 %v1755, %v2107
  %2109 = vmatprep.mubr.bf16.mxu0 %v1926
  %2110 = vmatmul.mubr.bf16.gmra.mrb[0].mxu0 %v1925
  %v2111 = vpop.f32.mrb[0].mxu0
  %v2112 = vadd.f32 %v1760, %v2111
  %v2113 = vpop.f32.mrb[0].mxu0
  %v2114 = vadd.f32 %v1760, %v2113
  %v2115 = vpop.f32.mrb[0].mxu0
  %v2116 = vadd.f32 %v1765, %v2115
  %v2117 = vpop.f32.mrb[0].mxu0
  %v2118 = vadd.f32 %v1765, %v2117
  %2119 = vmatprep.mubr.bf16.mxu0 %v1928
  %2120 = vmatmul.mubr.bf16.gmra.mrb[0].mxu0 %v1927
  %v2121 = vpop.f32.mrb[0].mxu0
  %v2122 = vadd.f32 %v1770, %v2121
  %v2123 = vpop.f32.mrb[0].mxu0
  %v2124 = vadd.f32 %v1770, %v2123
  %v2125 = vpop.f32.mrb[0].mxu0
  %v2126 = vadd.f32 %v1775, %v2125
  %v2127 = vpop.f32.mrb[0].mxu0
  %v2128 = vadd.f32 %v1775, %v2127
  %2129 = vmatprep.mubr.bf16.mxu0 %v1930
  %2130 = vmatmul.mubr.bf16.gmra.mrb[0].mxu0 %v1929
  %v2131 = vpop.f32.mrb[0].mxu0
  %v2132 = vadd.f32 %v1780, %v2131
  %v2133 = vpop.f32.mrb[0].mxu0
  %v2134 = vadd.f32 %v1780, %v2133
  %v2135 = vpop.f32.mrb[0].mxu0
  %v2136 = vadd.f32 %v1785, %v2135
  %v2137 = vpop.f32.mrb[0].mxu0
  %v2138 = vadd.f32 %v1785, %v2137
  %2139 = vmatprep.mubr.bf16.mxu0 %v1932
  %2140 = vmatmul.mubr.bf16.gmra.mrb[0].mxu0 %v1931
  %v2141 = vpop.f32.mrb[0].mxu0
  %v2142 = vadd.f32 %v1790, %v2141
  %v2143 = vpop.f32.mrb[0].mxu0
  %v2144 = vadd.f32 %v1790, %v2143
  %v2145 = vpop.f32.mrb[0].mxu0
  %v2146 = vadd.f32 %v1795, %v2145
  %v2147 = vpop.f32.mrb[0].mxu0
  %v2148 = vadd.f32 %v1795, %v2147
  %2149 = vmatprep.mubr.bf16.mxu0 %v1934
  %2150 = vmatmul.mubr.bf16.gmra.mrb[0].mxu0 %v1933
  %v2151 = vpop.f32.mrb[0].mxu0
  %v2152 = vadd.f32 %v1800, %v2151
  %v2153 = vpop.f32.mrb[0].mxu0
  %v2154 = vadd.f32 %v1800, %v2153
  %v2155 = vpop.f32.mrb[0].mxu0
  %v2156 = vadd.f32 %v1805, %v2155
  %v2157 = vpop.f32.mrb[0].mxu0
  %v2158 = vadd.f32 %v1805, %v2157
  %2159 = vdwg.mxu0
  %2160 = vmatprep.subr.bf16.mxu0 %v1490
  %2161 = vmatpush1.bf16.msra.mxu0 %v1489
  %2162 = vmatprep.subr.bf16.mxu0 %v1498
  %2163 = vmatpush1.bf16.msra.mxu0 %v1497
  %2164 = vmatprep.subr.bf16.mxu0 %v1506
  %2165 = vmatpush1.bf16.msra.mxu0 %v1505
  %2166 = vmatprep.subr.bf16.mxu0 %v1514
  %2167 = vmatpush1.bf16.msra.mxu0 %v1513
  %2168 = vmatprep.subr.bf16.mxu0 %v1522
  %2169 = vmatpush1.bf16.msra.mxu0 %v1521
  %2170 = vmatprep.subr.bf16.mxu0 %v1530
  %2171 = vmatpush1.bf16.msra.mxu0 %v1529
  %2172 = vmatprep.subr.bf16.mxu0 %v1538
  %2173 = vmatpush1.bf16.msra.mxu0 %v1537
  %2174 = vmatprep.subr.bf16.mxu0 %v1546
  %2175 = vmatpush1.bf16.msra.mxu0 %v1545
  %2176 = vmatprep.subr.bf16.mxu0 %v1554
  %2177 = vmatpush1.bf16.msra.mxu0 %v1553
  %2178 = vmatprep.subr.bf16.mxu0 %v1562
  %2179 = vmatpush1.bf16.msra.mxu0 %v1561
  %2180 = vmatprep.subr.bf16.mxu0 %v1570
  %2181 = vmatpush1.bf16.msra.mxu0 %v1569
  %2182 = vmatprep.subr.bf16.mxu0 %v1578
  %2183 = vmatpush1.bf16.msra.mxu0 %v1577
  %2184 = vmatprep.subr.bf16.mxu0 %v1586
  %2185 = vmatpush1.bf16.msra.mxu0 %v1585
  %2186 = vmatprep.subr.bf16.mxu0 %v1594
  %2187 = vmatpush1.bf16.msra.mxu0 %v1593
  %2188 = vmatprep.subr.bf16.mxu0 %v1602
  %2189 = vmatpush1.bf16.msra.mxu0 %v1601
  %2190 = vmatprep.subr.bf16.mxu0 %v1610
  %2191 = vmatpush1.bf16.msra.mxu0 %v1609
  %2192 = vmatprep.mubr.bf16.mxu0 %v1904
  %2193 = vmatmul.mubr.bf16.gmra.mrb[0].mxu0 %v1903
  %v2194 = vpop.f32.mrb[0].mxu0
  %v2195 = vadd.f32 %v1650, %v2194
  %v2196 = vpop.f32.mrb[0].mxu0
  %v2197 = vadd.f32 %v1650, %v2196
  %v2198 = vpop.f32.mrb[0].mxu0
  %v2199 = vadd.f32 %v1655, %v2198
  %v2200 = vpop.f32.mrb[0].mxu0
  %v2201 = vadd.f32 %v1655, %v2200
  %2202 = vmatprep.mubr.bf16.mxu0 %v1906
  %2203 = vmatmul.mubr.bf16.gmra.mrb[0].mxu0 %v1905
  %v2204 = vpop.f32.mrb[0].mxu0
  %v2205 = vadd.f32 %v1660, %v2204
  %v2206 = vpop.f32.mrb[0].mxu0
  %v2207 = vadd.f32 %v1660, %v2206
  %v2208 = vpop.f32.mrb[0].mxu0
  %v2209 = vadd.f32 %v1665, %v2208
  %v2210 = vpop.f32.mrb[0].mxu0
  %v2211 = vadd.f32 %v1665, %v2210
  %2212 = vmatprep.mubr.bf16.mxu0 %v1908
  %2213 = vmatmul.mubr.bf16.gmra.mrb[0].mxu0 %v1907
  %v2214 = vpop.f32.mrb[0].mxu0
  %v2215 = vadd.f32 %v1670, %v2214
  %v2216 = vpop.f32.mrb[0].mxu0
  %v2217 = vadd.f32 %v1670, %v2216
  %v2218 = vpop.f32.mrb[0].mxu0
  %v2219 = vadd.f32 %v1675, %v2218
  %v2220 = vpop.f32.mrb[0].mxu0
  %v2221 = vadd.f32 %v1675, %v2220
  %2222 = vmatprep.mubr.bf16.mxu0 %v1910
  %2223 = vmatmul.mubr.bf16.gmra.mrb[0].mxu0 %v1909
  %v2224 = vpop.f32.mrb[0].mxu0
  %v2225 = vadd.f32 %v1680, %v2224
  %v2226 = vpop.f32.mrb[0].mxu0
  %v2227 = vadd.f32 %v1680, %v2226
  %v2228 = vpop.f32.mrb[0].mxu0
  %v2229 = vadd.f32 %v1685, %v2228
  %v2230 = vpop.f32.mrb[0].mxu0
  %v2231 = vadd.f32 %v1685, %v2230
  %2232 = vmatprep.mubr.bf16.mxu0 %v1912
  %2233 = vmatmul.mubr.bf16.gmra.mrb[0].mxu0 %v1911
  %v2234 = vpop.f32.mrb[0].mxu0
  %v2235 = vadd.f32 %v1690, %v2234
  %v2236 = vpop.f32.mrb[0].mxu0
  %v2237 = vadd.f32 %v1690, %v2236
  %v2238 = vpop.f32.mrb[0].mxu0
  %v2239 = vadd.f32 %v1695, %v2238
  %v2240 = vpop.f32.mrb[0].mxu0
  %v2241 = vadd.f32 %v1695, %v2240
  %2242 = vmatprep.mubr.bf16.mxu0 %v1914
  %2243 = vmatmul.mubr.bf16.gmra.mrb[0].mxu0 %v1913
  %v2244 = vpop.f32.mrb[0].mxu0
  %v2245 = vadd.f32 %v1700, %v2244
  %v2246 = vpop.f32.mrb[0].mxu0
  %v2247 = vadd.f32 %v1700, %v2246
  %v2248 = vpop.f32.mrb[0].mxu0
  %v2249 = vadd.f32 %v1705, %v2248
  %v2250 = vpop.f32.mrb[0].mxu0
  %v2251 = vadd.f32 %v1705, %v2250
  %2252 = vmatprep.mubr.bf16.mxu0 %v1916
  %2253 = vmatmul.mubr.bf16.gmra.mrb[0].mxu0 %v1915
  %v2254 = vpop.f32.mrb[0].mxu0
  %v2255 = vadd.f32 %v1710, %v2254
  %v2256 = vpop.f32.mrb[0].mxu0
  %v2257 = vadd.f32 %v1710, %v2256
  %v2258 = vpop.f32.mrb[0].mxu0
  %v2259 = vadd.f32 %v1715, %v2258
  %v2260 = vpop.f32.mrb[0].mxu0
  %v2261 = vadd.f32 %v1715, %v2260
  %2262 = vmatprep.mubr.bf16.mxu0 %v1918
  %2263 = vmatmul.mubr.bf16.gmra.mrb[0].mxu0 %v1917
  %v2264 = vpop.f32.mrb[0].mxu0
  %v2265 = vadd.f32 %v1720, %v2264
  %v2266 = vpop.f32.mrb[0].mxu0
  %v2267 = vadd.f32 %v1720, %v2266
  %v2268 = vpop.f32.mrb[0].mxu0
  %v2269 = vadd.f32 %v1725, %v2268
  %v2270 = vpop.f32.mrb[0].mxu0
  %v2271 = vadd.f32 %v1725, %v2270
  %2272 = vmatprep.mubr.bf16.mxu0 %v1920
  %2273 = vmatmul.mubr.bf16.gmra.mrb[0].mxu0 %v1919
  %v2274 = vpop.f32.mrb[0].mxu0
  %v2275 = vadd.f32 %v1730, %v2274
  %v2276 = vpop.f32.mrb[0].mxu0
  %v2277 = vadd.f32 %v1730, %v2276
  %v2278 = vpop.f32.mrb[0].mxu0
  %v2279 = vadd.f32 %v1735, %v2278
  %v2280 = vpop.f32.mrb[0].mxu0
  %v2281 = vadd.f32 %v1735, %v2280
  %2282 = vmatprep.mubr.bf16.mxu0 %v1922
  %2283 = vmatmul.mubr.bf16.gmra.mrb[0].mxu0 %v1921
  %v2284 = vpop.f32.mrb[0].mxu0
  %v2285 = vadd.f32 %v1740, %v2284
  %v2286 = vpop.f32.mrb[0].mxu0
  %v2287 = vadd.f32 %v1740, %v2286
  %v2288 = vpop.f32.mrb[0].mxu0
  %v2289 = vadd.f32 %v1745, %v2288
  %v2290 = vpop.f32.mrb[0].mxu0
  %v2291 = vadd.f32 %v1745, %v2290
  %2292 = vmatprep.mubr.bf16.mxu0 %v1924
  %2293 = vmatmul.mubr.bf16.gmra.mrb[0].mxu0 %v1923
  %v2294 = vpop.f32.mrb[0].mxu0
  %v2295 = vadd.f32 %v1750, %v2294
  %v2296 = vpop.f32.mrb[0].mxu0
  %v2297 = vadd.f32 %v1750, %v2296
  %v2298 = vpop.f32.mrb[0].mxu0
  %v2299 = vadd.f32 %v1755, %v2298
  %v2300 = vpop.f32.mrb[0].mxu0
  %v2301 = vadd.f32 %v1755, %v2300
  %2302 = vmatprep.mubr.bf16.mxu0 %v1926
  %2303 = vmatmul.mubr.bf16.gmra.mrb[0].mxu0 %v1925
  %v2304 = vpop.f32.mrb[0].mxu0
  %v2305 = vadd.f32 %v1760, %v2304
  %v2306 = vpop.f32.mrb[0].mxu0
  %v2307 = vadd.f32 %v1760, %v2306
  %v2308 = vpop.f32.mrb[0].mxu0
  %v2309 = vadd.f32 %v1765, %v2308
  %v2310 = vpop.f32.mrb[0].mxu0
  %v2311 = vadd.f32 %v1765, %v2310
  %2312 = vmatprep.mubr.bf16.mxu0 %v1928
  %2313 = vmatmul.mubr.bf16.gmra.mrb[0].mxu0 %v1927
  %v2314 = vpop.f32.mrb[0].mxu0
  %v2315 = vadd.f32 %v1770, %v2314
  %v2316 = vpop.f32.mrb[0].mxu0
  %v2317 = vadd.f32 %v1770, %v2316
  %v2318 = vpop.f32.mrb[0].mxu0
  %v2319 = vadd.f32 %v1775, %v2318
  %v2320 = vpop.f32.mrb[0].mxu0
  %v2321 = vadd.f32 %v1775, %v2320
  %2322 = vmatprep.mubr.bf16.mxu0 %v1930
  %2323 = vmatmul.mubr.bf16.gmra.mrb[0].mxu0 %v1929
  %v2324 = vpop.f32.mrb[0].mxu0
  %v2325 = vadd.f32 %v1780, %v2324
  %v2326 = vpop.f32.mrb[0].mxu0
  %v2327 = vadd.f32 %v1780, %v2326
  %v2328 = vpop.f32.mrb[0].mxu0
  %v2329 = vadd.f32 %v1785, %v2328
  %v2330 = vpop.f32.mrb[0].mxu0
  %v2331 = vadd.f32 %v1785, %v2330
  %2332 = vmatprep.mubr.bf16.mxu0 %v1932
  %2333 = vmatmul.mubr.bf16.gmra.mrb[0].mxu0 %v1931
  %v2334 = vpop.f32.mrb[0].mxu0
  %v2335 = vadd.f32 %v1790, %v2334
  %v2336 = vpop.f32.mrb[0].mxu0
  %v2337 = vadd.f32 %v1790, %v2336
  %v2338 = vpop.f32.mrb[0].mxu0
  %v2339 = vadd.f32 %v1795, %v2338
  %v2340 = vpop.f32.mrb[0].mxu0
  %v2341 = vadd.f32 %v1795, %v2340
  %2342 = vmatprep.mubr.bf16.mxu0 %v1934
  %2343 = vmatmul.mubr.bf16.gmra.mrb[0].mxu0 %v1933
  %v2344 = vpop.f32.mrb[0].mxu0
  %v2345 = vadd.f32 %v1800, %v2344
  %v2346 = vpop.f32.mrb[0].mxu0
  %v2347 = vadd.f32 %v1800, %v2346
  %v2348 = vpop.f32.mrb[0].mxu0
  %v2349 = vadd.f32 %v1805, %v2348
  %v2350 = vpop.f32.mrb[0].mxu0
  %v2351 = vadd.f32 %v1805, %v2350
  %2352 = vdwg.mxu0
  %2353 = vmatprep.subr.bf16.mxu0 %v1492
  %2354 = vmatpush1.bf16.msra.mxu0 %v1491
  %2355 = vmatprep.subr.bf16.mxu0 %v1500
  %2356 = vmatpush1.bf16.msra.mxu0 %v1499
  %2357 = vmatprep.subr.bf16.mxu0 %v1508
  %2358 = vmatpush1.bf16.msra.mxu0 %v1507
  %2359 = vmatprep.subr.bf16.mxu0 %v1516
  %2360 = vmatpush1.bf16.msra.mxu0 %v1515
  %2361 = vmatprep.subr.bf16.mxu0 %v1524
  %2362 = vmatpush1.bf16.msra.mxu0 %v1523
  %2363 = vmatprep.subr.bf16.mxu0 %v1532
  %2364 = vmatpush1.bf16.msra.mxu0 %v1531
  %2365 = vmatprep.subr.bf16.mxu0 %v1540
  %2366 = vmatpush1.bf16.msra.mxu0 %v1539
  %2367 = vmatprep.subr.bf16.mxu0 %v1548
  %2368 = vmatpush1.bf16.msra.mxu0 %v1547
  %2369 = vmatprep.subr.bf16.mxu0 %v1556
  %2370 = vmatpush1.bf16.msra.mxu0 %v1555
  %2371 = vmatprep.subr.bf16.mxu0 %v1564
  %2372 = vmatpush1.bf16.msra.mxu0 %v1563
  %2373 = vmatprep.subr.bf16.mxu0 %v1572
  %2374 = vmatpush1.bf16.msra.mxu0 %v1571
  %2375 = vmatprep.subr.bf16.mxu0 %v1580
  %2376 = vmatpush1.bf16.msra.mxu0 %v1579
  %2377 = vmatprep.subr.bf16.mxu0 %v1588
  %2378 = vmatpush1.bf16.msra.mxu0 %v1587
  %2379 = vmatprep.subr.bf16.mxu0 %v1596
  %2380 = vmatpush1.bf16.msra.mxu0 %v1595
  %2381 = vmatprep.subr.bf16.mxu0 %v1604
  %2382 = vmatpush1.bf16.msra.mxu0 %v1603
  %2383 = vmatprep.subr.bf16.mxu0 %v1612
  %2384 = vmatpush1.bf16.msra.mxu0 %v1611
  %2385 = vmatprep.mubr.bf16.mxu0 %v1904
  %2386 = vmatmul.mubr.bf16.gmra.mrb[0].mxu0 %v1903
  %v2387 = vpop.f32.mrb[0].mxu0
  %v2388 = vadd.f32 %v1650, %v2387
  %v2389 = vpop.f32.mrb[0].mxu0
  %v2390 = vadd.f32 %v1650, %v2389
  %v2391 = vpop.f32.mrb[0].mxu0
  %v2392 = vadd.f32 %v1655, %v2391
  %v2393 = vpop.f32.mrb[0].mxu0
  %v2394 = vadd.f32 %v1655, %v2393
  %2395 = vmatprep.mubr.bf16.mxu0 %v1906
  %2396 = vmatmul.mubr.bf16.gmra.mrb[0].mxu0 %v1905
  %v2397 = vpop.f32.mrb[0].mxu0
  %v2398 = vadd.f32 %v1660, %v2397
  %v2399 = vpop.f32.mrb[0].mxu0
  %v2400 = vadd.f32 %v1660, %v2399
  %v2401 = vpop.f32.mrb[0].mxu0
  %v2402 = vadd.f32 %v1665, %v2401
  %v2403 = vpop.f32.mrb[0].mxu0
  %v2404 = vadd.f32 %v1665, %v2403
  %2405 = vmatprep.mubr.bf16.mxu0 %v1908
  %2406 = vmatmul.mubr.bf16.gmra.mrb[0].mxu0 %v1907
  %v2407 = vpop.f32.mrb[0].mxu0
  %v2408 = vadd.f32 %v1670, %v2407
  %v2409 = vpop.f32.mrb[0].mxu0
  %v2410 = vadd.f32 %v1670, %v2409
  %v2411 = vpop.f32.mrb[0].mxu0
  %v2412 = vadd.f32 %v1675, %v2411
  %v2413 = vpop.f32.mrb[0].mxu0
  %v2414 = vadd.f32 %v1675, %v2413
  %2415 = vmatprep.mubr.bf16.mxu0 %v1910
  %2416 = vmatmul.mubr.bf16.gmra.mrb[0].mxu0 %v1909
  %v2417 = vpop.f32.mrb[0].mxu0
  %v2418 = vadd.f32 %v1680, %v2417
  %v2419 = vpop.f32.mrb[0].mxu0
  %v2420 = vadd.f32 %v1680, %v2419
  %v2421 = vpop.f32.mrb[0].mxu0
  %v2422 = vadd.f32 %v1685, %v2421
  %v2423 = vpop.f32.mrb[0].mxu0
  %v2424 = vadd.f32 %v1685, %v2423
  %2425 = vmatprep.mubr.bf16.mxu0 %v1912
  %2426 = vmatmul.mubr.bf16.gmra.mrb[0].mxu0 %v1911
  %v2427 = vpop.f32.mrb[0].mxu0
  %v2428 = vadd.f32 %v1690, %v2427
  %v2429 = vpop.f32.mrb[0].mxu0
  %v2430 = vadd.f32 %v1690, %v2429
  %v2431 = vpop.f32.mrb[0].mxu0
  %v2432 = vadd.f32 %v1695, %v2431
  %v2433 = vpop.f32.mrb[0].mxu0
  %v2434 = vadd.f32 %v1695, %v2433
  %2435 = vmatprep.mubr.bf16.mxu0 %v1914
  %2436 = vmatmul.mubr.bf16.gmra.mrb[0].mxu0 %v1913
  %v2437 = vpop.f32.mrb[0].mxu0
  %v2438 = vadd.f32 %v1700, %v2437
  %v2439 = vpop.f32.mrb[0].mxu0
  %v2440 = vadd.f32 %v1700, %v2439
  %v2441 = vpop.f32.mrb[0].mxu0
  %v2442 = vadd.f32 %v1705, %v2441
  %v2443 = vpop.f32.mrb[0].mxu0
  %v2444 = vadd.f32 %v1705, %v2443
  %2445 = vmatprep.mubr.bf16.mxu0 %v1916
  %2446 = vmatmul.mubr.bf16.gmra.mrb[0].mxu0 %v1915
  %v2447 = vpop.f32.mrb[0].mxu0
  %v2448 = vadd.f32 %v1710, %v2447
  %v2449 = vpop.f32.mrb[0].mxu0
  %v2450 = vadd.f32 %v1710, %v2449
  %v2451 = vpop.f32.mrb[0].mxu0
  %v2452 = vadd.f32 %v1715, %v2451
  %v2453 = vpop.f32.mrb[0].mxu0
  %v2454 = vadd.f32 %v1715, %v2453
  %2455 = vmatprep.mubr.bf16.mxu0 %v1918
  %2456 = vmatmul.mubr.bf16.gmra.mrb[0].mxu0 %v1917
  %v2457 = vpop.f32.mrb[0].mxu0
  %v2458 = vadd.f32 %v1720, %v2457
  %v2459 = vpop.f32.mrb[0].mxu0
  %v2460 = vadd.f32 %v1720, %v2459
  %v2461 = vpop.f32.mrb[0].mxu0
  %v2462 = vadd.f32 %v1725, %v2461
  %v2463 = vpop.f32.mrb[0].mxu0
  %v2464 = vadd.f32 %v1725, %v2463
  %2465 = vmatprep.mubr.bf16.mxu0 %v1920
  %2466 = vmatmul.mubr.bf16.gmra.mrb[0].mxu0 %v1919
  %v2467 = vpop.f32.mrb[0].mxu0
  %v2468 = vadd.f32 %v1730, %v2467
  %v2469 = vpop.f32.mrb[0].mxu0
  %v2470 = vadd.f32 %v1730, %v2469
  %v2471 = vpop.f32.mrb[0].mxu0
  %v2472 = vadd.f32 %v1735, %v2471
  %v2473 = vpop.f32.mrb[0].mxu0
  %v2474 = vadd.f32 %v1735, %v2473
  %2475 = vmatprep.mubr.bf16.mxu0 %v1922
  %2476 = vmatmul.mubr.bf16.gmra.mrb[0].mxu0 %v1921
  %v2477 = vpop.f32.mrb[0].mxu0
  %v2478 = vadd.f32 %v1740, %v2477
  %v2479 = vpop.f32.mrb[0].mxu0
  %v2480 = vadd.f32 %v1740, %v2479
  %v2481 = vpop.f32.mrb[0].mxu0
  %v2482 = vadd.f32 %v1745, %v2481
  %v2483 = vpop.f32.mrb[0].mxu0
  %v2484 = vadd.f32 %v1745, %v2483
  %2485 = vmatprep.mubr.bf16.mxu0 %v1924
  %2486 = vmatmul.mubr.bf16.gmra.mrb[0].mxu0 %v1923
  %v2487 = vpop.f32.mrb[0].mxu0
  %v2488 = vadd.f32 %v1750, %v2487
  %v2489 = vpop.f32.mrb[0].mxu0
  %v2490 = vadd.f32 %v1750, %v2489
  %v2491 = vpop.f32.mrb[0].mxu0
  %v2492 = vadd.f32 %v1755, %v2491
  %v2493 = vpop.f32.mrb[0].mxu0
  %v2494 = vadd.f32 %v1755, %v2493
  %2495 = vmatprep.mubr.bf16.mxu0 %v1926
  %2496 = vmatmul.mubr.bf16.gmra.mrb[0].mxu0 %v1925
  %v2497 = vpop.f32.mrb[0].mxu0
  %v2498 = vadd.f32 %v1760, %v2497
  %v2499 = vpop.f32.mrb[0].mxu0
  %v2500 = vadd.f32 %v1760, %v2499
  %v2501 = vpop.f32.mrb[0].mxu0
  %v2502 = vadd.f32 %v1765, %v2501
  %v2503 = vpop.f32.mrb[0].mxu0
  %v2504 = vadd.f32 %v1765, %v2503
  %2505 = vmatprep.mubr.bf16.mxu0 %v1928
  %2506 = vmatmul.mubr.bf16.gmra.mrb[0].mxu0 %v1927
  %v2507 = vpop.f32.mrb[0].mxu0
  %v2508 = vadd.f32 %v1770, %v2507
  %v2509 = vpop.f32.mrb[0].mxu0
  %v2510 = vadd.f32 %v1770, %v2509
  %v2511 = vpop.f32.mrb[0].mxu0
  %v2512 = vadd.f32 %v1775, %v2511
  %v2513 = vpop.f32.mrb[0].mxu0
  %v2514 = vadd.f32 %v1775, %v2513
  %2515 = vmatprep.mubr.bf16.mxu0 %v1930
  %2516 = vmatmul.mubr.bf16.gmra.mrb[0].mxu0 %v1929
  %v2517 = vpop.f32.mrb[0].mxu0
  %v2518 = vadd.f32 %v1780, %v2517
  %v2519 = vpop.f32.mrb[0].mxu0
  %v2520 = vadd.f32 %v1780, %v2519
  %v2521 = vpop.f32.mrb[0].mxu0
  %v2522 = vadd.f32 %v1785, %v2521
  %v2523 = vpop.f32.mrb[0].mxu0
  %v2524 = vadd.f32 %v1785, %v2523
  %2525 = vmatprep.mubr.bf16.mxu0 %v1932
  %2526 = vmatmul.mubr.bf16.gmra.mrb[0].mxu0 %v1931
  %v2527 = vpop.f32.mrb[0].mxu0
  %v2528 = vadd.f32 %v1790, %v2527
  %v2529 = vpop.f32.mrb[0].mxu0
  %v2530 = vadd.f32 %v1790, %v2529
  %v2531 = vpop.f32.mrb[0].mxu0
  %v2532 = vadd.f32 %v1795, %v2531
  %v2533 = vpop.f32.mrb[0].mxu0
  %v2534 = vadd.f32 %v1795, %v2533
  %2535 = vmatprep.mubr.bf16.mxu0 %v1934
  %2536 = vmatmul.mubr.bf16.gmra.mrb[0].mxu0 %v1933
  %v2537 = vpop.f32.mrb[0].mxu0
  %v2538 = vadd.f32 %v1800, %v2537
  %v2539 = vpop.f32.mrb[0].mxu0
  %v2540 = vadd.f32 %v1800, %v2539
  %v2541 = vpop.f32.mrb[0].mxu0
  %v2542 = vadd.f32 %v1805, %v2541
  %v2543 = vpop.f32.mrb[0].mxu0
  %v2544 = vadd.f32 %v1805, %v2543
  %2545 = vdwg.mxu0
  %2546 = vmatprep.subr.bf16.mxu0 %v1494
  %2547 = vmatpush1.bf16.msra.mxu0 %v1493
  %2548 = vmatprep.subr.bf16.mxu0 %v1502
  %2549 = vmatpush1.bf16.msra.mxu0 %v1501
  %2550 = vmatprep.subr.bf16.mxu0 %v1510
  %2551 = vmatpush1.bf16.msra.mxu0 %v1509
  %2552 = vmatprep.subr.bf16.mxu0 %v1518
  %2553 = vmatpush1.bf16.msra.mxu0 %v1517
  %2554 = vmatprep.subr.bf16.mxu0 %v1526
  %2555 = vmatpush1.bf16.msra.mxu0 %v1525
  %2556 = vmatprep.subr.bf16.mxu0 %v1534
  %2557 = vmatpush1.bf16.msra.mxu0 %v1533
  %2558 = vmatprep.subr.bf16.mxu0 %v1542
  %2559 = vmatpush1.bf16.msra.mxu0 %v1541
  %2560 = vmatprep.subr.bf16.mxu0 %v1550
  %2561 = vmatpush1.bf16.msra.mxu0 %v1549
  %2562 = vmatprep.subr.bf16.mxu0 %v1558
  %2563 = vmatpush1.bf16.msra.mxu0 %v1557
  %2564 = vmatprep.subr.bf16.mxu0 %v1566
  %2565 = vmatpush1.bf16.msra.mxu0 %v1565
  %2566 = vmatprep.subr.bf16.mxu0 %v1574
  %2567 = vmatpush1.bf16.msra.mxu0 %v1573
  %2568 = vmatprep.subr.bf16.mxu0 %v1582
  %2569 = vmatpush1.bf16.msra.mxu0 %v1581
  %2570 = vmatprep.subr.bf16.mxu0 %v1590
  %2571 = vmatpush1.bf16.msra.mxu0 %v1589
  %2572 = vmatprep.subr.bf16.mxu0 %v1598
  %2573 = vmatpush1.bf16.msra.mxu0 %v1597
  %2574 = vmatprep.subr.bf16.mxu0 %v1606
  %2575 = vmatpush1.bf16.msra.mxu0 %v1605
  %2576 = vmatprep.subr.bf16.mxu0 %v1614
  %2577 = vmatpush1.bf16.msra.mxu0 %v1613
  %2578 = vmatprep.mubr.bf16.mxu0 %v1904
  %2579 = vmatmul.mubr.bf16.gmra.mrb[0].mxu0 %v1903
  %v2580 = vpop.f32.mrb[0].mxu0
  %v2581 = vadd.f32 %v1650, %v2580
  %v2582 = vpop.f32.mrb[0].mxu0
  %v2583 = vadd.f32 %v1650, %v2582
  %v2584 = vpop.f32.mrb[0].mxu0
  %v2585 = vadd.f32 %v1655, %v2584
  %v2586 = vpop.f32.mrb[0].mxu0
  %v2587 = vadd.f32 %v1655, %v2586
  %2588 = vmatprep.mubr.bf16.mxu0 %v1906
  %2589 = vmatmul.mubr.bf16.gmra.mrb[0].mxu0 %v1905
  %v2590 = vpop.f32.mrb[0].mxu0
  %v2591 = vadd.f32 %v1660, %v2590
  %v2592 = vpop.f32.mrb[0].mxu0
  %v2593 = vadd.f32 %v1660, %v2592
  %v2594 = vpop.f32.mrb[0].mxu0
  %v2595 = vadd.f32 %v1665, %v2594
  %v2596 = vpop.f32.mrb[0].mxu0
  %v2597 = vadd.f32 %v1665, %v2596
  %2598 = vmatprep.mubr.bf16.mxu0 %v1908
  %2599 = vmatmul.mubr.bf16.gmra.mrb[0].mxu0 %v1907
  %v2600 = vpop.f32.mrb[0].mxu0
  %v2601 = vadd.f32 %v1670, %v2600
  %v2602 = vpop.f32.mrb[0].mxu0
  %v2603 = vadd.f32 %v1670, %v2602
  %v2604 = vpop.f32.mrb[0].mxu0
  %v2605 = vadd.f32 %v1675, %v2604
  %v2606 = vpop.f32.mrb[0].mxu0
  %v2607 = vadd.f32 %v1675, %v2606
  %2608 = vmatprep.mubr.bf16.mxu0 %v1910
  %2609 = vmatmul.mubr.bf16.gmra.mrb[0].mxu0 %v1909
  %v2610 = vpop.f32.mrb[0].mxu0
  %v2611 = vadd.f32 %v1680, %v2610
  %v2612 = vpop.f32.mrb[0].mxu0
  %v2613 = vadd.f32 %v1680, %v2612
  %v2614 = vpop.f32.mrb[0].mxu0
  %v2615 = vadd.f32 %v1685, %v2614
  %v2616 = vpop.f32.mrb[0].mxu0
  %v2617 = vadd.f32 %v1685, %v2616
  %2618 = vmatprep.mubr.bf16.mxu0 %v1912
  %2619 = vmatmul.mubr.bf16.gmra.mrb[0].mxu0 %v1911
  %v2620 = vpop.f32.mrb[0].mxu0
  %v2621 = vadd.f32 %v1690, %v2620
  %v2622 = vpop.f32.mrb[0].mxu0
  %v2623 = vadd.f32 %v1690, %v2622
  %v2624 = vpop.f32.mrb[0].mxu0
  %v2625 = vadd.f32 %v1695, %v2624
  %v2626 = vpop.f32.mrb[0].mxu0
  %v2627 = vadd.f32 %v1695, %v2626
  %2628 = vmatprep.mubr.bf16.mxu0 %v1914
  %2629 = vmatmul.mubr.bf16.gmra.mrb[0].mxu0 %v1913
  %v2630 = vpop.f32.mrb[0].mxu0
  %v2631 = vadd.f32 %v1700, %v2630
  %v2632 = vpop.f32.mrb[0].mxu0
  %v2633 = vadd.f32 %v1700, %v2632
  %v2634 = vpop.f32.mrb[0].mxu0
  %v2635 = vadd.f32 %v1705, %v2634
  %v2636 = vpop.f32.mrb[0].mxu0
  %v2637 = vadd.f32 %v1705, %v2636
  %2638 = vmatprep.mubr.bf16.mxu0 %v1916
  %2639 = vmatmul.mubr.bf16.gmra.mrb[0].mxu0 %v1915
  %v2640 = vpop.f32.mrb[0].mxu0
  %v2641 = vadd.f32 %v1710, %v2640
  %v2642 = vpop.f32.mrb[0].mxu0
  %v2643 = vadd.f32 %v1710, %v2642
  %v2644 = vpop.f32.mrb[0].mxu0
  %v2645 = vadd.f32 %v1715, %v2644
  %v2646 = vpop.f32.mrb[0].mxu0
  %v2647 = vadd.f32 %v1715, %v2646
  %2648 = vmatprep.mubr.bf16.mxu0 %v1918
  %2649 = vmatmul.mubr.bf16.gmra.mrb[0].mxu0 %v1917
  %v2650 = vpop.f32.mrb[0].mxu0
  %v2651 = vadd.f32 %v1720, %v2650
  %v2652 = vpop.f32.mrb[0].mxu0
  %v2653 = vadd.f32 %v1720, %v2652
  %v2654 = vpop.f32.mrb[0].mxu0
  %v2655 = vadd.f32 %v1725, %v2654
  %v2656 = vpop.f32.mrb[0].mxu0
  %v2657 = vadd.f32 %v1725, %v2656
  %2658 = vmatprep.mubr.bf16.mxu0 %v1920
  %2659 = vmatmul.mubr.bf16.gmra.mrb[0].mxu0 %v1919
  %v2660 = vpop.f32.mrb[0].mxu0
  %v2661 = vadd.f32 %v1730, %v2660
  %v2662 = vpop.f32.mrb[0].mxu0
  %v2663 = vadd.f32 %v1730, %v2662
  %v2664 = vpop.f32.mrb[0].mxu0
  %v2665 = vadd.f32 %v1735, %v2664
  %v2666 = vpop.f32.mrb[0].mxu0
  %v2667 = vadd.f32 %v1735, %v2666
  %2668 = vmatprep.mubr.bf16.mxu0 %v1922
  %2669 = vmatmul.mubr.bf16.gmra.mrb[0].mxu0 %v1921
  %v2670 = vpop.f32.mrb[0].mxu0
  %v2671 = vadd.f32 %v1740, %v2670
  %v2672 = vpop.f32.mrb[0].mxu0
  %v2673 = vadd.f32 %v1740, %v2672
  %v2674 = vpop.f32.mrb[0].mxu0
  %v2675 = vadd.f32 %v1745, %v2674
  %v2676 = vpop.f32.mrb[0].mxu0
  %v2677 = vadd.f32 %v1745, %v2676
  %2678 = vmatprep.mubr.bf16.mxu0 %v1924
  %2679 = vmatmul.mubr.bf16.gmra.mrb[0].mxu0 %v1923
  %v2680 = vpop.f32.mrb[0].mxu0
  %v2681 = vadd.f32 %v1750, %v2680
  %v2682 = vpop.f32.mrb[0].mxu0
  %v2683 = vadd.f32 %v1750, %v2682
  %v2684 = vpop.f32.mrb[0].mxu0
  %v2685 = vadd.f32 %v1755, %v2684
  %v2686 = vpop.f32.mrb[0].mxu0
  %v2687 = vadd.f32 %v1755, %v2686
  %2688 = vmatprep.mubr.bf16.mxu0 %v1926
  %2689 = vmatmul.mubr.bf16.gmra.mrb[0].mxu0 %v1925
  %v2690 = vpop.f32.mrb[0].mxu0
  %v2691 = vadd.f32 %v1760, %v2690
  %v2692 = vpop.f32.mrb[0].mxu0
  %v2693 = vadd.f32 %v1760, %v2692
  %v2694 = vpop.f32.mrb[0].mxu0
  %v2695 = vadd.f32 %v1765, %v2694
  %v2696 = vpop.f32.mrb[0].mxu0
  %v2697 = vadd.f32 %v1765, %v2696
  %2698 = vmatprep.mubr.bf16.mxu0 %v1928
  %2699 = vmatmul.mubr.bf16.gmra.mrb[0].mxu0 %v1927
  %v2700 = vpop.f32.mrb[0].mxu0
  %v2701 = vadd.f32 %v1770, %v2700
  %v2702 = vpop.f32.mrb[0].mxu0
  %v2703 = vadd.f32 %v1770, %v2702
  %v2704 = vpop.f32.mrb[0].mxu0
  %v2705 = vadd.f32 %v1775, %v2704
  %v2706 = vpop.f32.mrb[0].mxu0
  %v2707 = vadd.f32 %v1775, %v2706
  %2708 = vmatprep.mubr.bf16.mxu0 %v1930
  %2709 = vmatmul.mubr.bf16.gmra.mrb[0].mxu0 %v1929
  %v2710 = vpop.f32.mrb[0].mxu0
  %v2711 = vadd.f32 %v1780, %v2710
  %v2712 = vpop.f32.mrb[0].mxu0
  %v2713 = vadd.f32 %v1780, %v2712
  %v2714 = vpop.f32.mrb[0].mxu0
  %v2715 = vadd.f32 %v1785, %v2714
  %v2716 = vpop.f32.mrb[0].mxu0
  %v2717 = vadd.f32 %v1785, %v2716
  %2718 = vmatprep.mubr.bf16.mxu0 %v1932
  %2719 = vmatmul.mubr.bf16.gmra.mrb[0].mxu0 %v1931
  %v2720 = vpop.f32.mrb[0].mxu0
  %v2721 = vadd.f32 %v1790, %v2720
  %v2722 = vpop.f32.mrb[0].mxu0
  %v2723 = vadd.f32 %v1790, %v2722
  %v2724 = vpop.f32.mrb[0].mxu0
  %v2725 = vadd.f32 %v1795, %v2724
  %v2726 = vpop.f32.mrb[0].mxu0
  %v2727 = vadd.f32 %v1795, %v2726
  %2728 = vmatprep.mubr.bf16.mxu0 %v1934
  %2729 = vmatmul.mubr.bf16.gmra.mrb[0].mxu0 %v1933
  %v2730 = vpop.f32.mrb[0].mxu0
  %v2731 = vadd.f32 %v1800, %v2730
  %v2732 = vpop.f32.mrb[0].mxu0
  %v2733 = vadd.f32 %v1800, %v2732
  %v2734 = vpop.f32.mrb[0].mxu0
  %v2735 = vadd.f32 %v1805, %v2734
  %v2736 = vpop.f32.mrb[0].mxu0
  %v2737 = vadd.f32 %v1805, %v2736
  %2738 = vdwg.mxu0
  %v2739 = vmax.f32 %v2002, 0.0
  %v2740 = vmax.f32 %v2004, 0.0
  %v2741 = vmax.f32 %v2195, 0.0
  %v2742 = vmax.f32 %v2197, 0.0
  %v2743 = vmax.f32 %v2388, 0.0
  %v2744 = vmax.f32 %v2390, 0.0
  %v2745 = vmax.f32 %v2581, 0.0
  %v2746 = vmax.f32 %v2583, 0.0
  %v2747 = vmax.f32 %v2006, 0.0
  %v2748 = vmax.f32 %v2008, 0.0
  %v2749 = vmax.f32 %v2199, 0.0
  %v2750 = vmax.f32 %v2201, 0.0
  %v2751 = vmax.f32 %v2392, 0.0
  %v2752 = vmax.f32 %v2394, 0.0
  %v2753 = vmax.f32 %v2585, 0.0
  %v2754 = vmax.f32 %v2587, 0.0
  %v2755 = vmax.f32 %v2012, 0.0
  %v2756 = vmax.f32 %v2014, 0.0
  %v2757 = vmax.f32 %v2205, 0.0
  %v2758 = vmax.f32 %v2207, 0.0
  %v2759 = vmax.f32 %v2398, 0.0
  %v2760 = vmax.f32 %v2400, 0.0
  %v2761 = vmax.f32 %v2591, 0.0
  %v2762 = vmax.f32 %v2593, 0.0
  %v2763 = vmax.f32 %v2016, 0.0
  %v2764 = vmax.f32 %v2018, 0.0
  %v2765 = vmax.f32 %v2209, 0.0
  %v2766 = vmax.f32 %v2211, 0.0
  %v2767 = vmax.f32 %v2402, 0.0
  %v2768 = vmax.f32 %v2404, 0.0
  %v2769 = vmax.f32 %v2595, 0.0
  %v2770 = vmax.f32 %v2597, 0.0
  %v2771 = vmax.f32 %v2022, 0.0
  %v2772 = vmax.f32 %v2024, 0.0
  %v2773 = vmax.f32 %v2215, 0.0
  %v2774 = vmax.f32 %v2217, 0.0
  %v2775 = vmax.f32 %v2408, 0.0
  %v2776 = vmax.f32 %v2410, 0.0
  %v2777 = vmax.f32 %v2601, 0.0
  %v2778 = vmax.f32 %v2603, 0.0
  %v2779 = vmax.f32 %v2026, 0.0
  %v2780 = vmax.f32 %v2028, 0.0
  %v2781 = vmax.f32 %v2219, 0.0
  %v2782 = vmax.f32 %v2221, 0.0
  %v2783 = vmax.f32 %v2412, 0.0
  %v2784 = vmax.f32 %v2414, 0.0
  %v2785 = vmax.f32 %v2605, 0.0
  %v2786 = vmax.f32 %v2607, 0.0
  %v2787 = vmax.f32 %v2032, 0.0
  %v2788 = vmax.f32 %v2034, 0.0
  %v2789 = vmax.f32 %v2225, 0.0
  %v2790 = vmax.f32 %v2227, 0.0
  %v2791 = vmax.f32 %v2418, 0.0
  %v2792 = vmax.f32 %v2420, 0.0
  %v2793 = vmax.f32 %v2611, 0.0
  %v2794 = vmax.f32 %v2613, 0.0
  %v2795 = vmax.f32 %v2036, 0.0
  %v2796 = vmax.f32 %v2038, 0.0
  %v2797 = vmax.f32 %v2229, 0.0
  %v2798 = vmax.f32 %v2231, 0.0
  %v2799 = vmax.f32 %v2422, 0.0
  %v2800 = vmax.f32 %v2424, 0.0
  %v2801 = vmax.f32 %v2615, 0.0
  %v2802 = vmax.f32 %v2617, 0.0
  %v2803 = vmax.f32 %v2042, 0.0
  %v2804 = vmax.f32 %v2044, 0.0
  %v2805 = vmax.f32 %v2235, 0.0
  %v2806 = vmax.f32 %v2237, 0.0
  %v2807 = vmax.f32 %v2428, 0.0
  %v2808 = vmax.f32 %v2430, 0.0
  %v2809 = vmax.f32 %v2621, 0.0
  %v2810 = vmax.f32 %v2623, 0.0
  %v2811 = vmax.f32 %v2046, 0.0
  %v2812 = vmax.f32 %v2048, 0.0
  %v2813 = vmax.f32 %v2239, 0.0
  %v2814 = vmax.f32 %v2241, 0.0
  %v2815 = vmax.f32 %v2432, 0.0
  %v2816 = vmax.f32 %v2434, 0.0
  %v2817 = vmax.f32 %v2625, 0.0
  %v2818 = vmax.f32 %v2627, 0.0
  %v2819 = vmax.f32 %v2052, 0.0
  %v2820 = vmax.f32 %v2054, 0.0
  %v2821 = vmax.f32 %v2245, 0.0
  %v2822 = vmax.f32 %v2247, 0.0
  %v2823 = vmax.f32 %v2438, 0.0
  %v2824 = vmax.f32 %v2440, 0.0
  %v2825 = vmax.f32 %v2631, 0.0
  %v2826 = vmax.f32 %v2633, 0.0
  %v2827 = vmax.f32 %v2056, 0.0
  %v2828 = vmax.f32 %v2058, 0.0
  %v2829 = vmax.f32 %v2249, 0.0
  %v2830 = vmax.f32 %v2251, 0.0
  %v2831 = vmax.f32 %v2442, 0.0
  %v2832 = vmax.f32 %v2444, 0.0
  %v2833 = vmax.f32 %v2635, 0.0
  %v2834 = vmax.f32 %v2637, 0.0
  %v2835 = vmax.f32 %v2062, 0.0
  %v2836 = vmax.f32 %v2064, 0.0
  %v2837 = vmax.f32 %v2255, 0.0
  %v2838 = vmax.f32 %v2257, 0.0
  %v2839 = vmax.f32 %v2448, 0.0
  %v2840 = vmax.f32 %v2450, 0.0
  %v2841 = vmax.f32 %v2641, 0.0
  %v2842 = vmax.f32 %v2643, 0.0
  %v2843 = vmax.f32 %v2066, 0.0
  %v2844 = vmax.f32 %v2068, 0.0
  %v2845 = vmax.f32 %v2259, 0.0
  %v2846 = vmax.f32 %v2261, 0.0
  %v2847 = vmax.f32 %v2452, 0.0
  %v2848 = vmax.f32 %v2454, 0.0
  %v2849 = vmax.f32 %v2645, 0.0
  %v2850 = vmax.f32 %v2647, 0.0
  %v2851 = vmax.f32 %v2072, 0.0
  %v2852 = vmax.f32 %v2074, 0.0
  %v2853 = vmax.f32 %v2265, 0.0
  %v2854 = vmax.f32 %v2267, 0.0
  %v2855 = vmax.f32 %v2458, 0.0
  %v2856 = vmax.f32 %v2460, 0.0
  %v2857 = vmax.f32 %v2651, 0.0
  %v2858 = vmax.f32 %v2653, 0.0
  %v2859 = vmax.f32 %v2076, 0.0
  %v2860 = vmax.f32 %v2078, 0.0
  %v2861 = vmax.f32 %v2269, 0.0
  %v2862 = vmax.f32 %v2271, 0.0
  %v2863 = vmax.f32 %v2462, 0.0
  %v2864 = vmax.f32 %v2464, 0.0
  %v2865 = vmax.f32 %v2655, 0.0
  %v2866 = vmax.f32 %v2657, 0.0
  %v2867 = vmax.f32 %v2082, 0.0
  %v2868 = vmax.f32 %v2084, 0.0
  %v2869 = vmax.f32 %v2275, 0.0
  %v2870 = vmax.f32 %v2277, 0.0
  %v2871 = vmax.f32 %v2468, 0.0
  %v2872 = vmax.f32 %v2470, 0.0
  %v2873 = vmax.f32 %v2661, 0.0
  %v2874 = vmax.f32 %v2663, 0.0
  %v2875 = vmax.f32 %v2086, 0.0
  %v2876 = vmax.f32 %v2088, 0.0
  %v2877 = vmax.f32 %v2279, 0.0
  %v2878 = vmax.f32 %v2281, 0.0
  %v2879 = vmax.f32 %v2472, 0.0
  %v2880 = vmax.f32 %v2474, 0.0
  %v2881 = vmax.f32 %v2665, 0.0
  %v2882 = vmax.f32 %v2667, 0.0
  %v2883 = vmax.f32 %v2092, 0.0
  %v2884 = vmax.f32 %v2094, 0.0
  %v2885 = vmax.f32 %v2285, 0.0
  %v2886 = vmax.f32 %v2287, 0.0
  %v2887 = vmax.f32 %v2478, 0.0
  %v2888 = vmax.f32 %v2480, 0.0
  %v2889 = vmax.f32 %v2671, 0.0
  %v2890 = vmax.f32 %v2673, 0.0
  %v2891 = vmax.f32 %v2096, 0.0
  %v2892 = vmax.f32 %v2098, 0.0
  %v2893 = vmax.f32 %v2289, 0.0
  %v2894 = vmax.f32 %v2291, 0.0
  %v2895 = vmax.f32 %v2482, 0.0
  %v2896 = vmax.f32 %v2484, 0.0
  %v2897 = vmax.f32 %v2675, 0.0
  %v2898 = vmax.f32 %v2677, 0.0
  %v2899 = vmax.f32 %v2102, 0.0
  %v2900 = vmax.f32 %v2104, 0.0
  %v2901 = vmax.f32 %v2295, 0.0
  %v2902 = vmax.f32 %v2297, 0.0
  %v2903 = vmax.f32 %v2488, 0.0
  %v2904 = vmax.f32 %v2490, 0.0
  %v2905 = vmax.f32 %v2681, 0.0
  %v2906 = vmax.f32 %v2683, 0.0
  %v2907 = vmax.f32 %v2106, 0.0
  %v2908 = vmax.f32 %v2108, 0.0
  %v2909 = vmax.f32 %v2299, 0.0
  %v2910 = vmax.f32 %v2301, 0.0
  %v2911 = vmax.f32 %v2492, 0.0
  %v2912 = vmax.f32 %v2494, 0.0
  %v2913 = vmax.f32 %v2685, 0.0
  %v2914 = vmax.f32 %v2687, 0.0
  %v2915 = vmax.f32 %v2112, 0.0
  %v2916 = vmax.f32 %v2114, 0.0
  %v2917 = vmax.f32 %v2305, 0.0
  %v2918 = vmax.f32 %v2307, 0.0
  %v2919 = vmax.f32 %v2498, 0.0
  %v2920 = vmax.f32 %v2500, 0.0
  %v2921 = vmax.f32 %v2691, 0.0
  %v2922 = vmax.f32 %v2693, 0.0
  %v2923 = vmax.f32 %v2116, 0.0
  %v2924 = vmax.f32 %v2118, 0.0
  %v2925 = vmax.f32 %v2309, 0.0
  %v2926 = vmax.f32 %v2311, 0.0
  %v2927 = vmax.f32 %v2502, 0.0
  %v2928 = vmax.f32 %v2504, 0.0
  %v2929 = vmax.f32 %v2695, 0.0
  %v2930 = vmax.f32 %v2697, 0.0
  %v2931 = vmax.f32 %v2122, 0.0
  %v2932 = vmax.f32 %v2124, 0.0
  %v2933 = vmax.f32 %v2315, 0.0
  %v2934 = vmax.f32 %v2317, 0.0
  %v2935 = vmax.f32 %v2508, 0.0
  %v2936 = vmax.f32 %v2510, 0.0
  %v2937 = vmax.f32 %v2701, 0.0
  %v2938 = vmax.f32 %v2703, 0.0
  %v2939 = vmax.f32 %v2126, 0.0
  %v2940 = vmax.f32 %v2128, 0.0
  %v2941 = vmax.f32 %v2319, 0.0
  %v2942 = vmax.f32 %v2321, 0.0
  %v2943 = vmax.f32 %v2512, 0.0
  %v2944 = vmax.f32 %v2514, 0.0
  %v2945 = vmax.f32 %v2705, 0.0
  %v2946 = vmax.f32 %v2707, 0.0
  %v2947 = vmax.f32 %v2132, 0.0
  %v2948 = vmax.f32 %v2134, 0.0
  %v2949 = vmax.f32 %v2325, 0.0
  %v2950 = vmax.f32 %v2327, 0.0
  %v2951 = vmax.f32 %v2518, 0.0
  %v2952 = vmax.f32 %v2520, 0.0
  %v2953 = vmax.f32 %v2711, 0.0
  %v2954 = vmax.f32 %v2713, 0.0
  %v2955 = vmax.f32 %v2136, 0.0
  %v2956 = vmax.f32 %v2138, 0.0
  %v2957 = vmax.f32 %v2329, 0.0
  %v2958 = vmax.f32 %v2331, 0.0
  %v2959 = vmax.f32 %v2522, 0.0
  %v2960 = vmax.f32 %v2524, 0.0
  %v2961 = vmax.f32 %v2715, 0.0
  %v2962 = vmax.f32 %v2717, 0.0
  %v2963 = vmax.f32 %v2142, 0.0
  %v2964 = vmax.f32 %v2144, 0.0
  %v2965 = vmax.f32 %v2335, 0.0
  %v2966 = vmax.f32 %v2337, 0.0
  %v2967 = vmax.f32 %v2528, 0.0
  %v2968 = vmax.f32 %v2530, 0.0
  %v2969 = vmax.f32 %v2721, 0.0
  %v2970 = vmax.f32 %v2723, 0.0
  %v2971 = vmax.f32 %v2146, 0.0
  %v2972 = vmax.f32 %v2148, 0.0
  %v2973 = vmax.f32 %v2339, 0.0
  %v2974 = vmax.f32 %v2341, 0.0
  %v2975 = vmax.f32 %v2532, 0.0
  %v2976 = vmax.f32 %v2534, 0.0
  %v2977 = vmax.f32 %v2725, 0.0
  %v2978 = vmax.f32 %v2727, 0.0
  %v2979 = vmax.f32 %v2152, 0.0
  %v2980 = vmax.f32 %v2154, 0.0
  %v2981 = vmax.f32 %v2345, 0.0
  %v2982 = vmax.f32 %v2347, 0.0
  %v2983 = vmax.f32 %v2538, 0.0
  %v2984 = vmax.f32 %v2540, 0.0
  %v2985 = vmax.f32 %v2731, 0.0
  %v2986 = vmax.f32 %v2733, 0.0
  %v2987 = vmax.f32 %v2156, 0.0
  %v2988 = vmax.f32 %v2158, 0.0
  %v2989 = vmax.f32 %v2349, 0.0
  %v2990 = vmax.f32 %v2351, 0.0
  %v2991 = vmax.f32 %v2542, 0.0
  %v2992 = vmax.f32 %v2544, 0.0
  %v2993 = vmax.f32 %v2735, 0.0
  %v2994 = vmax.f32 %v2737, 0.0
  %v2995 = vld [vmem:[%s5] sm:$0xff]
  %v2996 = vld [vmem:[%s5 + $0x8] sm:$0xff]
  %v2997 = vld [vmem:[%s5 + $0x10] sm:$0xff]
  %v2998 = vld [vmem:[%s5 + $0x18] sm:$0xff]
  %v2999 = vld [vmem:[%s5 + $0x20] sm:$0xff]
  %v3000 = vld [vmem:[%s5 + $0x28] sm:$0xff]
  %v3001 = vld [vmem:[%s5 + $0x30] sm:$0xff]
  %v3002 = vld [vmem:[%s5 + $0x38] sm:$0xff]
  %v3003 = vld [vmem:[%s5 + $0x40] sm:$0xff]
  %v3004 = vld [vmem:[%s5 + $0x48] sm:$0xff]
  %v3005 = vld [vmem:[%s5 + $0x50] sm:$0xff]
  %v3006 = vld [vmem:[%s5 + $0x58] sm:$0xff]
  %v3007 = vld [vmem:[%s5 + $0x60] sm:$0xff]
  %v3008 = vld [vmem:[%s5 + $0x68] sm:$0xff]
  %v3009 = vld [vmem:[%s5 + $0x70] sm:$0xff]
  %v3010 = vld [vmem:[%s5 + $0x78] sm:$0xff]
  %v3011 = vld [vmem:[%s5 + $0x80] sm:$0xff]
  %v3012 = vld [vmem:[%s5 + $0x88] sm:$0xff]
  %v3013 = vld [vmem:[%s5 + $0x90] sm:$0xff]
  %v3014 = vld [vmem:[%s5 + $0x98] sm:$0xff]
  %v3015 = vld [vmem:[%s5 + $0xa0] sm:$0xff]
  %v3016 = vld [vmem:[%s5 + $0xa8] sm:$0xff]
  %v3017 = vld [vmem:[%s5 + $0xb0] sm:$0xff]
  %v3018 = vld [vmem:[%s5 + $0xb8] sm:$0xff]
  %v3019 = vld [vmem:[%s5 + $0xc0] sm:$0xff]
  %v3020 = vld [vmem:[%s5 + $0xc8] sm:$0xff]
  %v3021 = vld [vmem:[%s5 + $0xd0] sm:$0xff]
  %v3022 = vld [vmem:[%s5 + $0xd8] sm:$0xff]
  %v3023 = vld [vmem:[%s5 + $0xe0] sm:$0xff]
  %v3024 = vld [vmem:[%s5 + $0xe8] sm:$0xff]
  %v3025 = vld [vmem:[%s5 + $0xf0] sm:$0xff]
  %v3026 = vld [vmem:[%s5 + $0xf8] sm:$0xff]
  %v3027 = vpack.c.bf16 %v2747, %v2739
  %v3028 = vpack.c.bf16 %v2748, %v2740
  %v3029 = vpack.c.bf16 %v2749, %v2741
  %v3030 = vpack.c.bf16 %v2750, %v2742
  %v3031 = vpack.c.bf16 %v2751, %v2743
  %v3032 = vpack.c.bf16 %v2752, %v2744
  %v3033 = vpack.c.bf16 %v2753, %v2745
  %v3034 = vpack.c.bf16 %v2754, %v2746
  %v3035 = vpack.c.bf16 %v2763, %v2755
  %v3036 = vpack.c.bf16 %v2764, %v2756
  %v3037 = vpack.c.bf16 %v2765, %v2757
  %v3038 = vpack.c.bf16 %v2766, %v2758
  %v3039 = vpack.c.bf16 %v2767, %v2759
  %v3040 = vpack.c.bf16 %v2768, %v2760
  %v3041 = vpack.c.bf16 %v2769, %v2761
  %v3042 = vpack.c.bf16 %v2770, %v2762
  %v3043 = vpack.c.bf16 %v2779, %v2771
  %v3044 = vpack.c.bf16 %v2780, %v2772
  %v3045 = vpack.c.bf16 %v2781, %v2773
  %v3046 = vpack.c.bf16 %v2782, %v2774
  %v3047 = vpack.c.bf16 %v2783, %v2775
  %v3048 = vpack.c.bf16 %v2784, %v2776
  %v3049 = vpack.c.bf16 %v2785, %v2777
  %v3050 = vpack.c.bf16 %v2786, %v2778
  %v3051 = vpack.c.bf16 %v2795, %v2787
  %v3052 = vpack.c.bf16 %v2796, %v2788
  %v3053 = vpack.c.bf16 %v2797, %v2789
  %v3054 = vpack.c.bf16 %v2798, %v2790
  %v3055 = vpack.c.bf16 %v2799, %v2791
  %v3056 = vpack.c.bf16 %v2800, %v2792
  %v3057 = vpack.c.bf16 %v2801, %v2793
  %v3058 = vpack.c.bf16 %v2802, %v2794
  %v3059 = vpack.c.bf16 %v2811, %v2803
  %v3060 = vpack.c.bf16 %v2812, %v2804
  %v3061 = vpack.c.bf16 %v2813, %v2805
  %v3062 = vpack.c.bf16 %v2814, %v2806
  %v3063 = vpack.c.bf16 %v2815, %v2807
  %v3064 = vpack.c.bf16 %v2816, %v2808
  %v3065 = vpack.c.bf16 %v2817, %v2809
  %v3066 = vpack.c.bf16 %v2818, %v2810
  %v3067 = vpack.c.bf16 %v2827, %v2819
  %v3068 = vpack.c.bf16 %v2828, %v2820
  %v3069 = vpack.c.bf16 %v2829, %v2821
  %v3070 = vpack.c.bf16 %v2830, %v2822
  %v3071 = vpack.c.bf16 %v2831, %v2823
  %v3072 = vpack.c.bf16 %v2832, %v2824
  %v3073 = vpack.c.bf16 %v2833, %v2825
  %v3074 = vpack.c.bf16 %v2834, %v2826
  %v3075 = vpack.c.bf16 %v2843, %v2835
  %v3076 = vpack.c.bf16 %v2844, %v2836
  %v3077 = vpack.c.bf16 %v2845, %v2837
  %v3078 = vpack.c.bf16 %v2846, %v2838
  %v3079 = vpack.c.bf16 %v2847, %v2839
  %v3080 = vpack.c.bf16 %v2848, %v2840
  %v3081 = vpack.c.bf16 %v2849, %v2841
  %v3082 = vpack.c.bf16 %v2850, %v2842
  %v3083 = vpack.c.bf16 %v2859, %v2851
  %v3084 = vpack.c.bf16 %v2860, %v2852
  %v3085 = vpack.c.bf16 %v2861, %v2853
  %v3086 = vpack.c.bf16 %v2862, %v2854
  %v3087 = vpack.c.bf16 %v2863, %v2855
  %v3088 = vpack.c.bf16 %v2864, %v2856
  %v3089 = vpack.c.bf16 %v2865, %v2857
  %v3090 = vpack.c.bf16 %v2866, %v2858
  %v3091 = vpack.c.bf16 %v2875, %v2867
  %v3092 = vpack.c.bf16 %v2876, %v2868
  %v3093 = vpack.c.bf16 %v2877, %v2869
  %v3094 = vpack.c.bf16 %v2878, %v2870
  %v3095 = vpack.c.bf16 %v2879, %v2871
  %v3096 = vpack.c.bf16 %v2880, %v2872
  %v3097 = vpack.c.bf16 %v2881, %v2873
  %v3098 = vpack.c.bf16 %v2882, %v2874
  %v3099 = vpack.c.bf16 %v2891, %v2883
  %v3100 = vpack.c.bf16 %v2892, %v2884
  %v3101 = vpack.c.bf16 %v2893, %v2885
  %v3102 = vpack.c.bf16 %v2894, %v2886
  %v3103 = vpack.c.bf16 %v2895, %v2887
  %v3104 = vpack.c.bf16 %v2896, %v2888
  %v3105 = vpack.c.bf16 %v2897, %v2889
  %v3106 = vpack.c.bf16 %v2898, %v2890
  %v3107 = vpack.c.bf16 %v2907, %v2899
  %v3108 = vpack.c.bf16 %v2908, %v2900
  %v3109 = vpack.c.bf16 %v2909, %v2901
  %v3110 = vpack.c.bf16 %v2910, %v2902
  %v3111 = vpack.c.bf16 %v2911, %v2903
  %v3112 = vpack.c.bf16 %v2912, %v2904
  %v3113 = vpack.c.bf16 %v2913, %v2905
  %v3114 = vpack.c.bf16 %v2914, %v2906
  %v3115 = vpack.c.bf16 %v2923, %v2915
  %v3116 = vpack.c.bf16 %v2924, %v2916
  %v3117 = vpack.c.bf16 %v2925, %v2917
  %v3118 = vpack.c.bf16 %v2926, %v2918
  %v3119 = vpack.c.bf16 %v2927, %v2919
  %v3120 = vpack.c.bf16 %v2928, %v2920
  %v3121 = vpack.c.bf16 %v2929, %v2921
  %v3122 = vpack.c.bf16 %v2930, %v2922
  %v3123 = vpack.c.bf16 %v2939, %v2931
  %v3124 = vpack.c.bf16 %v2940, %v2932
  %v3125 = vpack.c.bf16 %v2941, %v2933
  %v3126 = vpack.c.bf16 %v2942, %v2934
  %v3127 = vpack.c.bf16 %v2943, %v2935
  %v3128 = vpack.c.bf16 %v2944, %v2936
  %v3129 = vpack.c.bf16 %v2945, %v2937
  %v3130 = vpack.c.bf16 %v2946, %v2938
  %v3131 = vpack.c.bf16 %v2955, %v2947
  %v3132 = vpack.c.bf16 %v2956, %v2948
  %v3133 = vpack.c.bf16 %v2957, %v2949
  %v3134 = vpack.c.bf16 %v2958, %v2950
  %v3135 = vpack.c.bf16 %v2959, %v2951
  %v3136 = vpack.c.bf16 %v2960, %v2952
  %v3137 = vpack.c.bf16 %v2961, %v2953
  %v3138 = vpack.c.bf16 %v2962, %v2954
  %v3139 = vpack.c.bf16 %v2971, %v2963
  %v3140 = vpack.c.bf16 %v2972, %v2964
  %v3141 = vpack.c.bf16 %v2973, %v2965
  %v3142 = vpack.c.bf16 %v2974, %v2966
  %v3143 = vpack.c.bf16 %v2975, %v2967
  %v3144 = vpack.c.bf16 %v2976, %v2968
  %v3145 = vpack.c.bf16 %v2977, %v2969
  %v3146 = vpack.c.bf16 %v2978, %v2970
  %v3147 = vpack.c.bf16 %v2987, %v2979
  %v3148 = vpack.c.bf16 %v2988, %v2980
  %v3149 = vpack.c.bf16 %v2989, %v2981
  %v3150 = vpack.c.bf16 %v2990, %v2982
  %v3151 = vpack.c.bf16 %v2991, %v2983
  %v3152 = vpack.c.bf16 %v2992, %v2984
  %v3153 = vpack.c.bf16 %v2993, %v2985
  %v3154 = vpack.c.bf16 %v2994, %v2986
  %v3155 = vld [vmem:[%s6] sm:$0xff]
  %v3156 = vld [vmem:[%s6 + $0x8] sm:$0xff]
  %v3157 = vld [vmem:[%s6 + $0x10] sm:$0xff]
  %v3158 = vld [vmem:[%s6 + $0x18] sm:$0xff]
  %v3159 = vld [vmem:[%s6 + $0x20] sm:$0xff]
  %v3160 = vld [vmem:[%s6 + $0x28] sm:$0xff]
  %v3161 = vld [vmem:[%s6 + $0x30] sm:$0xff]
  %v3162 = vld [vmem:[%s6 + $0x38] sm:$0xff]
  %v3163 = vld [vmem:[%s6 + $0x40] sm:$0xff]
  %v3164 = vld [vmem:[%s6 + $0x48] sm:$0xff]
  %v3165 = vld [vmem:[%s6 + $0x50] sm:$0xff]
  %v3166 = vld [vmem:[%s6 + $0x58] sm:$0xff]
  %v3167 = vld [vmem:[%s6 + $0x60] sm:$0xff]
  %v3168 = vld [vmem:[%s6 + $0x68] sm:$0xff]
  %v3169 = vld [vmem:[%s6 + $0x70] sm:$0xff]
  %v3170 = vld [vmem:[%s6 + $0x78] sm:$0xff]
  %v3171 = vld [vmem:[%s6 + $0x80] sm:$0xff]
  %v3172 = vld [vmem:[%s6 + $0x88] sm:$0xff]
  %v3173 = vld [vmem:[%s6 + $0x90] sm:$0xff]
  %v3174 = vld [vmem:[%s6 + $0x98] sm:$0xff]
  %v3175 = vld [vmem:[%s6 + $0xa0] sm:$0xff]
  %v3176 = vld [vmem:[%s6 + $0xa8] sm:$0xff]
  %v3177 = vld [vmem:[%s6 + $0xb0] sm:$0xff]
  %v3178 = vld [vmem:[%s6 + $0xb8] sm:$0xff]
  %v3179 = vld [vmem:[%s6 + $0xc0] sm:$0xff]
  %v3180 = vld [vmem:[%s6 + $0xc8] sm:$0xff]
  %v3181 = vld [vmem:[%s6 + $0xd0] sm:$0xff]
  %v3182 = vld [vmem:[%s6 + $0xd8] sm:$0xff]
  %v3183 = vld [vmem:[%s6 + $0xe0] sm:$0xff]
  %v3184 = vld [vmem:[%s6 + $0xe8] sm:$0xff]
  %v3185 = vld [vmem:[%s6 + $0xf0] sm:$0xff]
  %v3186 = vld [vmem:[%s6 + $0xf8] sm:$0xff]
  %3188 = vset.pattern.permute.xlu0 0
  %3189 = vperm.xlu0 %3188, %v3155
  %v3190 = vpop.permute.xlu0 %3189
  %3193 = vset.pattern.permute.xlu0 0
  %3194 = vperm.xlu0 %3193, %v3156
  %v3195 = vpop.permute.xlu0 %3194
  %3198 = vset.pattern.permute.xlu0 0
  %3199 = vperm.xlu0 %3198, %v3157
  %v3200 = vpop.permute.xlu0 %3199
  %3203 = vset.pattern.permute.xlu0 0
  %3204 = vperm.xlu0 %3203, %v3158
  %v3205 = vpop.permute.xlu0 %3204
  %3208 = vset.pattern.permute.xlu0 0
  %3209 = vperm.xlu0 %3208, %v3159
  %v3210 = vpop.permute.xlu0 %3209
  %3213 = vset.pattern.permute.xlu0 0
  %3214 = vperm.xlu0 %3213, %v3160
  %v3215 = vpop.permute.xlu0 %3214
  %3218 = vset.pattern.permute.xlu0 0
  %3219 = vperm.xlu0 %3218, %v3161
  %v3220 = vpop.permute.xlu0 %3219
  %3223 = vset.pattern.permute.xlu0 0
  %3224 = vperm.xlu0 %3223, %v3162
  %v3225 = vpop.permute.xlu0 %3224
  %3228 = vset.pattern.permute.xlu0 0
  %3229 = vperm.xlu0 %3228, %v3163
  %v3230 = vpop.permute.xlu0 %3229
  %3233 = vset.pattern.permute.xlu0 0
  %3234 = vperm.xlu0 %3233, %v3164
  %v3235 = vpop.permute.xlu0 %3234
  %3238 = vset.pattern.permute.xlu0 0
  %3239 = vperm.xlu0 %3238, %v3165
  %v3240 = vpop.permute.xlu0 %3239
  %3243 = vset.pattern.permute.xlu0 0
  %3244 = vperm.xlu0 %3243, %v3166
  %v3245 = vpop.permute.xlu0 %3244
  %3248 = vset.pattern.permute.xlu0 0
  %3249 = vperm.xlu0 %3248, %v3167
  %v3250 = vpop.permute.xlu0 %3249
  %3253 = vset.pattern.permute.xlu0 0
  %3254 = vperm.xlu0 %3253, %v3168
  %v3255 = vpop.permute.xlu0 %3254
  %3258 = vset.pattern.permute.xlu0 0
  %3259 = vperm.xlu0 %3258, %v3169
  %v3260 = vpop.permute.xlu0 %3259
  %3263 = vset.pattern.permute.xlu0 0
  %3264 = vperm.xlu0 %3263, %v3170
  %v3265 = vpop.permute.xlu0 %3264
  %3268 = vset.pattern.permute.xlu0 0
  %3269 = vperm.xlu0 %3268, %v3171
  %v3270 = vpop.permute.xlu0 %3269
  %3273 = vset.pattern.permute.xlu0 0
  %3274 = vperm.xlu0 %3273, %v3172
  %v3275 = vpop.permute.xlu0 %3274
  %3278 = vset.pattern.permute.xlu0 0
  %3279 = vperm.xlu0 %3278, %v3173
  %v3280 = vpop.permute.xlu0 %3279
  %3283 = vset.pattern.permute.xlu0 0
  %3284 = vperm.xlu0 %3283, %v3174
  %v3285 = vpop.permute.xlu0 %3284
  %3288 = vset.pattern.permute.xlu0 0
  %3289 = vperm.xlu0 %3288, %v3175
  %v3290 = vpop.permute.xlu0 %3289
  %3293 = vset.pattern.permute.xlu0 0
  %3294 = vperm.xlu0 %3293, %v3176
  %v3295 = vpop.permute.xlu0 %3294
  %3298 = vset.pattern.permute.xlu0 0
  %3299 = vperm.xlu0 %3298, %v3177
  %v3300 = vpop.permute.xlu0 %3299
  %3303 = vset.pattern.permute.xlu0 0
  %3304 = vperm.xlu0 %3303, %v3178
  %v3305 = vpop.permute.xlu0 %3304
  %3308 = vset.pattern.permute.xlu0 0
  %3309 = vperm.xlu0 %3308, %v3179
  %v3310 = vpop.permute.xlu0 %3309
  %3313 = vset.pattern.permute.xlu0 0
  %3314 = vperm.xlu0 %3313, %v3180
  %v3315 = vpop.permute.xlu0 %3314
  %3318 = vset.pattern.permute.xlu0 0
  %3319 = vperm.xlu0 %3318, %v3181
  %v3320 = vpop.permute.xlu0 %3319
  %3323 = vset.pattern.permute.xlu0 0
  %3324 = vperm.xlu0 %3323, %v3182
  %v3325 = vpop.permute.xlu0 %3324
  %3328 = vset.pattern.permute.xlu0 0
  %3329 = vperm.xlu0 %3328, %v3183
  %v3330 = vpop.permute.xlu0 %3329
  %3333 = vset.pattern.permute.xlu0 0
  %3334 = vperm.xlu0 %3333, %v3184
  %v3335 = vpop.permute.xlu0 %3334
  %3338 = vset.pattern.permute.xlu0 0
  %3339 = vperm.xlu0 %3338, %v3185
  %v3340 = vpop.permute.xlu0 %3339
  %3343 = vset.pattern.permute.xlu0 0
  %3344 = vperm.xlu0 %3343, %v3186
  %v3345 = vpop.permute.xlu0 %3344
  %v3379 = vunpack.c.l.b16 %v2995
  %v3380 = vunpack.c.h.b16 %v2995
  %v3381 = vunpack.c.l.b16 %v2996
  %v3382 = vunpack.c.h.b16 %v2996
  %v3383 = vunpack.c.l.b16 %v2997
  %v3384 = vunpack.c.h.b16 %v2997
  %v3385 = vunpack.c.l.b16 %v2998
  %v3386 = vunpack.c.h.b16 %v2998
  %v3387 = vunpack.c.l.b16 %v2999
  %v3388 = vunpack.c.h.b16 %v2999
  %v3389 = vunpack.c.l.b16 %v3000
  %v3390 = vunpack.c.h.b16 %v3000
  %v3391 = vunpack.c.l.b16 %v3001
  %v3392 = vunpack.c.h.b16 %v3001
  %v3393 = vunpack.c.l.b16 %v3002
  %v3394 = vunpack.c.h.b16 %v3002
  %v3395 = vunpack.c.l.b16 %v3003
  %v3396 = vunpack.c.h.b16 %v3003
  %v3397 = vunpack.c.l.b16 %v3004
  %v3398 = vunpack.c.h.b16 %v3004
  %v3399 = vunpack.c.l.b16 %v3005
  %v3400 = vunpack.c.h.b16 %v3005
  %v3401 = vunpack.c.l.b16 %v3006
  %v3402 = vunpack.c.h.b16 %v3006
  %v3403 = vunpack.c.l.b16 %v3007
  %v3404 = vunpack.c.h.b16 %v3007
  %v3405 = vunpack.c.l.b16 %v3008
  %v3406 = vunpack.c.h.b16 %v3008
  %v3407 = vunpack.c.l.b16 %v3009
  %v3408 = vunpack.c.h.b16 %v3009
  %v3409 = vunpack.c.l.b16 %v3010
  %v3410 = vunpack.c.h.b16 %v3010
  %v3411 = vunpack.c.l.b16 %v3011
  %v3412 = vunpack.c.h.b16 %v3011
  %v3413 = vunpack.c.l.b16 %v3012
  %v3414 = vunpack.c.h.b16 %v3012
  %v3415 = vunpack.c.l.b16 %v3013
  %v3416 = vunpack.c.h.b16 %v3013
  %v3417 = vunpack.c.l.b16 %v3014
  %v3418 = vunpack.c.h.b16 %v3014
  %v3419 = vunpack.c.l.b16 %v3015
  %v3420 = vunpack.c.h.b16 %v3015
  %v3421 = vunpack.c.l.b16 %v3016
  %v3422 = vunpack.c.h.b16 %v3016
  %v3423 = vunpack.c.l.b16 %v3017
  %v3424 = vunpack.c.h.b16 %v3017
  %v3425 = vunpack.c.l.b16 %v3018
  %v3426 = vunpack.c.h.b16 %v3018
  %v3427 = vunpack.c.l.b16 %v3019
  %v3428 = vunpack.c.h.b16 %v3019
  %v3429 = vunpack.c.l.b16 %v3020
  %v3430 = vunpack.c.h.b16 %v3020
  %v3431 = vunpack.c.l.b16 %v3021
  %v3432 = vunpack.c.h.b16 %v3021
  %v3433 = vunpack.c.l.b16 %v3022
  %v3434 = vunpack.c.h.b16 %v3022
  %v3435 = vunpack.c.l.b16 %v3023
  %v3436 = vunpack.c.h.b16 %v3023
  %v3437 = vunpack.c.l.b16 %v3024
  %v3438 = vunpack.c.h.b16 %v3024
  %v3439 = vunpack.c.l.b16 %v3025
  %v3440 = vunpack.c.h.b16 %v3025
  %v3441 = vunpack.c.l.b16 %v3026
  %v3442 = vunpack.c.h.b16 %v3026
  %v3443 = vpack.c.b16 %v3381, %v3379
  %v3444 = vpack.c.b16 %v3382, %v3380
  %v3445 = vpack.c.b16 %v3385, %v3383
  %v3446 = vpack.c.b16 %v3386, %v3384
  %v3447 = vpack.c.b16 %v3389, %v3387
  %v3448 = vpack.c.b16 %v3390, %v3388
  %v3449 = vpack.c.b16 %v3393, %v3391
  %v3450 = vpack.c.b16 %v3394, %v3392
  %v3451 = vpack.c.b16 %v3397, %v3395
  %v3452 = vpack.c.b16 %v3398, %v3396
  %v3453 = vpack.c.b16 %v3401, %v3399
  %v3454 = vpack.c.b16 %v3402, %v3400
  %v3455 = vpack.c.b16 %v3405, %v3403
  %v3456 = vpack.c.b16 %v3406, %v3404
  %v3457 = vpack.c.b16 %v3409, %v3407
  %v3458 = vpack.c.b16 %v3410, %v3408
  %v3459 = vpack.c.b16 %v3413, %v3411
  %v3460 = vpack.c.b16 %v3414, %v3412
  %v3461 = vpack.c.b16 %v3417, %v3415
  %v3462 = vpack.c.b16 %v3418, %v3416
  %v3463 = vpack.c.b16 %v3421, %v3419
  %v3464 = vpack.c.b16 %v3422, %v3420
  %v3465 = vpack.c.b16 %v3425, %v3423
  %v3466 = vpack.c.b16 %v3426, %v3424
  %v3467 = vpack.c.b16 %v3429, %v3427
  %v3468 = vpack.c.b16 %v3430, %v3428
  %v3469 = vpack.c.b16 %v3433, %v3431
  %v3470 = vpack.c.b16 %v3434, %v3432
  %v3471 = vpack.c.b16 %v3437, %v3435
  %v3472 = vpack.c.b16 %v3438, %v3436
  %v3473 = vpack.c.b16 %v3441, %v3439
  %v3474 = vpack.c.b16 %v3442, %v3440
  %3507 = vmatprep.subr.bf16.mxu0 %v3028
  %3508 = vmatpush1.bf16.msra.mxu0 %v3027
  %3509 = vmatprep.subr.bf16.mxu0 %v3036
  %3510 = vmatpush1.bf16.msra.mxu0 %v3035
  %3511 = vmatprep.subr.bf16.mxu0 %v3044
  %3512 = vmatpush1.bf16.msra.mxu0 %v3043
  %3513 = vmatprep.subr.bf16.mxu0 %v3052
  %3514 = vmatpush1.bf16.msra.mxu0 %v3051
  %3515 = vmatprep.subr.bf16.mxu0 %v3060
  %3516 = vmatpush1.bf16.msra.mxu0 %v3059
  %3517 = vmatprep.subr.bf16.mxu0 %v3068
  %3518 = vmatpush1.bf16.msra.mxu0 %v3067
  %3519 = vmatprep.subr.bf16.mxu0 %v3076
  %3520 = vmatpush1.bf16.msra.mxu0 %v3075
  %3521 = vmatprep.subr.bf16.mxu0 %v3084
  %3522 = vmatpush1.bf16.msra.mxu0 %v3083
  %3523 = vmatprep.subr.bf16.mxu0 %v3092
  %3524 = vmatpush1.bf16.msra.mxu0 %v3091
  %3525 = vmatprep.subr.bf16.mxu0 %v3100
  %3526 = vmatpush1.bf16.msra.mxu0 %v3099
  %3527 = vmatprep.subr.bf16.mxu0 %v3108
  %3528 = vmatpush1.bf16.msra.mxu0 %v3107
  %3529 = vmatprep.subr.bf16.mxu0 %v3116
  %3530 = vmatpush1.bf16.msra.mxu0 %v3115
  %3531 = vmatprep.subr.bf16.mxu0 %v3124
  %3532 = vmatpush1.bf16.msra.mxu0 %v3123
  %3533 = vmatprep.subr.bf16.mxu0 %v3132
  %3534 = vmatpush1.bf16.msra.mxu0 %v3131
  %3535 = vmatprep.subr.bf16.mxu0 %v3140
  %3536 = vmatpush1.bf16.msra.mxu0 %v3139
  %3537 = vmatprep.subr.bf16.mxu0 %v3148
  %3538 = vmatpush1.bf16.msra.mxu0 %v3147
  %3539 = vmatprep.mubr.bf16.mxu0 %v3444
  %3540 = vmatmul.mubr.bf16.gmra.mrb[0].mxu0 %v3443
  %v3541 = vpop.f32.mrb[0].mxu0
  %v3542 = vadd.f32 %v3190, %v3541
  %v3543 = vpop.f32.mrb[0].mxu0
  %v3544 = vadd.f32 %v3190, %v3543
  %v3545 = vpop.f32.mrb[0].mxu0
  %v3546 = vadd.f32 %v3195, %v3545
  %v3547 = vpop.f32.mrb[0].mxu0
  %v3548 = vadd.f32 %v3195, %v3547
  %3549 = vmatprep.mubr.bf16.mxu0 %v3446
  %3550 = vmatmul.mubr.bf16.gmra.mrb[0].mxu0 %v3445
  %v3551 = vpop.f32.mrb[0].mxu0
  %v3552 = vadd.f32 %v3200, %v3551
  %v3553 = vpop.f32.mrb[0].mxu0
  %v3554 = vadd.f32 %v3200, %v3553
  %v3555 = vpop.f32.mrb[0].mxu0
  %v3556 = vadd.f32 %v3205, %v3555
  %v3557 = vpop.f32.mrb[0].mxu0
  %v3558 = vadd.f32 %v3205, %v3557
  %3559 = vmatprep.mubr.bf16.mxu0 %v3448
  %3560 = vmatmul.mubr.bf16.gmra.mrb[0].mxu0 %v3447
  %v3561 = vpop.f32.mrb[0].mxu0
  %v3562 = vadd.f32 %v3210, %v3561
  %v3563 = vpop.f32.mrb[0].mxu0
  %v3564 = vadd.f32 %v3210, %v3563
  %v3565 = vpop.f32.mrb[0].mxu0
  %v3566 = vadd.f32 %v3215, %v3565
  %v3567 = vpop.f32.mrb[0].mxu0
  %v3568 = vadd.f32 %v3215, %v3567
  %3569 = vmatprep.mubr.bf16.mxu0 %v3450
  %3570 = vmatmul.mubr.bf16.gmra.mrb[0].mxu0 %v3449
  %v3571 = vpop.f32.mrb[0].mxu0
  %v3572 = vadd.f32 %v3220, %v3571
  %v3573 = vpop.f32.mrb[0].mxu0
  %v3574 = vadd.f32 %v3220, %v3573
  %v3575 = vpop.f32.mrb[0].mxu0
  %v3576 = vadd.f32 %v3225, %v3575
  %v3577 = vpop.f32.mrb[0].mxu0
  %v3578 = vadd.f32 %v3225, %v3577
  %3579 = vmatprep.mubr.bf16.mxu0 %v3452
  %3580 = vmatmul.mubr.bf16.gmra.mrb[0].mxu0 %v3451
  %v3581 = vpop.f32.mrb[0].mxu0
  %v3582 = vadd.f32 %v3230, %v3581
  %v3583 = vpop.f32.mrb[0].mxu0
  %v3584 = vadd.f32 %v3230, %v3583
  %v3585 = vpop.f32.mrb[0].mxu0
  %v3586 = vadd.f32 %v3235, %v3585
  %v3587 = vpop.f32.mrb[0].mxu0
  %v3588 = vadd.f32 %v3235, %v3587
  %3589 = vmatprep.mubr.bf16.mxu0 %v3454
  %3590 = vmatmul.mubr.bf16.gmra.mrb[0].mxu0 %v3453
  %v3591 = vpop.f32.mrb[0].mxu0
  %v3592 = vadd.f32 %v3240, %v3591
  %v3593 = vpop.f32.mrb[0].mxu0
  %v3594 = vadd.f32 %v3240, %v3593
  %v3595 = vpop.f32.mrb[0].mxu0
  %v3596 = vadd.f32 %v3245, %v3595
  %v3597 = vpop.f32.mrb[0].mxu0
  %v3598 = vadd.f32 %v3245, %v3597
  %3599 = vmatprep.mubr.bf16.mxu0 %v3456
  %3600 = vmatmul.mubr.bf16.gmra.mrb[0].mxu0 %v3455
  %v3601 = vpop.f32.mrb[0].mxu0
  %v3602 = vadd.f32 %v3250, %v3601
  %v3603 = vpop.f32.mrb[0].mxu0
  %v3604 = vadd.f32 %v3250, %v3603
  %v3605 = vpop.f32.mrb[0].mxu0
  %v3606 = vadd.f32 %v3255, %v3605
  %v3607 = vpop.f32.mrb[0].mxu0
  %v3608 = vadd.f32 %v3255, %v3607
  %3609 = vmatprep.mubr.bf16.mxu0 %v3458
  %3610 = vmatmul.mubr.bf16.gmra.mrb[0].mxu0 %v3457
  %v3611 = vpop.f32.mrb[0].mxu0
  %v3612 = vadd.f32 %v3260, %v3611
  %v3613 = vpop.f32.mrb[0].mxu0
  %v3614 = vadd.f32 %v3260, %v3613
  %v3615 = vpop.f32.mrb[0].mxu0
  %v3616 = vadd.f32 %v3265, %v3615
  %v3617 = vpop.f32.mrb[0].mxu0
  %v3618 = vadd.f32 %v3265, %v3617
  %3619 = vmatprep.mubr.bf16.mxu0 %v3460
  %3620 = vmatmul.mubr.bf16.gmra.mrb[0].mxu0 %v3459
  %v3621 = vpop.f32.mrb[0].mxu0
  %v3622 = vadd.f32 %v3270, %v3621
  %v3623 = vpop.f32.mrb[0].mxu0
  %v3624 = vadd.f32 %v3270, %v3623
  %v3625 = vpop.f32.mrb[0].mxu0
  %v3626 = vadd.f32 %v3275, %v3625
  %v3627 = vpop.f32.mrb[0].mxu0
  %v3628 = vadd.f32 %v3275, %v3627
  %3629 = vmatprep.mubr.bf16.mxu0 %v3462
  %3630 = vmatmul.mubr.bf16.gmra.mrb[0].mxu0 %v3461
  %v3631 = vpop.f32.mrb[0].mxu0
  %v3632 = vadd.f32 %v3280, %v3631
  %v3633 = vpop.f32.mrb[0].mxu0
  %v3634 = vadd.f32 %v3280, %v3633
  %v3635 = vpop.f32.mrb[0].mxu0
  %v3636 = vadd.f32 %v3285, %v3635
  %v3637 = vpop.f32.mrb[0].mxu0
  %v3638 = vadd.f32 %v3285, %v3637
  %3639 = vmatprep.mubr.bf16.mxu0 %v3464
  %3640 = vmatmul.mubr.bf16.gmra.mrb[0].mxu0 %v3463
  %v3641 = vpop.f32.mrb[0].mxu0
  %v3642 = vadd.f32 %v3290, %v3641
  %v3643 = vpop.f32.mrb[0].mxu0
  %v3644 = vadd.f32 %v3290, %v3643
  %v3645 = vpop.f32.mrb[0].mxu0
  %v3646 = vadd.f32 %v3295, %v3645
  %v3647 = vpop.f32.mrb[0].mxu0
  %v3648 = vadd.f32 %v3295, %v3647
  %3649 = vmatprep.mubr.bf16.mxu0 %v3466
  %3650 = vmatmul.mubr.bf16.gmra.mrb[0].mxu0 %v3465
  %v3651 = vpop.f32.mrb[0].mxu0
  %v3652 = vadd.f32 %v3300, %v3651
  %v3653 = vpop.f32.mrb[0].mxu0
  %v3654 = vadd.f32 %v3300, %v3653
  %v3655 = vpop.f32.mrb[0].mxu0
  %v3656 = vadd.f32 %v3305, %v3655
  %v3657 = vpop.f32.mrb[0].mxu0
  %v3658 = vadd.f32 %v3305, %v3657
  %3659 = vmatprep.mubr.bf16.mxu0 %v3468
  %3660 = vmatmul.mubr.bf16.gmra.mrb[0].mxu0 %v3467
  %v3661 = vpop.f32.mrb[0].mxu0
  %v3662 = vadd.f32 %v3310, %v3661
  %v3663 = vpop.f32.mrb[0].mxu0
  %v3664 = vadd.f32 %v3310, %v3663
  %v3665 = vpop.f32.mrb[0].mxu0
  %v3666 = vadd.f32 %v3315, %v3665
  %v3667 = vpop.f32.mrb[0].mxu0
  %v3668 = vadd.f32 %v3315, %v3667
  %3669 = vmatprep.mubr.bf16.mxu0 %v3470
  %3670 = vmatmul.mubr.bf16.gmra.mrb[0].mxu0 %v3469
  %v3671 = vpop.f32.mrb[0].mxu0
  %v3672 = vadd.f32 %v3320, %v3671
  %v3673 = vpop.f32.mrb[0].mxu0
  %v3674 = vadd.f32 %v3320, %v3673
  %v3675 = vpop.f32.mrb[0].mxu0
  %v3676 = vadd.f32 %v3325, %v3675
  %v3677 = vpop.f32.mrb[0].mxu0
  %v3678 = vadd.f32 %v3325, %v3677
  %3679 = vmatprep.mubr.bf16.mxu0 %v3472
  %3680 = vmatmul.mubr.bf16.gmra.mrb[0].mxu0 %v3471
  %v3681 = vpop.f32.mrb[0].mxu0
  %v3682 = vadd.f32 %v3330, %v3681
  %v3683 = vpop.f32.mrb[0].mxu0
  %v3684 = vadd.f32 %v3330, %v3683
  %v3685 = vpop.f32.mrb[0].mxu0
  %v3686 = vadd.f32 %v3335, %v3685
  %v3687 = vpop.f32.mrb[0].mxu0
  %v3688 = vadd.f32 %v3335, %v3687
  %3689 = vmatprep.mubr.bf16.mxu0 %v3474
  %3690 = vmatmul.mubr.bf16.gmra.mrb[0].mxu0 %v3473
  %v3691 = vpop.f32.mrb[0].mxu0
  %v3692 = vadd.f32 %v3340, %v3691
  %v3693 = vpop.f32.mrb[0].mxu0
  %v3694 = vadd.f32 %v3340, %v3693
  %v3695 = vpop.f32.mrb[0].mxu0
  %v3696 = vadd.f32 %v3345, %v3695
  %v3697 = vpop.f32.mrb[0].mxu0
  %v3698 = vadd.f32 %v3345, %v3697
  %3699 = vdwg.mxu0
  %3700 = vmatprep.subr.bf16.mxu0 %v3030
  %3701 = vmatpush1.bf16.msra.mxu0 %v3029
  %3702 = vmatprep.subr.bf16.mxu0 %v3038
  %3703 = vmatpush1.bf16.msra.mxu0 %v3037
  %3704 = vmatprep.subr.bf16.mxu0 %v3046
  %3705 = vmatpush1.bf16.msra.mxu0 %v3045
  %3706 = vmatprep.subr.bf16.mxu0 %v3054
  %3707 = vmatpush1.bf16.msra.mxu0 %v3053
  %3708 = vmatprep.subr.bf16.mxu0 %v3062
  %3709 = vmatpush1.bf16.msra.mxu0 %v3061
  %3710 = vmatprep.subr.bf16.mxu0 %v3070
  %3711 = vmatpush1.bf16.msra.mxu0 %v3069
  %3712 = vmatprep.subr.bf16.mxu0 %v3078
  %3713 = vmatpush1.bf16.msra.mxu0 %v3077
  %3714 = vmatprep.subr.bf16.mxu0 %v3086
  %3715 = vmatpush1.bf16.msra.mxu0 %v3085
  %3716 = vmatprep.subr.bf16.mxu0 %v3094
  %3717 = vmatpush1.bf16.msra.mxu0 %v3093
  %3718 = vmatprep.subr.bf16.mxu0 %v3102
  %3719 = vmatpush1.bf16.msra.mxu0 %v3101
  %3720 = vmatprep.subr.bf16.mxu0 %v3110
  %3721 = vmatpush1.bf16.msra.mxu0 %v3109
  %3722 = vmatprep.subr.bf16.mxu0 %v3118
  %3723 = vmatpush1.bf16.msra.mxu0 %v3117
  %3724 = vmatprep.subr.bf16.mxu0 %v3126
  %3725 = vmatpush1.bf16.msra.mxu0 %v3125
  %3726 = vmatprep.subr.bf16.mxu0 %v3134
  %3727 = vmatpush1.bf16.msra.mxu0 %v3133
  %3728 = vmatprep.subr.bf16.mxu0 %v3142
  %3729 = vmatpush1.bf16.msra.mxu0 %v3141
  %3730 = vmatprep.subr.bf16.mxu0 %v3150
  %3731 = vmatpush1.bf16.msra.mxu0 %v3149
  %3732 = vmatprep.mubr.bf16.mxu0 %v3444
  %3733 = vmatmul.mubr.bf16.gmra.mrb[0].mxu0 %v3443
  %v3734 = vpop.f32.mrb[0].mxu0
  %v3735 = vadd.f32 %v3190, %v3734
  %v3736 = vpop.f32.mrb[0].mxu0
  %v3737 = vadd.f32 %v3190, %v3736
  %v3738 = vpop.f32.mrb[0].mxu0
  %v3739 = vadd.f32 %v3195, %v3738
  %v3740 = vpop.f32.mrb[0].mxu0
  %v3741 = vadd.f32 %v3195, %v3740
  %3742 = vmatprep.mubr.bf16.mxu0 %v3446
  %3743 = vmatmul.mubr.bf16.gmra.mrb[0].mxu0 %v3445
  %v3744 = vpop.f32.mrb[0].mxu0
  %v3745 = vadd.f32 %v3200, %v3744
  %v3746 = vpop.f32.mrb[0].mxu0
  %v3747 = vadd.f32 %v3200, %v3746
  %v3748 = vpop.f32.mrb[0].mxu0
  %v3749 = vadd.f32 %v3205, %v3748
  %v3750 = vpop.f32.mrb[0].mxu0
  %v3751 = vadd.f32 %v3205, %v3750
  %3752 = vmatprep.mubr.bf16.mxu0 %v3448
  %3753 = vmatmul.mubr.bf16.gmra.mrb[0].mxu0 %v3447
  %v3754 = vpop.f32.mrb[0].mxu0
  %v3755 = vadd.f32 %v3210, %v3754
  %v3756 = vpop.f32.mrb[0].mxu0
  %v3757 = vadd.f32 %v3210, %v3756
  %v3758 = vpop.f32.mrb[0].mxu0
  %v3759 = vadd.f32 %v3215, %v3758
  %v3760 = vpop.f32.mrb[0].mxu0
  %v3761 = vadd.f32 %v3215, %v3760
  %3762 = vmatprep.mubr.bf16.mxu0 %v3450
  %3763 = vmatmul.mubr.bf16.gmra.mrb[0].mxu0 %v3449
  %v3764 = vpop.f32.mrb[0].mxu0
  %v3765 = vadd.f32 %v3220, %v3764
  %v3766 = vpop.f32.mrb[0].mxu0
  %v3767 = vadd.f32 %v3220, %v3766
  %v3768 = vpop.f32.mrb[0].mxu0
  %v3769 = vadd.f32 %v3225, %v3768
  %v3770 = vpop.f32.mrb[0].mxu0
  %v3771 = vadd.f32 %v3225, %v3770
  %3772 = vmatprep.mubr.bf16.mxu0 %v3452
  %3773 = vmatmul.mubr.bf16.gmra.mrb[0].mxu0 %v3451
  %v3774 = vpop.f32.mrb[0].mxu0
  %v3775 = vadd.f32 %v3230, %v3774
  %v3776 = vpop.f32.mrb[0].mxu0
  %v3777 = vadd.f32 %v3230, %v3776
  %v3778 = vpop.f32.mrb[0].mxu0
  %v3779 = vadd.f32 %v3235, %v3778
  %v3780 = vpop.f32.mrb[0].mxu0
  %v3781 = vadd.f32 %v3235, %v3780
  %3782 = vmatprep.mubr.bf16.mxu0 %v3454
  %3783 = vmatmul.mubr.bf16.gmra.mrb[0].mxu0 %v3453
  %v3784 = vpop.f32.mrb[0].mxu0
  %v3785 = vadd.f32 %v3240, %v3784
  %v3786 = vpop.f32.mrb[0].mxu0
  %v3787 = vadd.f32 %v3240, %v3786
  %v3788 = vpop.f32.mrb[0].mxu0
  %v3789 = vadd.f32 %v3245, %v3788
  %v3790 = vpop.f32.mrb[0].mxu0
  %v3791 = vadd.f32 %v3245, %v3790
  %3792 = vmatprep.mubr.bf16.mxu0 %v3456
  %3793 = vmatmul.mubr.bf16.gmra.mrb[0].mxu0 %v3455
  %v3794 = vpop.f32.mrb[0].mxu0
  %v3795 = vadd.f32 %v3250, %v3794
  %v3796 = vpop.f32.mrb[0].mxu0
  %v3797 = vadd.f32 %v3250, %v3796
  %v3798 = vpop.f32.mrb[0].mxu0
  %v3799 = vadd.f32 %v3255, %v3798
  %v3800 = vpop.f32.mrb[0].mxu0
  %v3801 = vadd.f32 %v3255, %v3800
  %3802 = vmatprep.mubr.bf16.mxu0 %v3458
  %3803 = vmatmul.mubr.bf16.gmra.mrb[0].mxu0 %v3457
  %v3804 = vpop.f32.mrb[0].mxu0
  %v3805 = vadd.f32 %v3260, %v3804
  %v3806 = vpop.f32.mrb[0].mxu0
  %v3807 = vadd.f32 %v3260, %v3806
  %v3808 = vpop.f32.mrb[0].mxu0
  %v3809 = vadd.f32 %v3265, %v3808
  %v3810 = vpop.f32.mrb[0].mxu0
  %v3811 = vadd.f32 %v3265, %v3810
  %3812 = vmatprep.mubr.bf16.mxu0 %v3460
  %3813 = vmatmul.mubr.bf16.gmra.mrb[0].mxu0 %v3459
  %v3814 = vpop.f32.mrb[0].mxu0
  %v3815 = vadd.f32 %v3270, %v3814
  %v3816 = vpop.f32.mrb[0].mxu0
  %v3817 = vadd.f32 %v3270, %v3816
  %v3818 = vpop.f32.mrb[0].mxu0
  %v3819 = vadd.f32 %v3275, %v3818
  %v3820 = vpop.f32.mrb[0].mxu0
  %v3821 = vadd.f32 %v3275, %v3820
  %3822 = vmatprep.mubr.bf16.mxu0 %v3462
  %3823 = vmatmul.mubr.bf16.gmra.mrb[0].mxu0 %v3461
  %v3824 = vpop.f32.mrb[0].mxu0
  %v3825 = vadd.f32 %v3280, %v3824
  %v3826 = vpop.f32.mrb[0].mxu0
  %v3827 = vadd.f32 %v3280, %v3826
  %v3828 = vpop.f32.mrb[0].mxu0
  %v3829 = vadd.f32 %v3285, %v3828
  %v3830 = vpop.f32.mrb[0].mxu0
  %v3831 = vadd.f32 %v3285, %v3830
  %3832 = vmatprep.mubr.bf16.mxu0 %v3464
  %3833 = vmatmul.mubr.bf16.gmra.mrb[0].mxu0 %v3463
  %v3834 = vpop.f32.mrb[0].mxu0
  %v3835 = vadd.f32 %v3290, %v3834
  %v3836 = vpop.f32.mrb[0].mxu0
  %v3837 = vadd.f32 %v3290, %v3836
  %v3838 = vpop.f32.mrb[0].mxu0
  %v3839 = vadd.f32 %v3295, %v3838
  %v3840 = vpop.f32.mrb[0].mxu0
  %v3841 = vadd.f32 %v3295, %v3840
  %3842 = vmatprep.mubr.bf16.mxu0 %v3466
  %3843 = vmatmul.mubr.bf16.gmra.mrb[0].mxu0 %v3465
  %v3844 = vpop.f32.mrb[0].mxu0
  %v3845 = vadd.f32 %v3300, %v3844
  %v3846 = vpop.f32.mrb[0].mxu0
  %v3847 = vadd.f32 %v3300, %v3846
  %v3848 = vpop.f32.mrb[0].mxu0
  %v3849 = vadd.f32 %v3305, %v3848
  %v3850 = vpop.f32.mrb[0].mxu0
  %v3851 = vadd.f32 %v3305, %v3850
  %3852 = vmatprep.mubr.bf16.mxu0 %v3468
  %3853 = vmatmul.mubr.bf16.gmra.mrb[0].mxu0 %v3467
  %v3854 = vpop.f32.mrb[0].mxu0
  %v3855 = vadd.f32 %v3310, %v3854
  %v3856 = vpop.f32.mrb[0].mxu0
  %v3857 = vadd.f32 %v3310, %v3856
  %v3858 = vpop.f32.mrb[0].mxu0
  %v3859 = vadd.f32 %v3315, %v3858
  %v3860 = vpop.f32.mrb[0].mxu0
  %v3861 = vadd.f32 %v3315, %v3860
  %3862 = vmatprep.mubr.bf16.mxu0 %v3470
  %3863 = vmatmul.mubr.bf16.gmra.mrb[0].mxu0 %v3469
  %v3864 = vpop.f32.mrb[0].mxu0
  %v3865 = vadd.f32 %v3320, %v3864
  %v3866 = vpop.f32.mrb[0].mxu0
  %v3867 = vadd.f32 %v3320, %v3866
  %v3868 = vpop.f32.mrb[0].mxu0
  %v3869 = vadd.f32 %v3325, %v3868
  %v3870 = vpop.f32.mrb[0].mxu0
  %v3871 = vadd.f32 %v3325, %v3870
  %3872 = vmatprep.mubr.bf16.mxu0 %v3472
  %3873 = vmatmul.mubr.bf16.gmra.mrb[0].mxu0 %v3471
  %v3874 = vpop.f32.mrb[0].mxu0
  %v3875 = vadd.f32 %v3330, %v3874
  %v3876 = vpop.f32.mrb[0].mxu0
  %v3877 = vadd.f32 %v3330, %v3876
  %v3878 = vpop.f32.mrb[0].mxu0
  %v3879 = vadd.f32 %v3335, %v3878
  %v3880 = vpop.f32.mrb[0].mxu0
  %v3881 = vadd.f32 %v3335, %v3880
  %3882 = vmatprep.mubr.bf16.mxu0 %v3474
  %3883 = vmatmul.mubr.bf16.gmra.mrb[0].mxu0 %v3473
  %v3884 = vpop.f32.mrb[0].mxu0
  %v3885 = vadd.f32 %v3340, %v3884
  %v3886 = vpop.f32.mrb[0].mxu0
  %v3887 = vadd.f32 %v3340, %v3886
  %v3888 = vpop.f32.mrb[0].mxu0
  %v3889 = vadd.f32 %v3345, %v3888
  %v3890 = vpop.f32.mrb[0].mxu0
  %v3891 = vadd.f32 %v3345, %v3890
  %3892 = vdwg.mxu0
  %3893 = vmatprep.subr.bf16.mxu0 %v3032
  %3894 = vmatpush1.bf16.msra.mxu0 %v3031
  %3895 = vmatprep.subr.bf16.mxu0 %v3040
  %3896 = vmatpush1.bf16.msra.mxu0 %v3039
  %3897 = vmatprep.subr.bf16.mxu0 %v3048
  %3898 = vmatpush1.bf16.msra.mxu0 %v3047
  %3899 = vmatprep.subr.bf16.mxu0 %v3056
  %3900 = vmatpush1.bf16.msra.mxu0 %v3055
  %3901 = vmatprep.subr.bf16.mxu0 %v3064
  %3902 = vmatpush1.bf16.msra.mxu0 %v3063
  %3903 = vmatprep.subr.bf16.mxu0 %v3072
  %3904 = vmatpush1.bf16.msra.mxu0 %v3071
  %3905 = vmatprep.subr.bf16.mxu0 %v3080
  %3906 = vmatpush1.bf16.msra.mxu0 %v3079
  %3907 = vmatprep.subr.bf16.mxu0 %v3088
  %3908 = vmatpush1.bf16.msra.mxu0 %v3087
  %3909 = vmatprep.subr.bf16.mxu0 %v3096
  %3910 = vmatpush1.bf16.msra.mxu0 %v3095
  %3911 = vmatprep.subr.bf16.mxu0 %v3104
  %3912 = vmatpush1.bf16.msra.mxu0 %v3103
  %3913 = vmatprep.subr.bf16.mxu0 %v3112
  %3914 = vmatpush1.bf16.msra.mxu0 %v3111
  %3915 = vmatprep.subr.bf16.mxu0 %v3120
  %3916 = vmatpush1.bf16.msra.mxu0 %v3119
  %3917 = vmatprep.subr.bf16.mxu0 %v3128
  %3918 = vmatpush1.bf16.msra.mxu0 %v3127
  %3919 = vmatprep.subr.bf16.mxu0 %v3136
  %3920 = vmatpush1.bf16.msra.mxu0 %v3135
  %3921 = vmatprep.subr.bf16.mxu0 %v3144
  %3922 = vmatpush1.bf16.msra.mxu0 %v3143
  %3923 = vmatprep.subr.bf16.mxu0 %v3152
  %3924 = vmatpush1.bf16.msra.mxu0 %v3151
  %3925 = vmatprep.mubr.bf16.mxu0 %v3444
  %3926 = vmatmul.mubr.bf16.gmra.mrb[0].mxu0 %v3443
  %v3927 = vpop.f32.mrb[0].mxu0
  %v3928 = vadd.f32 %v3190, %v3927
  %v3929 = vpop.f32.mrb[0].mxu0
  %v3930 = vadd.f32 %v3190, %v3929
  %v3931 = vpop.f32.mrb[0].mxu0
  %v3932 = vadd.f32 %v3195, %v3931
  %v3933 = vpop.f32.mrb[0].mxu0
  %v3934 = vadd.f32 %v3195, %v3933
  %3935 = vmatprep.mubr.bf16.mxu0 %v3446
  %3936 = vmatmul.mubr.bf16.gmra.mrb[0].mxu0 %v3445
  %v3937 = vpop.f32.mrb[0].mxu0
  %v3938 = vadd.f32 %v3200, %v3937
  %v3939 = vpop.f32.mrb[0].mxu0
  %v3940 = vadd.f32 %v3200, %v3939
  %v3941 = vpop.f32.mrb[0].mxu0
  %v3942 = vadd.f32 %v3205, %v3941
  %v3943 = vpop.f32.mrb[0].mxu0
  %v3944 = vadd.f32 %v3205, %v3943
  %3945 = vmatprep.mubr.bf16.mxu0 %v3448
  %3946 = vmatmul.mubr.bf16.gmra.mrb[0].mxu0 %v3447
  %v3947 = vpop.f32.mrb[0].mxu0
  %v3948 = vadd.f32 %v3210, %v3947
  %v3949 = vpop.f32.mrb[0].mxu0
  %v3950 = vadd.f32 %v3210, %v3949
  %v3951 = vpop.f32.mrb[0].mxu0
  %v3952 = vadd.f32 %v3215, %v3951
  %v3953 = vpop.f32.mrb[0].mxu0
  %v3954 = vadd.f32 %v3215, %v3953
  %3955 = vmatprep.mubr.bf16.mxu0 %v3450
  %3956 = vmatmul.mubr.bf16.gmra.mrb[0].mxu0 %v3449
  %v3957 = vpop.f32.mrb[0].mxu0
  %v3958 = vadd.f32 %v3220, %v3957
  %v3959 = vpop.f32.mrb[0].mxu0
  %v3960 = vadd.f32 %v3220, %v3959
  %v3961 = vpop.f32.mrb[0].mxu0
  %v3962 = vadd.f32 %v3225, %v3961
  %v3963 = vpop.f32.mrb[0].mxu0
  %v3964 = vadd.f32 %v3225, %v3963
  %3965 = vmatprep.mubr.bf16.mxu0 %v3452
  %3966 = vmatmul.mubr.bf16.gmra.mrb[0].mxu0 %v3451
  %v3967 = vpop.f32.mrb[0].mxu0
  %v3968 = vadd.f32 %v3230, %v3967
  %v3969 = vpop.f32.mrb[0].mxu0
  %v3970 = vadd.f32 %v3230, %v3969
  %v3971 = vpop.f32.mrb[0].mxu0
  %v3972 = vadd.f32 %v3235, %v3971
  %v3973 = vpop.f32.mrb[0].mxu0
  %v3974 = vadd.f32 %v3235, %v3973
  %3975 = vmatprep.mubr.bf16.mxu0 %v3454
  %3976 = vmatmul.mubr.bf16.gmra.mrb[0].mxu0 %v3453
  %v3977 = vpop.f32.mrb[0].mxu0
  %v3978 = vadd.f32 %v3240, %v3977
  %v3979 = vpop.f32.mrb[0].mxu0
  %v3980 = vadd.f32 %v3240, %v3979
  %v3981 = vpop.f32.mrb[0].mxu0
  %v3982 = vadd.f32 %v3245, %v3981
  %v3983 = vpop.f32.mrb[0].mxu0
  %v3984 = vadd.f32 %v3245, %v3983
  %3985 = vmatprep.mubr.bf16.mxu0 %v3456
  %3986 = vmatmul.mubr.bf16.gmra.mrb[0].mxu0 %v3455
  %v3987 = vpop.f32.mrb[0].mxu0
  %v3988 = vadd.f32 %v3250, %v3987
  %v3989 = vpop.f32.mrb[0].mxu0
  %v3990 = vadd.f32 %v3250, %v3989
  %v3991 = vpop.f32.mrb[0].mxu0
  %v3992 = vadd.f32 %v3255, %v3991
  %v3993 = vpop.f32.mrb[0].mxu0
  %v3994 = vadd.f32 %v3255, %v3993
  %3995 = vmatprep.mubr.bf16.mxu0 %v3458
  %3996 = vmatmul.mubr.bf16.gmra.mrb[0].mxu0 %v3457
  %v3997 = vpop.f32.mrb[0].mxu0
  %v3998 = vadd.f32 %v3260, %v3997
  %v3999 = vpop.f32.mrb[0].mxu0
  %v4000 = vadd.f32 %v3260, %v3999
  %v4001 = vpop.f32.mrb[0].mxu0
  %v4002 = vadd.f32 %v3265, %v4001
  %v4003 = vpop.f32.mrb[0].mxu0
  %v4004 = vadd.f32 %v3265, %v4003
  %4005 = vmatprep.mubr.bf16.mxu0 %v3460
  %4006 = vmatmul.mubr.bf16.gmra.mrb[0].mxu0 %v3459
  %v4007 = vpop.f32.mrb[0].mxu0
  %v4008 = vadd.f32 %v3270, %v4007
  %v4009 = vpop.f32.mrb[0].mxu0
  %v4010 = vadd.f32 %v3270, %v4009
  %v4011 = vpop.f32.mrb[0].mxu0
  %v4012 = vadd.f32 %v3275, %v4011
  %v4013 = vpop.f32.mrb[0].mxu0
  %v4014 = vadd.f32 %v3275, %v4013
  %4015 = vmatprep.mubr.bf16.mxu0 %v3462
  %4016 = vmatmul.mubr.bf16.gmra.mrb[0].mxu0 %v3461
  %v4017 = vpop.f32.mrb[0].mxu0
  %v4018 = vadd.f32 %v3280, %v4017
  %v4019 = vpop.f32.mrb[0].mxu0
  %v4020 = vadd.f32 %v3280, %v4019
  %v4021 = vpop.f32.mrb[0].mxu0
  %v4022 = vadd.f32 %v3285, %v4021
  %v4023 = vpop.f32.mrb[0].mxu0
  %v4024 = vadd.f32 %v3285, %v4023
  %4025 = vmatprep.mubr.bf16.mxu0 %v3464
  %4026 = vmatmul.mubr.bf16.gmra.mrb[0].mxu0 %v3463
  %v4027 = vpop.f32.mrb[0].mxu0
  %v4028 = vadd.f32 %v3290, %v4027
  %v4029 = vpop.f32.mrb[0].mxu0
  %v4030 = vadd.f32 %v3290, %v4029
  %v4031 = vpop.f32.mrb[0].mxu0
  %v4032 = vadd.f32 %v3295, %v4031
  %v4033 = vpop.f32.mrb[0].mxu0
  %v4034 = vadd.f32 %v3295, %v4033
  %4035 = vmatprep.mubr.bf16.mxu0 %v3466
  %4036 = vmatmul.mubr.bf16.gmra.mrb[0].mxu0 %v3465
  %v4037 = vpop.f32.mrb[0].mxu0
  %v4038 = vadd.f32 %v3300, %v4037
  %v4039 = vpop.f32.mrb[0].mxu0
  %v4040 = vadd.f32 %v3300, %v4039
  %v4041 = vpop.f32.mrb[0].mxu0
  %v4042 = vadd.f32 %v3305, %v4041
  %v4043 = vpop.f32.mrb[0].mxu0
  %v4044 = vadd.f32 %v3305, %v4043
  %4045 = vmatprep.mubr.bf16.mxu0 %v3468
  %4046 = vmatmul.mubr.bf16.gmra.mrb[0].mxu0 %v3467
  %v4047 = vpop.f32.mrb[0].mxu0
  %v4048 = vadd.f32 %v3310, %v4047
  %v4049 = vpop.f32.mrb[0].mxu0
  %v4050 = vadd.f32 %v3310, %v4049
  %v4051 = vpop.f32.mrb[0].mxu0
  %v4052 = vadd.f32 %v3315, %v4051
  %v4053 = vpop.f32.mrb[0].mxu0
  %v4054 = vadd.f32 %v3315, %v4053
  %4055 = vmatprep.mubr.bf16.mxu0 %v3470
  %4056 = vmatmul.mubr.bf16.gmra.mrb[0].mxu0 %v3469
  %v4057 = vpop.f32.mrb[0].mxu0
  %v4058 = vadd.f32 %v3320, %v4057
  %v4059 = vpop.f32.mrb[0].mxu0
  %v4060 = vadd.f32 %v3320, %v4059
  %v4061 = vpop.f32.mrb[0].mxu0
  %v4062 = vadd.f32 %v3325, %v4061
  %v4063 = vpop.f32.mrb[0].mxu0
  %v4064 = vadd.f32 %v3325, %v4063
  %4065 = vmatprep.mubr.bf16.mxu0 %v3472
  %4066 = vmatmul.mubr.bf16.gmra.mrb[0].mxu0 %v3471
  %v4067 = vpop.f32.mrb[0].mxu0
  %v4068 = vadd.f32 %v3330, %v4067
  %v4069 = vpop.f32.mrb[0].mxu0
  %v4070 = vadd.f32 %v3330, %v4069
  %v4071 = vpop.f32.mrb[0].mxu0
  %v4072 = vadd.f32 %v3335, %v4071
  %v4073 = vpop.f32.mrb[0].mxu0
  %v4074 = vadd.f32 %v3335, %v4073
  %4075 = vmatprep.mubr.bf16.mxu0 %v3474
  %4076 = vmatmul.mubr.bf16.gmra.mrb[0].mxu0 %v3473
  %v4077 = vpop.f32.mrb[0].mxu0
  %v4078 = vadd.f32 %v3340, %v4077
  %v4079 = vpop.f32.mrb[0].mxu0
  %v4080 = vadd.f32 %v3340, %v4079
  %v4081 = vpop.f32.mrb[0].mxu0
  %v4082 = vadd.f32 %v3345, %v4081
  %v4083 = vpop.f32.mrb[0].mxu0
  %v4084 = vadd.f32 %v3345, %v4083
  %4085 = vdwg.mxu0
  %4086 = vmatprep.subr.bf16.mxu0 %v3034
  %4087 = vmatpush1.bf16.msra.mxu0 %v3033
  %4088 = vmatprep.subr.bf16.mxu0 %v3042
  %4089 = vmatpush1.bf16.msra.mxu0 %v3041
  %4090 = vmatprep.subr.bf16.mxu0 %v3050
  %4091 = vmatpush1.bf16.msra.mxu0 %v3049
  %4092 = vmatprep.subr.bf16.mxu0 %v3058
  %4093 = vmatpush1.bf16.msra.mxu0 %v3057
  %4094 = vmatprep.subr.bf16.mxu0 %v3066
  %4095 = vmatpush1.bf16.msra.mxu0 %v3065
  %4096 = vmatprep.subr.bf16.mxu0 %v3074
  %4097 = vmatpush1.bf16.msra.mxu0 %v3073
  %4098 = vmatprep.subr.bf16.mxu0 %v3082
  %4099 = vmatpush1.bf16.msra.mxu0 %v3081
  %4100 = vmatprep.subr.bf16.mxu0 %v3090
  %4101 = vmatpush1.bf16.msra.mxu0 %v3089
  %4102 = vmatprep.subr.bf16.mxu0 %v3098
  %4103 = vmatpush1.bf16.msra.mxu0 %v3097
  %4104 = vmatprep.subr.bf16.mxu0 %v3106
  %4105 = vmatpush1.bf16.msra.mxu0 %v3105
  %4106 = vmatprep.subr.bf16.mxu0 %v3114
  %4107 = vmatpush1.bf16.msra.mxu0 %v3113
  %4108 = vmatprep.subr.bf16.mxu0 %v3122
  %4109 = vmatpush1.bf16.msra.mxu0 %v3121
  %4110 = vmatprep.subr.bf16.mxu0 %v3130
  %4111 = vmatpush1.bf16.msra.mxu0 %v3129
  %4112 = vmatprep.subr.bf16.mxu0 %v3138
  %4113 = vmatpush1.bf16.msra.mxu0 %v3137
  %4114 = vmatprep.subr.bf16.mxu0 %v3146
  %4115 = vmatpush1.bf16.msra.mxu0 %v3145
  %4116 = vmatprep.subr.bf16.mxu0 %v3154
  %4117 = vmatpush1.bf16.msra.mxu0 %v3153
  %4118 = vmatprep.mubr.bf16.mxu0 %v3444
  %4119 = vmatmul.mubr.bf16.gmra.mrb[0].mxu0 %v3443
  %v4120 = vpop.f32.mrb[0].mxu0
  %v4121 = vadd.f32 %v3190, %v4120
  %v4122 = vpop.f32.mrb[0].mxu0
  %v4123 = vadd.f32 %v3190, %v4122
  %v4124 = vpop.f32.mrb[0].mxu0
  %v4125 = vadd.f32 %v3195, %v4124
  %v4126 = vpop.f32.mrb[0].mxu0
  %v4127 = vadd.f32 %v3195, %v4126
  %4128 = vmatprep.mubr.bf16.mxu0 %v3446
  %4129 = vmatmul.mubr.bf16.gmra.mrb[0].mxu0 %v3445
  %v4130 = vpop.f32.mrb[0].mxu0
  %v4131 = vadd.f32 %v3200, %v4130
  %v4132 = vpop.f32.mrb[0].mxu0
  %v4133 = vadd.f32 %v3200, %v4132
  %v4134 = vpop.f32.mrb[0].mxu0
  %v4135 = vadd.f32 %v3205, %v4134
  %v4136 = vpop.f32.mrb[0].mxu0
  %v4137 = vadd.f32 %v3205, %v4136
  %4138 = vmatprep.mubr.bf16.mxu0 %v3448
  %4139 = vmatmul.mubr.bf16.gmra.mrb[0].mxu0 %v3447
  %v4140 = vpop.f32.mrb[0].mxu0
  %v4141 = vadd.f32 %v3210, %v4140
  %v4142 = vpop.f32.mrb[0].mxu0
  %v4143 = vadd.f32 %v3210, %v4142
  %v4144 = vpop.f32.mrb[0].mxu0
  %v4145 = vadd.f32 %v3215, %v4144
  %v4146 = vpop.f32.mrb[0].mxu0
  %v4147 = vadd.f32 %v3215, %v4146
  %4148 = vmatprep.mubr.bf16.mxu0 %v3450
  %4149 = vmatmul.mubr.bf16.gmra.mrb[0].mxu0 %v3449
  %v4150 = vpop.f32.mrb[0].mxu0
  %v4151 = vadd.f32 %v3220, %v4150
  %v4152 = vpop.f32.mrb[0].mxu0
  %v4153 = vadd.f32 %v3220, %v4152
  %v4154 = vpop.f32.mrb[0].mxu0
  %v4155 = vadd.f32 %v3225, %v4154
  %v4156 = vpop.f32.mrb[0].mxu0
  %v4157 = vadd.f32 %v3225, %v4156
  %4158 = vmatprep.mubr.bf16.mxu0 %v3452
  %4159 = vmatmul.mubr.bf16.gmra.mrb[0].mxu0 %v3451
  %v4160 = vpop.f32.mrb[0].mxu0
  %v4161 = vadd.f32 %v3230, %v4160
  %v4162 = vpop.f32.mrb[0].mxu0
  %v4163 = vadd.f32 %v3230, %v4162
  %v4164 = vpop.f32.mrb[0].mxu0
  %v4165 = vadd.f32 %v3235, %v4164
  %v4166 = vpop.f32.mrb[0].mxu0
  %v4167 = vadd.f32 %v3235, %v4166
  %4168 = vmatprep.mubr.bf16.mxu0 %v3454
  %4169 = vmatmul.mubr.bf16.gmra.mrb[0].mxu0 %v3453
  %v4170 = vpop.f32.mrb[0].mxu0
  %v4171 = vadd.f32 %v3240, %v4170
  %v4172 = vpop.f32.mrb[0].mxu0
  %v4173 = vadd.f32 %v3240, %v4172
  %v4174 = vpop.f32.mrb[0].mxu0
  %v4175 = vadd.f32 %v3245, %v4174
  %v4176 = vpop.f32.mrb[0].mxu0
  %v4177 = vadd.f32 %v3245, %v4176
  %4178 = vmatprep.mubr.bf16.mxu0 %v3456
  %4179 = vmatmul.mubr.bf16.gmra.mrb[0].mxu0 %v3455
  %v4180 = vpop.f32.mrb[0].mxu0
  %v4181 = vadd.f32 %v3250, %v4180
  %v4182 = vpop.f32.mrb[0].mxu0
  %v4183 = vadd.f32 %v3250, %v4182
  %v4184 = vpop.f32.mrb[0].mxu0
  %v4185 = vadd.f32 %v3255, %v4184
  %v4186 = vpop.f32.mrb[0].mxu0
  %v4187 = vadd.f32 %v3255, %v4186
  %4188 = vmatprep.mubr.bf16.mxu0 %v3458
  %4189 = vmatmul.mubr.bf16.gmra.mrb[0].mxu0 %v3457
  %v4190 = vpop.f32.mrb[0].mxu0
  %v4191 = vadd.f32 %v3260, %v4190
  %v4192 = vpop.f32.mrb[0].mxu0
  %v4193 = vadd.f32 %v3260, %v4192
  %v4194 = vpop.f32.mrb[0].mxu0
  %v4195 = vadd.f32 %v3265, %v4194
  %v4196 = vpop.f32.mrb[0].mxu0
  %v4197 = vadd.f32 %v3265, %v4196
  %4198 = vmatprep.mubr.bf16.mxu0 %v3460
  %4199 = vmatmul.mubr.bf16.gmra.mrb[0].mxu0 %v3459
  %v4200 = vpop.f32.mrb[0].mxu0
  %v4201 = vadd.f32 %v3270, %v4200
  %v4202 = vpop.f32.mrb[0].mxu0
  %v4203 = vadd.f32 %v3270, %v4202
  %v4204 = vpop.f32.mrb[0].mxu0
  %v4205 = vadd.f32 %v3275, %v4204
  %v4206 = vpop.f32.mrb[0].mxu0
  %v4207 = vadd.f32 %v3275, %v4206
  %4208 = vmatprep.mubr.bf16.mxu0 %v3462
  %4209 = vmatmul.mubr.bf16.gmra.mrb[0].mxu0 %v3461
  %v4210 = vpop.f32.mrb[0].mxu0
  %v4211 = vadd.f32 %v3280, %v4210
  %v4212 = vpop.f32.mrb[0].mxu0
  %v4213 = vadd.f32 %v3280, %v4212
  %v4214 = vpop.f32.mrb[0].mxu0
  %v4215 = vadd.f32 %v3285, %v4214
  %v4216 = vpop.f32.mrb[0].mxu0
  %v4217 = vadd.f32 %v3285, %v4216
  %4218 = vmatprep.mubr.bf16.mxu0 %v3464
  %4219 = vmatmul.mubr.bf16.gmra.mrb[0].mxu0 %v3463
  %v4220 = vpop.f32.mrb[0].mxu0
  %v4221 = vadd.f32 %v3290, %v4220
  %v4222 = vpop.f32.mrb[0].mxu0
  %v4223 = vadd.f32 %v3290, %v4222
  %v4224 = vpop.f32.mrb[0].mxu0
  %v4225 = vadd.f32 %v3295, %v4224
  %v4226 = vpop.f32.mrb[0].mxu0
  %v4227 = vadd.f32 %v3295, %v4226
  %4228 = vmatprep.mubr.bf16.mxu0 %v3466
  %4229 = vmatmul.mubr.bf16.gmra.mrb[0].mxu0 %v3465
  %v4230 = vpop.f32.mrb[0].mxu0
  %v4231 = vadd.f32 %v3300, %v4230
  %v4232 = vpop.f32.mrb[0].mxu0
  %v4233 = vadd.f32 %v3300, %v4232
  %v4234 = vpop.f32.mrb[0].mxu0
  %v4235 = vadd.f32 %v3305, %v4234
  %v4236 = vpop.f32.mrb[0].mxu0
  %v4237 = vadd.f32 %v3305, %v4236
  %4238 = vmatprep.mubr.bf16.mxu0 %v3468
  %4239 = vmatmul.mubr.bf16.gmra.mrb[0].mxu0 %v3467
  %v4240 = vpop.f32.mrb[0].mxu0
  %v4241 = vadd.f32 %v3310, %v4240
  %v4242 = vpop.f32.mrb[0].mxu0
  %v4243 = vadd.f32 %v3310, %v4242
  %v4244 = vpop.f32.mrb[0].mxu0
  %v4245 = vadd.f32 %v3315, %v4244
  %v4246 = vpop.f32.mrb[0].mxu0
  %v4247 = vadd.f32 %v3315, %v4246
  %4248 = vmatprep.mubr.bf16.mxu0 %v3470
  %4249 = vmatmul.mubr.bf16.gmra.mrb[0].mxu0 %v3469
  %v4250 = vpop.f32.mrb[0].mxu0
  %v4251 = vadd.f32 %v3320, %v4250
  %v4252 = vpop.f32.mrb[0].mxu0
  %v4253 = vadd.f32 %v3320, %v4252
  %v4254 = vpop.f32.mrb[0].mxu0
  %v4255 = vadd.f32 %v3325, %v4254
  %v4256 = vpop.f32.mrb[0].mxu0
  %v4257 = vadd.f32 %v3325, %v4256
  %4258 = vmatprep.mubr.bf16.mxu0 %v3472
  %4259 = vmatmul.mubr.bf16.gmra.mrb[0].mxu0 %v3471
  %v4260 = vpop.f32.mrb[0].mxu0
  %v4261 = vadd.f32 %v3330, %v4260
  %v4262 = vpop.f32.mrb[0].mxu0
  %v4263 = vadd.f32 %v3330, %v4262
  %v4264 = vpop.f32.mrb[0].mxu0
  %v4265 = vadd.f32 %v3335, %v4264
  %v4266 = vpop.f32.mrb[0].mxu0
  %v4267 = vadd.f32 %v3335, %v4266
  %4268 = vmatprep.mubr.bf16.mxu0 %v3474
  %4269 = vmatmul.mubr.bf16.gmra.mrb[0].mxu0 %v3473
  %v4270 = vpop.f32.mrb[0].mxu0
  %v4271 = vadd.f32 %v3340, %v4270
  %v4272 = vpop.f32.mrb[0].mxu0
  %v4273 = vadd.f32 %v3340, %v4272
  %v4274 = vpop.f32.mrb[0].mxu0
  %v4275 = vadd.f32 %v3345, %v4274
  %v4276 = vpop.f32.mrb[0].mxu0
  %v4277 = vadd.f32 %v3345, %v4276
  %4278 = vdwg.mxu0
  %v4279 = vmax.f32 %v3542, 0.0
  %v4280 = vmax.f32 %v3544, 0.0
  %v4281 = vmax.f32 %v3735, 0.0
  %v4282 = vmax.f32 %v3737, 0.0
  %v4283 = vmax.f32 %v3928, 0.0
  %v4284 = vmax.f32 %v3930, 0.0
  %v4285 = vmax.f32 %v4121, 0.0
  %v4286 = vmax.f32 %v4123, 0.0
  %v4287 = vmax.f32 %v3546, 0.0
  %v4288 = vmax.f32 %v3548, 0.0
  %v4289 = vmax.f32 %v3739, 0.0
  %v4290 = vmax.f32 %v3741, 0.0
  %v4291 = vmax.f32 %v3932, 0.0
  %v4292 = vmax.f32 %v3934, 0.0
  %v4293 = vmax.f32 %v4125, 0.0
  %v4294 = vmax.f32 %v4127, 0.0
  %v4295 = vmax.f32 %v3552, 0.0
  %v4296 = vmax.f32 %v3554, 0.0
  %v4297 = vmax.f32 %v3745, 0.0
  %v4298 = vmax.f32 %v3747, 0.0
  %v4299 = vmax.f32 %v3938, 0.0
  %v4300 = vmax.f32 %v3940, 0.0
  %v4301 = vmax.f32 %v4131, 0.0
  %v4302 = vmax.f32 %v4133, 0.0
  %v4303 = vmax.f32 %v3556, 0.0
  %v4304 = vmax.f32 %v3558, 0.0
  %v4305 = vmax.f32 %v3749, 0.0
  %v4306 = vmax.f32 %v3751, 0.0
  %v4307 = vmax.f32 %v3942, 0.0
  %v4308 = vmax.f32 %v3944, 0.0
  %v4309 = vmax.f32 %v4135, 0.0
  %v4310 = vmax.f32 %v4137, 0.0
  %v4311 = vmax.f32 %v3562, 0.0
  %v4312 = vmax.f32 %v3564, 0.0
  %v4313 = vmax.f32 %v3755, 0.0
  %v4314 = vmax.f32 %v3757, 0.0
  %v4315 = vmax.f32 %v3948, 0.0
  %v4316 = vmax.f32 %v3950, 0.0
  %v4317 = vmax.f32 %v4141, 0.0
  %v4318 = vmax.f32 %v4143, 0.0
  %v4319 = vmax.f32 %v3566, 0.0
  %v4320 = vmax.f32 %v3568, 0.0
  %v4321 = vmax.f32 %v3759, 0.0
  %v4322 = vmax.f32 %v3761, 0.0
  %v4323 = vmax.f32 %v3952, 0.0
  %v4324 = vmax.f32 %v3954, 0.0
  %v4325 = vmax.f32 %v4145, 0.0
  %v4326 = vmax.f32 %v4147, 0.0
  %v4327 = vmax.f32 %v3572, 0.0
  %v4328 = vmax.f32 %v3574, 0.0
  %v4329 = vmax.f32 %v3765, 0.0
  %v4330 = vmax.f32 %v3767, 0.0
  %v4331 = vmax.f32 %v3958, 0.0
  %v4332 = vmax.f32 %v3960, 0.0
  %v4333 = vmax.f32 %v4151, 0.0
  %v4334 = vmax.f32 %v4153, 0.0
  %v4335 = vmax.f32 %v3576, 0.0
  %v4336 = vmax.f32 %v3578, 0.0
  %v4337 = vmax.f32 %v3769, 0.0
  %v4338 = vmax.f32 %v3771, 0.0
  %v4339 = vmax.f32 %v3962, 0.0
  %v4340 = vmax.f32 %v3964, 0.0
  %v4341 = vmax.f32 %v4155, 0.0
  %v4342 = vmax.f32 %v4157, 0.0
  %v4343 = vmax.f32 %v3582, 0.0
  %v4344 = vmax.f32 %v3584, 0.0
  %v4345 = vmax.f32 %v3775, 0.0
  %v4346 = vmax.f32 %v3777, 0.0
  %v4347 = vmax.f32 %v3968, 0.0
  %v4348 = vmax.f32 %v3970, 0.0
  %v4349 = vmax.f32 %v4161, 0.0
  %v4350 = vmax.f32 %v4163, 0.0
  %v4351 = vmax.f32 %v3586, 0.0
  %v4352 = vmax.f32 %v3588, 0.0
  %v4353 = vmax.f32 %v3779, 0.0
  %v4354 = vmax.f32 %v3781, 0.0
  %v4355 = vmax.f32 %v3972, 0.0
  %v4356 = vmax.f32 %v3974, 0.0
  %v4357 = vmax.f32 %v4165, 0.0
  %v4358 = vmax.f32 %v4167, 0.0
  %v4359 = vmax.f32 %v3592, 0.0
  %v4360 = vmax.f32 %v3594, 0.0
  %v4361 = vmax.f32 %v3785, 0.0
  %v4362 = vmax.f32 %v3787, 0.0
  %v4363 = vmax.f32 %v3978, 0.0
  %v4364 = vmax.f32 %v3980, 0.0
  %v4365 = vmax.f32 %v4171, 0.0
  %v4366 = vmax.f32 %v4173, 0.0
  %v4367 = vmax.f32 %v3596, 0.0
  %v4368 = vmax.f32 %v3598, 0.0
  %v4369 = vmax.f32 %v3789, 0.0
  %v4370 = vmax.f32 %v3791, 0.0
  %v4371 = vmax.f32 %v3982, 0.0
  %v4372 = vmax.f32 %v3984, 0.0
  %v4373 = vmax.f32 %v4175, 0.0
  %v4374 = vmax.f32 %v4177, 0.0
  %v4375 = vmax.f32 %v3602, 0.0
  %v4376 = vmax.f32 %v3604, 0.0
  %v4377 = vmax.f32 %v3795, 0.0
  %v4378 = vmax.f32 %v3797, 0.0
  %v4379 = vmax.f32 %v3988, 0.0
  %v4380 = vmax.f32 %v3990, 0.0
  %v4381 = vmax.f32 %v4181, 0.0
  %v4382 = vmax.f32 %v4183, 0.0
  %v4383 = vmax.f32 %v3606, 0.0
  %v4384 = vmax.f32 %v3608, 0.0
  %v4385 = vmax.f32 %v3799, 0.0
  %v4386 = vmax.f32 %v3801, 0.0
  %v4387 = vmax.f32 %v3992, 0.0
  %v4388 = vmax.f32 %v3994, 0.0
  %v4389 = vmax.f32 %v4185, 0.0
  %v4390 = vmax.f32 %v4187, 0.0
  %v4391 = vmax.f32 %v3612, 0.0
  %v4392 = vmax.f32 %v3614, 0.0
  %v4393 = vmax.f32 %v3805, 0.0
  %v4394 = vmax.f32 %v3807, 0.0
  %v4395 = vmax.f32 %v3998, 0.0
  %v4396 = vmax.f32 %v4000, 0.0
  %v4397 = vmax.f32 %v4191, 0.0
  %v4398 = vmax.f32 %v4193, 0.0
  %v4399 = vmax.f32 %v3616, 0.0
  %v4400 = vmax.f32 %v3618, 0.0
  %v4401 = vmax.f32 %v3809, 0.0
  %v4402 = vmax.f32 %v3811, 0.0
  %v4403 = vmax.f32 %v4002, 0.0
  %v4404 = vmax.f32 %v4004, 0.0
  %v4405 = vmax.f32 %v4195, 0.0
  %v4406 = vmax.f32 %v4197, 0.0
  %v4407 = vmax.f32 %v3622, 0.0
  %v4408 = vmax.f32 %v3624, 0.0
  %v4409 = vmax.f32 %v3815, 0.0
  %v4410 = vmax.f32 %v3817, 0.0
  %v4411 = vmax.f32 %v4008, 0.0
  %v4412 = vmax.f32 %v4010, 0.0
  %v4413 = vmax.f32 %v4201, 0.0
  %v4414 = vmax.f32 %v4203, 0.0
  %v4415 = vmax.f32 %v3626, 0.0
  %v4416 = vmax.f32 %v3628, 0.0
  %v4417 = vmax.f32 %v3819, 0.0
  %v4418 = vmax.f32 %v3821, 0.0
  %v4419 = vmax.f32 %v4012, 0.0
  %v4420 = vmax.f32 %v4014, 0.0
  %v4421 = vmax.f32 %v4205, 0.0
  %v4422 = vmax.f32 %v4207, 0.0
  %v4423 = vmax.f32 %v3632, 0.0
  %v4424 = vmax.f32 %v3634, 0.0
  %v4425 = vmax.f32 %v3825, 0.0
  %v4426 = vmax.f32 %v3827, 0.0
  %v4427 = vmax.f32 %v4018, 0.0
  %v4428 = vmax.f32 %v4020, 0.0
  %v4429 = vmax.f32 %v4211, 0.0
  %v4430 = vmax.f32 %v4213, 0.0
  %v4431 = vmax.f32 %v3636, 0.0
  %v4432 = vmax.f32 %v3638, 0.0
  %v4433 = vmax.f32 %v3829, 0.0
  %v4434 = vmax.f32 %v3831, 0.0
  %v4435 = vmax.f32 %v4022, 0.0
  %v4436 = vmax.f32 %v4024, 0.0
  %v4437 = vmax.f32 %v4215, 0.0
  %v4438 = vmax.f32 %v4217, 0.0
  %v4439 = vmax.f32 %v3642, 0.0
  %v4440 = vmax.f32 %v3644, 0.0
  %v4441 = vmax.f32 %v3835, 0.0
  %v4442 = vmax.f32 %v3837, 0.0
  %v4443 = vmax.f32 %v4028, 0.0
  %v4444 = vmax.f32 %v4030, 0.0
  %v4445 = vmax.f32 %v4221, 0.0
  %v4446 = vmax.f32 %v4223, 0.0
  %v4447 = vmax.f32 %v3646, 0.0
  %v4448 = vmax.f32 %v3648, 0.0
  %v4449 = vmax.f32 %v3839, 0.0
  %v4450 = vmax.f32 %v3841, 0.0
  %v4451 = vmax.f32 %v4032, 0.0
  %v4452 = vmax.f32 %v4034, 0.0
  %v4453 = vmax.f32 %v4225, 0.0
  %v4454 = vmax.f32 %v4227, 0.0
  %v4455 = vmax.f32 %v3652, 0.0
  %v4456 = vmax.f32 %v3654, 0.0
  %v4457 = vmax.f32 %v3845, 0.0
  %v4458 = vmax.f32 %v3847, 0.0
  %v4459 = vmax.f32 %v4038, 0.0
  %v4460 = vmax.f32 %v4040, 0.0
  %v4461 = vmax.f32 %v4231, 0.0
  %v4462 = vmax.f32 %v4233, 0.0
  %v4463 = vmax.f32 %v3656, 0.0
  %v4464 = vmax.f32 %v3658, 0.0
  %v4465 = vmax.f32 %v3849, 0.0
  %v4466 = vmax.f32 %v3851, 0.0
  %v4467 = vmax.f32 %v4042, 0.0
  %v4468 = vmax.f32 %v4044, 0.0
  %v4469 = vmax.f32 %v4235, 0.0
  %v4470 = vmax.f32 %v4237, 0.0
  %v4471 = vmax.f32 %v3662, 0.0
  %v4472 = vmax.f32 %v3664, 0.0
  %v4473 = vmax.f32 %v3855, 0.0
  %v4474 = vmax.f32 %v3857, 0.0
  %v4475 = vmax.f32 %v4048, 0.0
  %v4476 = vmax.f32 %v4050, 0.0
  %v4477 = vmax.f32 %v4241, 0.0
  %v4478 = vmax.f32 %v4243, 0.0
  %v4479 = vmax.f32 %v3666, 0.0
  %v4480 = vmax.f32 %v3668, 0.0
  %v4481 = vmax.f32 %v3859, 0.0
  %v4482 = vmax.f32 %v3861, 0.0
  %v4483 = vmax.f32 %v4052, 0.0
  %v4484 = vmax.f32 %v4054, 0.0
  %v4485 = vmax.f32 %v4245, 0.0
  %v4486 = vmax.f32 %v4247, 0.0
  %v4487 = vmax.f32 %v3672, 0.0
  %v4488 = vmax.f32 %v3674, 0.0
  %v4489 = vmax.f32 %v3865, 0.0
  %v4490 = vmax.f32 %v3867, 0.0
  %v4491 = vmax.f32 %v4058, 0.0
  %v4492 = vmax.f32 %v4060, 0.0
  %v4493 = vmax.f32 %v4251, 0.0
  %v4494 = vmax.f32 %v4253, 0.0
  %v4495 = vmax.f32 %v3676, 0.0
  %v4496 = vmax.f32 %v3678, 0.0
  %v4497 = vmax.f32 %v3869, 0.0
  %v4498 = vmax.f32 %v3871, 0.0
  %v4499 = vmax.f32 %v4062, 0.0
  %v4500 = vmax.f32 %v4064, 0.0
  %v4501 = vmax.f32 %v4255, 0.0
  %v4502 = vmax.f32 %v4257, 0.0
  %v4503 = vmax.f32 %v3682, 0.0
  %v4504 = vmax.f32 %v3684, 0.0
  %v4505 = vmax.f32 %v3875, 0.0
  %v4506 = vmax.f32 %v3877, 0.0
  %v4507 = vmax.f32 %v4068, 0.0
  %v4508 = vmax.f32 %v4070, 0.0
  %v4509 = vmax.f32 %v4261, 0.0
  %v4510 = vmax.f32 %v4263, 0.0
  %v4511 = vmax.f32 %v3686, 0.0
  %v4512 = vmax.f32 %v3688, 0.0
  %v4513 = vmax.f32 %v3879, 0.0
  %v4514 = vmax.f32 %v3881, 0.0
  %v4515 = vmax.f32 %v4072, 0.0
  %v4516 = vmax.f32 %v4074, 0.0
  %v4517 = vmax.f32 %v4265, 0.0
  %v4518 = vmax.f32 %v4267, 0.0
  %v4519 = vmax.f32 %v3692, 0.0
  %v4520 = vmax.f32 %v3694, 0.0
  %v4521 = vmax.f32 %v3885, 0.0
  %v4522 = vmax.f32 %v3887, 0.0
  %v4523 = vmax.f32 %v4078, 0.0
  %v4524 = vmax.f32 %v4080, 0.0
  %v4525 = vmax.f32 %v4271, 0.0
  %v4526 = vmax.f32 %v4273, 0.0
  %v4527 = vmax.f32 %v3696, 0.0
  %v4528 = vmax.f32 %v3698, 0.0
  %v4529 = vmax.f32 %v3889, 0.0
  %v4530 = vmax.f32 %v3891, 0.0
  %v4531 = vmax.f32 %v4082, 0.0
  %v4532 = vmax.f32 %v4084, 0.0
  %v4533 = vmax.f32 %v4275, 0.0
  %v4534 = vmax.f32 %v4277, 0.0
  %v4535 = vld [vmem:[%s7] sm:$0xff]
  %v4536 = vpack.c.bf16 %v4287, %v4279
  %v4537 = vpack.c.bf16 %v4288, %v4280
  %v4538 = vpack.c.bf16 %v4289, %v4281
  %v4539 = vpack.c.bf16 %v4290, %v4282
  %v4540 = vpack.c.bf16 %v4291, %v4283
  %v4541 = vpack.c.bf16 %v4292, %v4284
  %v4542 = vpack.c.bf16 %v4293, %v4285
  %v4543 = vpack.c.bf16 %v4294, %v4286
  %v4544 = vpack.c.bf16 %v4303, %v4295
  %v4545 = vpack.c.bf16 %v4304, %v4296
  %v4546 = vpack.c.bf16 %v4305, %v4297
  %v4547 = vpack.c.bf16 %v4306, %v4298
  %v4548 = vpack.c.bf16 %v4307, %v4299
  %v4549 = vpack.c.bf16 %v4308, %v4300
  %v4550 = vpack.c.bf16 %v4309, %v4301
  %v4551 = vpack.c.bf16 %v4310, %v4302
  %v4552 = vpack.c.bf16 %v4319, %v4311
  %v4553 = vpack.c.bf16 %v4320, %v4312
  %v4554 = vpack.c.bf16 %v4321, %v4313
  %v4555 = vpack.c.bf16 %v4322, %v4314
  %v4556 = vpack.c.bf16 %v4323, %v4315
  %v4557 = vpack.c.bf16 %v4324, %v4316
  %v4558 = vpack.c.bf16 %v4325, %v4317
  %v4559 = vpack.c.bf16 %v4326, %v4318
  %v4560 = vpack.c.bf16 %v4335, %v4327
  %v4561 = vpack.c.bf16 %v4336, %v4328
  %v4562 = vpack.c.bf16 %v4337, %v4329
  %v4563 = vpack.c.bf16 %v4338, %v4330
  %v4564 = vpack.c.bf16 %v4339, %v4331
  %v4565 = vpack.c.bf16 %v4340, %v4332
  %v4566 = vpack.c.bf16 %v4341, %v4333
  %v4567 = vpack.c.bf16 %v4342, %v4334
  %v4568 = vpack.c.bf16 %v4351, %v4343
  %v4569 = vpack.c.bf16 %v4352, %v4344
  %v4570 = vpack.c.bf16 %v4353, %v4345
  %v4571 = vpack.c.bf16 %v4354, %v4346
  %v4572 = vpack.c.bf16 %v4355, %v4347
  %v4573 = vpack.c.bf16 %v4356, %v4348
  %v4574 = vpack.c.bf16 %v4357, %v4349
  %v4575 = vpack.c.bf16 %v4358, %v4350
  %v4576 = vpack.c.bf16 %v4367, %v4359
  %v4577 = vpack.c.bf16 %v4368, %v4360
  %v4578 = vpack.c.bf16 %v4369, %v4361
  %v4579 = vpack.c.bf16 %v4370, %v4362
  %v4580 = vpack.c.bf16 %v4371, %v4363
  %v4581 = vpack.c.bf16 %v4372, %v4364
  %v4582 = vpack.c.bf16 %v4373, %v4365
  %v4583 = vpack.c.bf16 %v4374, %v4366
  %v4584 = vpack.c.bf16 %v4383, %v4375
  %v4585 = vpack.c.bf16 %v4384, %v4376
  %v4586 = vpack.c.bf16 %v4385, %v4377
  %v4587 = vpack.c.bf16 %v4386, %v4378
  %v4588 = vpack.c.bf16 %v4387, %v4379
  %v4589 = vpack.c.bf16 %v4388, %v4380
  %v4590 = vpack.c.bf16 %v4389, %v4381
  %v4591 = vpack.c.bf16 %v4390, %v4382
  %v4592 = vpack.c.bf16 %v4399, %v4391
  %v4593 = vpack.c.bf16 %v4400, %v4392
  %v4594 = vpack.c.bf16 %v4401, %v4393
  %v4595 = vpack.c.bf16 %v4402, %v4394
  %v4596 = vpack.c.bf16 %v4403, %v4395
  %v4597 = vpack.c.bf16 %v4404, %v4396
  %v4598 = vpack.c.bf16 %v4405, %v4397
  %v4599 = vpack.c.bf16 %v4406, %v4398
  %v4600 = vpack.c.bf16 %v4415, %v4407
  %v4601 = vpack.c.bf16 %v4416, %v4408
  %v4602 = vpack.c.bf16 %v4417, %v4409
  %v4603 = vpack.c.bf16 %v4418, %v4410
  %v4604 = vpack.c.bf16 %v4419, %v4411
  %v4605 = vpack.c.bf16 %v4420, %v4412
  %v4606 = vpack.c.bf16 %v4421, %v4413
  %v4607 = vpack.c.bf16 %v4422, %v4414
  %v4608 = vpack.c.bf16 %v4431, %v4423
  %v4609 = vpack.c.bf16 %v4432, %v4424
  %v4610 = vpack.c.bf16 %v4433, %v4425
  %v4611 = vpack.c.bf16 %v4434, %v4426
  %v4612 = vpack.c.bf16 %v4435, %v4427
  %v4613 = vpack.c.bf16 %v4436, %v4428
  %v4614 = vpack.c.bf16 %v4437, %v4429
  %v4615 = vpack.c.bf16 %v4438, %v4430
  %v4616 = vpack.c.bf16 %v4447, %v4439
  %v4617 = vpack.c.bf16 %v4448, %v4440
  %v4618 = vpack.c.bf16 %v4449, %v4441
  %v4619 = vpack.c.bf16 %v4450, %v4442
  %v4620 = vpack.c.bf16 %v4451, %v4443
  %v4621 = vpack.c.bf16 %v4452, %v4444
  %v4622 = vpack.c.bf16 %v4453, %v4445
  %v4623 = vpack.c.bf16 %v4454, %v4446
  %v4624 = vpack.c.bf16 %v4463, %v4455
  %v4625 = vpack.c.bf16 %v4464, %v4456
  %v4626 = vpack.c.bf16 %v4465, %v4457
  %v4627 = vpack.c.bf16 %v4466, %v4458
  %v4628 = vpack.c.bf16 %v4467, %v4459
  %v4629 = vpack.c.bf16 %v4468, %v4460
  %v4630 = vpack.c.bf16 %v4469, %v4461
  %v4631 = vpack.c.bf16 %v4470, %v4462
  %v4632 = vpack.c.bf16 %v4479, %v4471
  %v4633 = vpack.c.bf16 %v4480, %v4472
  %v4634 = vpack.c.bf16 %v4481, %v4473
  %v4635 = vpack.c.bf16 %v4482, %v4474
  %v4636 = vpack.c.bf16 %v4483, %v4475
  %v4637 = vpack.c.bf16 %v4484, %v4476
  %v4638 = vpack.c.bf16 %v4485, %v4477
  %v4639 = vpack.c.bf16 %v4486, %v4478
  %v4640 = vpack.c.bf16 %v4495, %v4487
  %v4641 = vpack.c.bf16 %v4496, %v4488
  %v4642 = vpack.c.bf16 %v4497, %v4489
  %v4643 = vpack.c.bf16 %v4498, %v4490
  %v4644 = vpack.c.bf16 %v4499, %v4491
  %v4645 = vpack.c.bf16 %v4500, %v4492
  %v4646 = vpack.c.bf16 %v4501, %v4493
  %v4647 = vpack.c.bf16 %v4502, %v4494
  %v4648 = vpack.c.bf16 %v4511, %v4503
  %v4649 = vpack.c.bf16 %v4512, %v4504
  %v4650 = vpack.c.bf16 %v4513, %v4505
  %v4651 = vpack.c.bf16 %v4514, %v4506
  %v4652 = vpack.c.bf16 %v4515, %v4507
  %v4653 = vpack.c.bf16 %v4516, %v4508
  %v4654 = vpack.c.bf16 %v4517, %v4509
  %v4655 = vpack.c.bf16 %v4518, %v4510
  %v4656 = vpack.c.bf16 %v4527, %v4519
  %v4657 = vpack.c.bf16 %v4528, %v4520
  %v4658 = vpack.c.bf16 %v4529, %v4521
  %v4659 = vpack.c.bf16 %v4530, %v4522
  %v4660 = vpack.c.bf16 %v4531, %v4523
  %v4661 = vpack.c.bf16 %v4532, %v4524
  %v4662 = vpack.c.bf16 %v4533, %v4525
  %v4663 = vpack.c.bf16 %v4534, %v4526
  %v4664 = vld [vmem:[%s8] sm:$0xff]
  %4666 = vset.pattern.permute.xlu0 0
  %4667 = vperm.xlu0 %4666, %v4664
  %v4668 = vpop.permute.xlu0 %4667
  %v4671 = vunpack.c.l.b16 %v4535
  %v4672 = vunpack.c.h.b16 %v4535
  %v4673 = vpack.c.b16 %v4671, %v4671
  %v4674 = vpack.c.b16 %v4672, %v4672
  %4677 = vmatprep.subr.bf16.mxu0 %v4537
  %4678 = vmatpush1.bf16.msra.mxu0 %v4536
  %4679 = vmatprep.subr.bf16.mxu0 %v4545
  %4680 = vmatpush1.bf16.msra.mxu0 %v4544
  %4681 = vmatprep.subr.bf16.mxu0 %v4553
  %4682 = vmatpush1.bf16.msra.mxu0 %v4552
  %4683 = vmatprep.subr.bf16.mxu0 %v4561
  %4684 = vmatpush1.bf16.msra.mxu0 %v4560
  %4685 = vmatprep.subr.bf16.mxu0 %v4569
  %4686 = vmatpush1.bf16.msra.mxu0 %v4568
  %4687 = vmatprep.subr.bf16.mxu0 %v4577
  %4688 = vmatpush1.bf16.msra.mxu0 %v4576
  %4689 = vmatprep.subr.bf16.mxu0 %v4585
  %4690 = vmatpush1.bf16.msra.mxu0 %v4584
  %4691 = vmatprep.subr.bf16.mxu0 %v4593
  %4692 = vmatpush1.bf16.msra.mxu0 %v4592
  %4693 = vmatprep.subr.bf16.mxu0 %v4601
  %4694 = vmatpush1.bf16.msra.mxu0 %v4600
  %4695 = vmatprep.subr.bf16.mxu0 %v4609
  %4696 = vmatpush1.bf16.msra.mxu0 %v4608
  %4697 = vmatprep.subr.bf16.mxu0 %v4617
  %4698 = vmatpush1.bf16.msra.mxu0 %v4616
  %4699 = vmatprep.subr.bf16.mxu0 %v4625
  %4700 = vmatpush1.bf16.msra.mxu0 %v4624
  %4701 = vmatprep.subr.bf16.mxu0 %v4633
  %4702 = vmatpush1.bf16.msra.mxu0 %v4632
  %4703 = vmatprep.subr.bf16.mxu0 %v4641
  %4704 = vmatpush1.bf16.msra.mxu0 %v4640
  %4705 = vmatprep.subr.bf16.mxu0 %v4649
  %4706 = vmatpush1.bf16.msra.mxu0 %v4648
  %4707 = vmatprep.subr.bf16.mxu0 %v4657
  %4708 = vmatpush1.bf16.msra.mxu0 %v4656
  %4709 = vmatprep.mubr.bf16.mxu0 %v4674
  %4710 = vmatmul.mubr.bf16.gmra.mrb[0].mxu0 %v4673
  %v4711 = vpop.f32.mrb[0].mxu0
  %v4712 = vadd.f32 %v4668, %v4711
  %v4713 = vpop.f32.mrb[0].mxu0
  %v4714 = vadd.f32 %v4668, %v4713
  %v4715 = vpop.f32.mrb[0].mxu0
  %v4716 = vpop.f32.mrb[0].mxu0
  %4717 = vdwg.mxu0
  %4718 = vmatprep.subr.bf16.mxu0 %v4539
  %4719 = vmatpush1.bf16.msra.mxu0 %v4538
  %4720 = vmatprep.subr.bf16.mxu0 %v4547
  %4721 = vmatpush1.bf16.msra.mxu0 %v4546
  %4722 = vmatprep.subr.bf16.mxu0 %v4555
  %4723 = vmatpush1.bf16.msra.mxu0 %v4554
  %4724 = vmatprep.subr.bf16.mxu0 %v4563
  %4725 = vmatpush1.bf16.msra.mxu0 %v4562
  %4726 = vmatprep.subr.bf16.mxu0 %v4571
  %4727 = vmatpush1.bf16.msra.mxu0 %v4570
  %4728 = vmatprep.subr.bf16.mxu0 %v4579
  %4729 = vmatpush1.bf16.msra.mxu0 %v4578
  %4730 = vmatprep.subr.bf16.mxu0 %v4587
  %4731 = vmatpush1.bf16.msra.mxu0 %v4586
  %4732 = vmatprep.subr.bf16.mxu0 %v4595
  %4733 = vmatpush1.bf16.msra.mxu0 %v4594
  %4734 = vmatprep.subr.bf16.mxu0 %v4603
  %4735 = vmatpush1.bf16.msra.mxu0 %v4602
  %4736 = vmatprep.subr.bf16.mxu0 %v4611
  %4737 = vmatpush1.bf16.msra.mxu0 %v4610
  %4738 = vmatprep.subr.bf16.mxu0 %v4619
  %4739 = vmatpush1.bf16.msra.mxu0 %v4618
  %4740 = vmatprep.subr.bf16.mxu0 %v4627
  %4741 = vmatpush1.bf16.msra.mxu0 %v4626
  %4742 = vmatprep.subr.bf16.mxu0 %v4635
  %4743 = vmatpush1.bf16.msra.mxu0 %v4634
  %4744 = vmatprep.subr.bf16.mxu0 %v4643
  %4745 = vmatpush1.bf16.msra.mxu0 %v4642
  %4746 = vmatprep.subr.bf16.mxu0 %v4651
  %4747 = vmatpush1.bf16.msra.mxu0 %v4650
  %4748 = vmatprep.subr.bf16.mxu0 %v4659
  %4749 = vmatpush1.bf16.msra.mxu0 %v4658
  %4750 = vmatprep.mubr.bf16.mxu0 %v4674
  %4751 = vmatmul.mubr.bf16.gmra.mrb[0].mxu0 %v4673
  %v4752 = vpop.f32.mrb[0].mxu0
  %v4753 = vadd.f32 %v4668, %v4752
  %v4754 = vpop.f32.mrb[0].mxu0
  %v4755 = vadd.f32 %v4668, %v4754
  %v4756 = vpop.f32.mrb[0].mxu0
  %v4757 = vpop.f32.mrb[0].mxu0
  %4758 = vdwg.mxu0
  %4759 = vmatprep.subr.bf16.mxu0 %v4541
  %4760 = vmatpush1.bf16.msra.mxu0 %v4540
  %4761 = vmatprep.subr.bf16.mxu0 %v4549
  %4762 = vmatpush1.bf16.msra.mxu0 %v4548
  %4763 = vmatprep.subr.bf16.mxu0 %v4557
  %4764 = vmatpush1.bf16.msra.mxu0 %v4556
  %4765 = vmatprep.subr.bf16.mxu0 %v4565
  %4766 = vmatpush1.bf16.msra.mxu0 %v4564
  %4767 = vmatprep.subr.bf16.mxu0 %v4573
  %4768 = vmatpush1.bf16.msra.mxu0 %v4572
  %4769 = vmatprep.subr.bf16.mxu0 %v4581
  %4770 = vmatpush1.bf16.msra.mxu0 %v4580
  %4771 = vmatprep.subr.bf16.mxu0 %v4589
  %4772 = vmatpush1.bf16.msra.mxu0 %v4588
  %4773 = vmatprep.subr.bf16.mxu0 %v4597
  %4774 = vmatpush1.bf16.msra.mxu0 %v4596
  %4775 = vmatprep.subr.bf16.mxu0 %v4605
  %4776 = vmatpush1.bf16.msra.mxu0 %v4604
  %4777 = vmatprep.subr.bf16.mxu0 %v4613
  %4778 = vmatpush1.bf16.msra.mxu0 %v4612
  %4779 = vmatprep.subr.bf16.mxu0 %v4621
  %4780 = vmatpush1.bf16.msra.mxu0 %v4620
  %4781 = vmatprep.subr.bf16.mxu0 %v4629
  %4782 = vmatpush1.bf16.msra.mxu0 %v4628
  %4783 = vmatprep.subr.bf16.mxu0 %v4637
  %4784 = vmatpush1.bf16.msra.mxu0 %v4636
  %4785 = vmatprep.subr.bf16.mxu0 %v4645
  %4786 = vmatpush1.bf16.msra.mxu0 %v4644
  %4787 = vmatprep.subr.bf16.mxu0 %v4653
  %4788 = vmatpush1.bf16.msra.mxu0 %v4652
  %4789 = vmatprep.subr.bf16.mxu0 %v4661
  %4790 = vmatpush1.bf16.msra.mxu0 %v4660
  %4791 = vmatprep.mubr.bf16.mxu0 %v4674
  %4792 = vmatmul.mubr.bf16.gmra.mrb[0].mxu0 %v4673
  %v4793 = vpop.f32.mrb[0].mxu0
  %v4794 = vadd.f32 %v4668, %v4793
  %v4795 = vpop.f32.mrb[0].mxu0
  %v4796 = vadd.f32 %v4668, %v4795
  %v4797 = vpop.f32.mrb[0].mxu0
  %v4798 = vpop.f32.mrb[0].mxu0
  %4799 = vdwg.mxu0
  %4800 = vmatprep.subr.bf16.mxu0 %v4543
  %4801 = vmatpush1.bf16.msra.mxu0 %v4542
  %4802 = vmatprep.subr.bf16.mxu0 %v4551
  %4803 = vmatpush1.bf16.msra.mxu0 %v4550
  %4804 = vmatprep.subr.bf16.mxu0 %v4559
  %4805 = vmatpush1.bf16.msra.mxu0 %v4558
  %4806 = vmatprep.subr.bf16.mxu0 %v4567
  %4807 = vmatpush1.bf16.msra.mxu0 %v4566
  %4808 = vmatprep.subr.bf16.mxu0 %v4575
  %4809 = vmatpush1.bf16.msra.mxu0 %v4574
  %4810 = vmatprep.subr.bf16.mxu0 %v4583
  %4811 = vmatpush1.bf16.msra.mxu0 %v4582
  %4812 = vmatprep.subr.bf16.mxu0 %v4591
  %4813 = vmatpush1.bf16.msra.mxu0 %v4590
  %4814 = vmatprep.subr.bf16.mxu0 %v4599
  %4815 = vmatpush1.bf16.msra.mxu0 %v4598
  %4816 = vmatprep.subr.bf16.mxu0 %v4607
  %4817 = vmatpush1.bf16.msra.mxu0 %v4606
  %4818 = vmatprep.subr.bf16.mxu0 %v4615
  %4819 = vmatpush1.bf16.msra.mxu0 %v4614
  %4820 = vmatprep.subr.bf16.mxu0 %v4623
  %4821 = vmatpush1.bf16.msra.mxu0 %v4622
  %4822 = vmatprep.subr.bf16.mxu0 %v4631
  %4823 = vmatpush1.bf16.msra.mxu0 %v4630
  %4824 = vmatprep.subr.bf16.mxu0 %v4639
  %4825 = vmatpush1.bf16.msra.mxu0 %v4638
  %4826 = vmatprep.subr.bf16.mxu0 %v4647
  %4827 = vmatpush1.bf16.msra.mxu0 %v4646
  %4828 = vmatprep.subr.bf16.mxu0 %v4655
  %4829 = vmatpush1.bf16.msra.mxu0 %v4654
  %4830 = vmatprep.subr.bf16.mxu0 %v4663
  %4831 = vmatpush1.bf16.msra.mxu0 %v4662
  %4832 = vmatprep.mubr.bf16.mxu0 %v4674
  %4833 = vmatmul.mubr.bf16.gmra.mrb[0].mxu0 %v4673
  %v4834 = vpop.f32.mrb[0].mxu0
  %v4835 = vadd.f32 %v4668, %v4834
  %v4836 = vpop.f32.mrb[0].mxu0
  %v4837 = vadd.f32 %v4668, %v4836
  %v4838 = vpop.f32.mrb[0].mxu0
  %v4839 = vpop.f32.mrb[0].mxu0
  %4840 = vdwg.mxu0
  %v4841 = vtanh.pop %v4712
  %v4842 = vtanh.pop %v4714
  %v4843 = vtanh.pop %v4753
  %v4844 = vtanh.pop %v4755
  %v4845 = vtanh.pop %v4794
  %v4846 = vtanh.pop %v4796
  %v4847 = vtanh.pop %v4835
  %v4848 = vtanh.pop %v4837
  %v4849 = vmul.f32 %v4841, 8.0
  %v4850 = vmul.f32 %v4842, 8.0
  %v4851 = vmul.f32 %v4843, 8.0
  %v4852 = vmul.f32 %v4844, 8.0
  %v4853 = vmul.f32 %v4845, 8.0
  %v4854 = vmul.f32 %v4846, 8.0
  %v4855 = vmul.f32 %v4847, 8.0
  %v4856 = vmul.f32 %v4848, 8.0
  %4857 = vst [vmem:[%s9] sm:$0xff] %v4849
  %4858 = vst [vmem:[%s9 + $0x8] sm:$0xff] %v4850
  %4859 = vst [vmem:[%s9 + $0x10] sm:$0xff] %v4851
  %4860 = vst [vmem:[%s9 + $0x18] sm:$0xff] %v4852
  %4861 = vst [vmem:[%s9 + $0x20] sm:$0xff] %v4853
  %4862 = vst [vmem:[%s9 + $0x28] sm:$0xff] %v4854
  %4863 = vst [vmem:[%s9 + $0x30] sm:$0xff] %v4855
  %4864 = vst [vmem:[%s9 + $0x38] sm:$0xff] %v4856
  // Predicated region
  $region38: #{gen_new_forward.2} parent=0 // pred_check
    _
  $region39: #{gen_new_forward.2} parent=0 // pred_check_branch
    %4866 = sbr.rel (0) target = $region41
  $region40: #{gen_new_forward.2} parent=0 // pred_region
    _
  $region41: #{gen_new_forward.2} parent=0 // pred_fallthru
    _
  // Predicated region
  $region42: #{gen_new_forward.2} parent=0 // pred_check
    _
  $region43: #{gen_new_forward.2} parent=0 // pred_check_branch
    %4868 = sbr.rel (0) target = $region45
  $region44: #{gen_new_forward.2} parent=0 // pred_region
    _
  $region45: #{gen_new_forward.2} parent=0 // pred_fallthru
    _

// kernel: gen_new_forward.3
$region0: #{gen_new_forward.3}
  #allocation0 [shape = 'u32[]', space=smem, size = 0x4, offset = 0x4, fixed_abs, tag = 'smem constant byte address 0x4 - core index']
  #allocation1 [shape = 'u32[144,128]{1,0:T(1,128)}', space=vmem, size = 0x12000, scoped, tag = 'internal scratch']
  %s0 = inlined_call_operand.vmem [shape: f32[32,4,1024], index: 0, kind: input, shape index: {}]
  %s1 = inlined_call_operand.vmem [shape: f32[6,4,1024], index: 1, kind: input, shape index: {}]
  %s2 = inlined_call_operand.vmem [shape: f32[4,4,1024], index: 2, kind: output, shape index: {}]
  %s3 = sld [smem:[#allocation0]]
  $region18: #{gen_new_forward.3} parent=0
    _
  %s5 = ssub.s32 1, %s3
  %s6 = scalar_select 0, %s5, %s3
  // Predicated region
  $region2: #{gen_new_forward.3} parent=0 // pred_check
    _
  $region3: #{gen_new_forward.3} parent=0 // pred_check_branch
    %8 = sbr.rel (0) target = $region5
  $region4: #{gen_new_forward.3} parent=0 // pred_region
    _
  $region5: #{gen_new_forward.3} parent=0 // pred_fallthru
    _
  // Predicated region
  $region6: #{gen_new_forward.3} parent=0 // pred_check
    _
  $region7: #{gen_new_forward.3} parent=0 // pred_check_branch
    %10 = sbr.rel (0) target = $region9
  $region8: #{gen_new_forward.3} parent=0 // pred_region
    _
  $region9: #{gen_new_forward.3} parent=0 // pred_fallthru
    _
  %v11 = vld [vmem:[%s1] sm:$0xff]
  %v12 = vld [vmem:[%s1 + $0x8] sm:$0xff]
  %v13 = vld [vmem:[%s1 + $0x10] sm:$0xff]
  %v14 = vld [vmem:[%s1 + $0x18] sm:$0xff]
  %s15 = scalar_lea.vmem %s1, 64
  %v16 = vld [vmem:[%s15] sm:$0xff]
  %v17 = vld [vmem:[%s15 + $0x8] sm:$0xff]
  %v18 = vld [vmem:[%s15 + $0x10] sm:$0xff]
  %v19 = vld [vmem:[%s15 + $0x18] sm:$0xff]
  %s20 = scalar_lea.vmem %s1, 128
  %v21 = vld [vmem:[%s20] sm:$0xff]
  %v22 = vld [vmem:[%s20 + $0x8] sm:$0xff]
  %v23 = vld [vmem:[%s20 + $0x10] sm:$0xff]
  %v24 = vld [vmem:[%s20 + $0x18] sm:$0xff]
  %v25 = vfloor.f32 %v11
  %v26 = vfloor.f32 %v12
  %v27 = vfloor.f32 %v13
  %v28 = vfloor.f32 %v14
  %v29 = vfloor.f32 %v16
  %v30 = vfloor.f32 %v17
  %v31 = vfloor.f32 %v18
  %v32 = vfloor.f32 %v19
  %v33 = vfloor.f32 %v21
  %v34 = vfloor.f32 %v22
  %v35 = vfloor.f32 %v23
  %v36 = vfloor.f32 %v24
  %v37 = vsub.f32 %v11, %v25
  %v38 = vsub.f32 %v12, %v26
  %v39 = vsub.f32 %v13, %v27
  %v40 = vsub.f32 %v14, %v28
  %v41 = vsub.f32 %v16, %v29
  %v42 = vsub.f32 %v17, %v30
  %v43 = vsub.f32 %v18, %v31
  %v44 = vsub.f32 %v19, %v32
  %v45 = vsub.f32 %v21, %v33
  %v46 = vsub.f32 %v22, %v34
  %v47 = vsub.f32 %v23, %v35
  %v48 = vsub.f32 %v24, %v36
  %v49 = vsub.f32 1.0, %v37
  %v50 = vsub.f32 1.0, %v38
  %v51 = vsub.f32 1.0, %v39
  %v52 = vsub.f32 1.0, %v40
  %vm53 = vcmp.ge.f32.partialorder %v25, 0.0
  %vm54 = vcmp.ge.f32.partialorder %v26, 0.0
  %vm55 = vcmp.ge.f32.partialorder %v27, 0.0
  %vm56 = vcmp.ge.f32.partialorder %v28, 0.0
  %vm57 = vcmp.le.f32.partialorder %v25, 15.0
  %vm58 = vcmp.le.f32.partialorder %v26, 15.0
  %vm59 = vcmp.le.f32.partialorder %v27, 15.0
  %vm60 = vcmp.le.f32.partialorder %v28, 15.0
  %vm61 = vmand %vm53, %vm57
  %vm62 = vmand %vm54, %vm58
  %vm63 = vmand %vm55, %vm59
  %vm64 = vmand %vm56, %vm60
  %v65 = vsel %vm61, 1, 0
  %v66 = vsel %vm62, 1, 0
  %v67 = vsel %vm63, 1, 0
  %v68 = vsel %vm64, 1, 0
  %v69 = vcvt.s32.f32 %v65
  %v70 = vcvt.s32.f32 %v66
  %v71 = vcvt.s32.f32 %v67
  %v72 = vcvt.s32.f32 %v68
  %v73 = vmul.f32 %v49, %v69
  %v74 = vmul.f32 %v50, %v70
  %v75 = vmul.f32 %v51, %v71
  %v76 = vmul.f32 %v52, %v72
  %v77 = vadd.f32 %v25, 1.0
  %v78 = vadd.f32 %v26, 1.0
  %v79 = vadd.f32 %v27, 1.0
  %v80 = vadd.f32 %v28, 1.0
  %vm81 = vcmp.ge.f32.partialorder %v77, 0.0
  %vm82 = vcmp.ge.f32.partialorder %v78, 0.0
  %vm83 = vcmp.ge.f32.partialorder %v79, 0.0
  %vm84 = vcmp.ge.f32.partialorder %v80, 0.0
  %vm85 = vcmp.le.f32.partialorder %v77, 15.0
  %vm86 = vcmp.le.f32.partialorder %v78, 15.0
  %vm87 = vcmp.le.f32.partialorder %v79, 15.0
  %vm88 = vcmp.le.f32.partialorder %v80, 15.0
  %vm89 = vmand %vm81, %vm85
  %vm90 = vmand %vm82, %vm86
  %vm91 = vmand %vm83, %vm87
  %vm92 = vmand %vm84, %vm88
  %v93 = vsel %vm89, 1, 0
  %v94 = vsel %vm90, 1, 0
  %v95 = vsel %vm91, 1, 0
  %v96 = vsel %vm92, 1, 0
  %v97 = vcvt.s32.f32 %v93
  %v98 = vcvt.s32.f32 %v94
  %v99 = vcvt.s32.f32 %v95
  %v100 = vcvt.s32.f32 %v96
  %v101 = vmul.f32 %v37, %v97
  %v102 = vmul.f32 %v38, %v98
  %v103 = vmul.f32 %v39, %v99
  %v104 = vmul.f32 %v40, %v100
  %v105 = vsub.f32 1.0, %v41
  %v106 = vsub.f32 1.0, %v42
  %v107 = vsub.f32 1.0, %v43
  %v108 = vsub.f32 1.0, %v44
  %vm109 = vcmp.ge.f32.partialorder %v29, 0.0
  %vm110 = vcmp.ge.f32.partialorder %v30, 0.0
  %vm111 = vcmp.ge.f32.partialorder %v31, 0.0
  %vm112 = vcmp.ge.f32.partialorder %v32, 0.0
  %vm113 = vcmp.le.f32.partialorder %v29, 15.0
  %vm114 = vcmp.le.f32.partialorder %v30, 15.0
  %vm115 = vcmp.le.f32.partialorder %v31, 15.0
  %vm116 = vcmp.le.f32.partialorder %v32, 15.0
  %vm117 = vmand %vm109, %vm113
  %vm118 = vmand %vm110, %vm114
  %vm119 = vmand %vm111, %vm115
  %vm120 = vmand %vm112, %vm116
  %v121 = vsel %vm117, 1, 0
  %v122 = vsel %vm118, 1, 0
  %v123 = vsel %vm119, 1, 0
  %v124 = vsel %vm120, 1, 0
  %v125 = vcvt.s32.f32 %v121
  %v126 = vcvt.s32.f32 %v122
  %v127 = vcvt.s32.f32 %v123
  %v128 = vcvt.s32.f32 %v124
  %v129 = vmul.f32 %v105, %v125
  %v130 = vmul.f32 %v106, %v126
  %v131 = vmul.f32 %v107, %v127
  %v132 = vmul.f32 %v108, %v128
  %v133 = vadd.f32 %v29, 1.0
  %v134 = vadd.f32 %v30, 1.0
  %v135 = vadd.f32 %v31, 1.0
  %v136 = vadd.f32 %v32, 1.0
  %vm137 = vcmp.ge.f32.partialorder %v133, 0.0
  %vm138 = vcmp.ge.f32.partialorder %v134, 0.0
  %vm139 = vcmp.ge.f32.partialorder %v135, 0.0
  %vm140 = vcmp.ge.f32.partialorder %v136, 0.0
  %vm141 = vcmp.le.f32.partialorder %v133, 15.0
  %vm142 = vcmp.le.f32.partialorder %v134, 15.0
  %vm143 = vcmp.le.f32.partialorder %v135, 15.0
  %vm144 = vcmp.le.f32.partialorder %v136, 15.0
  %vm145 = vmand %vm137, %vm141
  %vm146 = vmand %vm138, %vm142
  %vm147 = vmand %vm139, %vm143
  %vm148 = vmand %vm140, %vm144
  %v149 = vsel %vm145, 1, 0
  %v150 = vsel %vm146, 1, 0
  %v151 = vsel %vm147, 1, 0
  %v152 = vsel %vm148, 1, 0
  %v153 = vcvt.s32.f32 %v149
  %v154 = vcvt.s32.f32 %v150
  %v155 = vcvt.s32.f32 %v151
  %v156 = vcvt.s32.f32 %v152
  %v157 = vmul.f32 %v41, %v153
  %v158 = vmul.f32 %v42, %v154
  %v159 = vmul.f32 %v43, %v155
  %v160 = vmul.f32 %v44, %v156
  %v161 = vsub.f32 1.0, %v45
  %v162 = vsub.f32 1.0, %v46
  %v163 = vsub.f32 1.0, %v47
  %v164 = vsub.f32 1.0, %v48
  %vm165 = vcmp.ge.f32.partialorder %v33, 0.0
  %vm166 = vcmp.ge.f32.partialorder %v34, 0.0
  %vm167 = vcmp.ge.f32.partialorder %v35, 0.0
  %vm168 = vcmp.ge.f32.partialorder %v36, 0.0
  %vm169 = vcmp.le.f32.partialorder %v33, 15.0
  %vm170 = vcmp.le.f32.partialorder %v34, 15.0
  %vm171 = vcmp.le.f32.partialorder %v35, 15.0
  %vm172 = vcmp.le.f32.partialorder %v36, 15.0
  %vm173 = vmand %vm165, %vm169
  %vm174 = vmand %vm166, %vm170
  %vm175 = vmand %vm167, %vm171
  %vm176 = vmand %vm168, %vm172
  %v177 = vsel %vm173, 1, 0
  %v178 = vsel %vm174, 1, 0
  %v179 = vsel %vm175, 1, 0
  %v180 = vsel %vm176, 1, 0
  %v181 = vcvt.s32.f32 %v177
  %v182 = vcvt.s32.f32 %v178
  %v183 = vcvt.s32.f32 %v179
  %v184 = vcvt.s32.f32 %v180
  %v185 = vmul.f32 %v161, %v181
  %v186 = vmul.f32 %v162, %v182
  %v187 = vmul.f32 %v163, %v183
  %v188 = vmul.f32 %v164, %v184
  %v189 = vadd.f32 %v33, 1.0
  %v190 = vadd.f32 %v34, 1.0
  %v191 = vadd.f32 %v35, 1.0
  %v192 = vadd.f32 %v36, 1.0
  %vm193 = vcmp.ge.f32.partialorder %v189, 0.0
  %vm194 = vcmp.ge.f32.partialorder %v190, 0.0
  %vm195 = vcmp.ge.f32.partialorder %v191, 0.0
  %vm196 = vcmp.ge.f32.partialorder %v192, 0.0
  %vm197 = vcmp.le.f32.partialorder %v189, 15.0
  %vm198 = vcmp.le.f32.partialorder %v190, 15.0
  %vm199 = vcmp.le.f32.partialorder %v191, 15.0
  %vm200 = vcmp.le.f32.partialorder %v192, 15.0
  %vm201 = vmand %vm193, %vm197
  %vm202 = vmand %vm194, %vm198
  %vm203 = vmand %vm195, %vm199
  %vm204 = vmand %vm196, %vm200
  %v205 = vsel %vm201, 1, 0
  %v206 = vsel %vm202, 1, 0
  %v207 = vsel %vm203, 1, 0
  %v208 = vsel %vm204, 1, 0
  %v209 = vcvt.s32.f32 %v205
  %v210 = vcvt.s32.f32 %v206
  %v211 = vcvt.s32.f32 %v207
  %v212 = vcvt.s32.f32 %v208
  %v213 = vmul.f32 %v45, %v209
  %v214 = vmul.f32 %v46, %v210
  %v215 = vmul.f32 %v47, %v211
  %v216 = vmul.f32 %v48, %v212
  %v217 = vmul.f32 %v73, %v129
  %v218 = vmul.f32 %v74, %v130
  %v219 = vmul.f32 %v75, %v131
  %v220 = vmul.f32 %v76, %v132
  %v221 = vmul.f32 %v217, %v185
  %v222 = vmul.f32 %v218, %v186
  %v223 = vmul.f32 %v219, %v187
  %v224 = vmul.f32 %v220, %v188
  %v225 = vmul.f32 %v217, %v213
  %v226 = vmul.f32 %v218, %v214
  %v227 = vmul.f32 %v219, %v215
  %v228 = vmul.f32 %v220, %v216
  %v229 = vmul.f32 %v73, %v157
  %v230 = vmul.f32 %v74, %v158
  %v231 = vmul.f32 %v75, %v159
  %v232 = vmul.f32 %v76, %v160
  %v233 = vmul.f32 %v229, %v185
  %v234 = vmul.f32 %v230, %v186
  %v235 = vmul.f32 %v231, %v187
  %v236 = vmul.f32 %v232, %v188
  %v237 = vmul.f32 %v229, %v213
  %v238 = vmul.f32 %v230, %v214
  %v239 = vmul.f32 %v231, %v215
  %v240 = vmul.f32 %v232, %v216
  %v241 = vmul.f32 %v101, %v129
  %v242 = vmul.f32 %v102, %v130
  %v243 = vmul.f32 %v103, %v131
  %v244 = vmul.f32 %v104, %v132
  %v245 = vmul.f32 %v241, %v185
  %v246 = vmul.f32 %v242, %v186
  %v247 = vmul.f32 %v243, %v187
  %v248 = vmul.f32 %v244, %v188
  %v249 = vmul.f32 %v241, %v213
  %v250 = vmul.f32 %v242, %v214
  %v251 = vmul.f32 %v243, %v215
  %v252 = vmul.f32 %v244, %v216
  %v253 = vmul.f32 %v101, %v157
  %v254 = vmul.f32 %v102, %v158
  %v255 = vmul.f32 %v103, %v159
  %v256 = vmul.f32 %v104, %v160
  %v257 = vmul.f32 %v253, %v185
  %v258 = vmul.f32 %v254, %v186
  %v259 = vmul.f32 %v255, %v187
  %v260 = vmul.f32 %v256, %v188
  %v261 = vmul.f32 %v253, %v213
  %v262 = vmul.f32 %v254, %v214
  %v263 = vmul.f32 %v255, %v215
  %v264 = vmul.f32 %v256, %v216
  %v265 = vld [vmem:[%s0] sm:$0xff]
  %v266 = vld [vmem:[%s0 + $0x8] sm:$0xff]
  %v267 = vld [vmem:[%s0 + $0x10] sm:$0xff]
  %v268 = vld [vmem:[%s0 + $0x18] sm:$0xff]
  %v269 = vmul.f32 %v221, %v265
  %v270 = vmul.f32 %v222, %v266
  %v271 = vmul.f32 %v223, %v267
  %v272 = vmul.f32 %v224, %v268
  %s273 = scalar_lea.vmem %s0, 128
  %v274 = vld [vmem:[%s273] sm:$0xff]
  %v275 = vld [vmem:[%s273 + $0x8] sm:$0xff]
  %v276 = vld [vmem:[%s273 + $0x10] sm:$0xff]
  %v277 = vld [vmem:[%s273 + $0x18] sm:$0xff]
  %v278 = vmul.f32 %v225, %v274
  %v279 = vmul.f32 %v226, %v275
  %v280 = vmul.f32 %v227, %v276
  %v281 = vmul.f32 %v228, %v277
  %v282 = vadd.f32 %v269, %v278
  %v283 = vadd.f32 %v270, %v279
  %v284 = vadd.f32 %v271, %v280
  %v285 = vadd.f32 %v272, %v281
  %s286 = scalar_lea.vmem %s0, 256
  %v287 = vld [vmem:[%s286] sm:$0xff]
  %v288 = vld [vmem:[%s286 + $0x8] sm:$0xff]
  %v289 = vld [vmem:[%s286 + $0x10] sm:$0xff]
  %v290 = vld [vmem:[%s286 + $0x18] sm:$0xff]
  %v291 = vmul.f32 %v233, %v287
  %v292 = vmul.f32 %v234, %v288
  %v293 = vmul.f32 %v235, %v289
  %v294 = vmul.f32 %v236, %v290
  %v295 = vadd.f32 %v282, %v291
  %v296 = vadd.f32 %v283, %v292
  %v297 = vadd.f32 %v284, %v293
  %v298 = vadd.f32 %v285, %v294
  %s299 = scalar_lea.vmem %s0, 384
  %v300 = vld [vmem:[%s299] sm:$0xff]
  %v301 = vld [vmem:[%s299 + $0x8] sm:$0xff]
  %v302 = vld [vmem:[%s299 + $0x10] sm:$0xff]
  %v303 = vld [vmem:[%s299 + $0x18] sm:$0xff]
  %v304 = vmul.f32 %v237, %v300
  %v305 = vmul.f32 %v238, %v301
  %v306 = vmul.f32 %v239, %v302
  %v307 = vmul.f32 %v240, %v303
  %v308 = vadd.f32 %v295, %v304
  %v309 = vadd.f32 %v296, %v305
  %v310 = vadd.f32 %v297, %v306
  %v311 = vadd.f32 %v298, %v307
  %s312 = scalar_lea.vmem %s0, 512
  %v313 = vld [vmem:[%s312] sm:$0xff]
  %v314 = vld [vmem:[%s312 + $0x8] sm:$0xff]
  %v315 = vld [vmem:[%s312 + $0x10] sm:$0xff]
  %v316 = vld [vmem:[%s312 + $0x18] sm:$0xff]
  %v317 = vmul.f32 %v245, %v313
  %v318 = vmul.f32 %v246, %v314
  %v319 = vmul.f32 %v247, %v315
  %v320 = vmul.f32 %v248, %v316
  %v321 = vadd.f32 %v308, %v317
  %v322 = vadd.f32 %v309, %v318
  %v323 = vadd.f32 %v310, %v319
  %v324 = vadd.f32 %v311, %v320
  %s325 = scalar_lea.vmem %s0, 640
  %v326 = vld [vmem:[%s325] sm:$0xff]
  %v327 = vld [vmem:[%s325 + $0x8] sm:$0xff]
  %v328 = vld [vmem:[%s325 + $0x10] sm:$0xff]
  %v329 = vld [vmem:[%s325 + $0x18] sm:$0xff]
  %v330 = vmul.f32 %v249, %v326
  %v331 = vmul.f32 %v250, %v327
  %v332 = vmul.f32 %v251, %v328
  %v333 = vmul.f32 %v252, %v329
  %v334 = vadd.f32 %v321, %v330
  %v335 = vadd.f32 %v322, %v331
  %v336 = vadd.f32 %v323, %v332
  %v337 = vadd.f32 %v324, %v333
  %s338 = scalar_lea.vmem %s0, 768
  %v339 = vld [vmem:[%s338] sm:$0xff]
  %v340 = vld [vmem:[%s338 + $0x8] sm:$0xff]
  %v341 = vld [vmem:[%s338 + $0x10] sm:$0xff]
  %v342 = vld [vmem:[%s338 + $0x18] sm:$0xff]
  %v343 = vmul.f32 %v257, %v339
  %v344 = vmul.f32 %v258, %v340
  %v345 = vmul.f32 %v259, %v341
  %v346 = vmul.f32 %v260, %v342
  %v347 = vadd.f32 %v334, %v343
  %v348 = vadd.f32 %v335, %v344
  %v349 = vadd.f32 %v336, %v345
  %v350 = vadd.f32 %v337, %v346
  %s351 = scalar_lea.vmem %s0, 896
  %v352 = vld [vmem:[%s351] sm:$0xff]
  %v353 = vld [vmem:[%s351 + $0x8] sm:$0xff]
  %v354 = vld [vmem:[%s351 + $0x10] sm:$0xff]
  %v355 = vld [vmem:[%s351 + $0x18] sm:$0xff]
  %v356 = vmul.f32 %v261, %v352
  %v357 = vmul.f32 %v262, %v353
  %v358 = vmul.f32 %v263, %v354
  %v359 = vmul.f32 %v264, %v355
  %v360 = vadd.f32 %v347, %v356
  %v361 = vadd.f32 %v348, %v357
  %v362 = vadd.f32 %v349, %v358
  %v363 = vadd.f32 %v350, %v359
  %364 = vst [vmem:[%s2] sm:$0xff] %v360
  %365 = vst [vmem:[%s2 + $0x8] sm:$0xff] %v361
  %366 = vst [vmem:[%s2 + $0x10] sm:$0xff] %v362
  %367 = vst [vmem:[%s2 + $0x18] sm:$0xff] %v363
  %s368 = scalar_lea.vmem %s0, 32
  %v369 = vld [vmem:[%s368] sm:$0xff]
  %v370 = vld [vmem:[%s368 + $0x8] sm:$0xff]
  %v371 = vld [vmem:[%s368 + $0x10] sm:$0xff]
  %v372 = vld [vmem:[%s368 + $0x18] sm:$0xff]
  %v373 = vmul.f32 %v221, %v369
  %v374 = vmul.f32 %v222, %v370
  %v375 = vmul.f32 %v223, %v371
  %v376 = vmul.f32 %v224, %v372
  %s377 = scalar_lea.vmem %s0, 160
  %v378 = vld [vmem:[%s377] sm:$0xff]
  %v379 = vld [vmem:[%s377 + $0x8] sm:$0xff]
  %v380 = vld [vmem:[%s377 + $0x10] sm:$0xff]
  %v381 = vld [vmem:[%s377 + $0x18] sm:$0xff]
  %v382 = vmul.f32 %v225, %v378
  %v383 = vmul.f32 %v226, %v379
  %v384 = vmul.f32 %v227, %v380
  %v385 = vmul.f32 %v228, %v381
  %v386 = vadd.f32 %v373, %v382
  %v387 = vadd.f32 %v374, %v383
  %v388 = vadd.f32 %v375, %v384
  %v389 = vadd.f32 %v376, %v385
  %s390 = scalar_lea.vmem %s0, 288
  %v391 = vld [vmem:[%s390] sm:$0xff]
  %v392 = vld [vmem:[%s390 + $0x8] sm:$0xff]
  %v393 = vld [vmem:[%s390 + $0x10] sm:$0xff]
  %v394 = vld [vmem:[%s390 + $0x18] sm:$0xff]
  %v395 = vmul.f32 %v233, %v391
  %v396 = vmul.f32 %v234, %v392
  %v397 = vmul.f32 %v235, %v393
  %v398 = vmul.f32 %v236, %v394
  %v399 = vadd.f32 %v386, %v395
  %v400 = vadd.f32 %v387, %v396
  %v401 = vadd.f32 %v388, %v397
  %v402 = vadd.f32 %v389, %v398
  %s403 = scalar_lea.vmem %s0, 416
  %v404 = vld [vmem:[%s403] sm:$0xff]
  %v405 = vld [vmem:[%s403 + $0x8] sm:$0xff]
  %v406 = vld [vmem:[%s403 + $0x10] sm:$0xff]
  %v407 = vld [vmem:[%s403 + $0x18] sm:$0xff]
  %v408 = vmul.f32 %v237, %v404
  %v409 = vmul.f32 %v238, %v405
  %v410 = vmul.f32 %v239, %v406
  %v411 = vmul.f32 %v240, %v407
  %v412 = vadd.f32 %v399, %v408
  %v413 = vadd.f32 %v400, %v409
  %v414 = vadd.f32 %v401, %v410
  %v415 = vadd.f32 %v402, %v411
  %s416 = scalar_lea.vmem %s0, 544
  %v417 = vld [vmem:[%s416] sm:$0xff]
  %v418 = vld [vmem:[%s416 + $0x8] sm:$0xff]
  %v419 = vld [vmem:[%s416 + $0x10] sm:$0xff]
  %v420 = vld [vmem:[%s416 + $0x18] sm:$0xff]
  %v421 = vmul.f32 %v245, %v417
  %v422 = vmul.f32 %v246, %v418
  %v423 = vmul.f32 %v247, %v419
  %v424 = vmul.f32 %v248, %v420
  %v425 = vadd.f32 %v412, %v421
  %v426 = vadd.f32 %v413, %v422
  %v427 = vadd.f32 %v414, %v423
  %v428 = vadd.f32 %v415, %v424
  %s429 = scalar_lea.vmem %s0, 672
  %v430 = vld [vmem:[%s429] sm:$0xff]
  %v431 = vld [vmem:[%s429 + $0x8] sm:$0xff]
  %v432 = vld [vmem:[%s429 + $0x10] sm:$0xff]
  %v433 = vld [vmem:[%s429 + $0x18] sm:$0xff]
  %v434 = vmul.f32 %v249, %v430
  %v435 = vmul.f32 %v250, %v431
  %v436 = vmul.f32 %v251, %v432
  %v437 = vmul.f32 %v252, %v433
  %v438 = vadd.f32 %v425, %v434
  %v439 = vadd.f32 %v426, %v435
  %v440 = vadd.f32 %v427, %v436
  %v441 = vadd.f32 %v428, %v437
  %s442 = scalar_lea.vmem %s0, 800
  %v443 = vld [vmem:[%s442] sm:$0xff]
  %v444 = vld [vmem:[%s442 + $0x8] sm:$0xff]
  %v445 = vld [vmem:[%s442 + $0x10] sm:$0xff]
  %v446 = vld [vmem:[%s442 + $0x18] sm:$0xff]
  %v447 = vmul.f32 %v257, %v443
  %v448 = vmul.f32 %v258, %v444
  %v449 = vmul.f32 %v259, %v445
  %v450 = vmul.f32 %v260, %v446
  %v451 = vadd.f32 %v438, %v447
  %v452 = vadd.f32 %v439, %v448
  %v453 = vadd.f32 %v440, %v449
  %v454 = vadd.f32 %v441, %v450
  %s455 = scalar_lea.vmem %s0, 928
  %v456 = vld [vmem:[%s455] sm:$0xff]
  %v457 = vld [vmem:[%s455 + $0x8] sm:$0xff]
  %v458 = vld [vmem:[%s455 + $0x10] sm:$0xff]
  %v459 = vld [vmem:[%s455 + $0x18] sm:$0xff]
  %v460 = vmul.f32 %v261, %v456
  %v461 = vmul.f32 %v262, %v457
  %v462 = vmul.f32 %v263, %v458
  %v463 = vmul.f32 %v264, %v459
  %v464 = vadd.f32 %v451, %v460
  %v465 = vadd.f32 %v452, %v461
  %v466 = vadd.f32 %v453, %v462
  %v467 = vadd.f32 %v454, %v463
  %s468 = scalar_lea.vmem %s2, 32
  %469 = vst [vmem:[%s468] sm:$0xff] %v464
  %470 = vst [vmem:[%s468 + $0x8] sm:$0xff] %v465
  %471 = vst [vmem:[%s468 + $0x10] sm:$0xff] %v466
  %472 = vst [vmem:[%s468 + $0x18] sm:$0xff] %v467
  %s473 = scalar_lea.vmem %s1, 32
  %v474 = vld [vmem:[%s473] sm:$0xff]
  %v475 = vld [vmem:[%s473 + $0x8] sm:$0xff]
  %v476 = vld [vmem:[%s473 + $0x10] sm:$0xff]
  %v477 = vld [vmem:[%s473 + $0x18] sm:$0xff]
  %s478 = scalar_lea.vmem %s1, 96
  %v479 = vld [vmem:[%s478] sm:$0xff]
  %v480 = vld [vmem:[%s478 + $0x8] sm:$0xff]
  %v481 = vld [vmem:[%s478 + $0x10] sm:$0xff]
  %v482 = vld [vmem:[%s478 + $0x18] sm:$0xff]
  %s483 = scalar_lea.vmem %s1, 160
  %v484 = vld [vmem:[%s483] sm:$0xff]
  %v485 = vld [vmem:[%s483 + $0x8] sm:$0xff]
  %v486 = vld [vmem:[%s483 + $0x10] sm:$0xff]
  %v487 = vld [vmem:[%s483 + $0x18] sm:$0xff]
  %v488 = vfloor.f32 %v474
  %v489 = vfloor.f32 %v475
  %v490 = vfloor.f32 %v476
  %v491 = vfloor.f32 %v477
  %v492 = vfloor.f32 %v479
  %v493 = vfloor.f32 %v480
  %v494 = vfloor.f32 %v481
  %v495 = vfloor.f32 %v482
  %v496 = vfloor.f32 %v484
  %v497 = vfloor.f32 %v485
  %v498 = vfloor.f32 %v486
  %v499 = vfloor.f32 %v487
  %v500 = vsub.f32 %v474, %v488
  %v501 = vsub.f32 %v475, %v489
  %v502 = vsub.f32 %v476, %v490
  %v503 = vsub.f32 %v477, %v491
  %v504 = vsub.f32 %v479, %v492
  %v505 = vsub.f32 %v480, %v493
  %v506 = vsub.f32 %v481, %v494
  %v507 = vsub.f32 %v482, %v495
  %v508 = vsub.f32 %v484, %v496
  %v509 = vsub.f32 %v485, %v497
  %v510 = vsub.f32 %v486, %v498
  %v511 = vsub.f32 %v487, %v499
  %v512 = vsub.f32 1.0, %v500
  %v513 = vsub.f32 1.0, %v501
  %v514 = vsub.f32 1.0, %v502
  %v515 = vsub.f32 1.0, %v503
  %vm516 = vcmp.ge.f32.partialorder %v488, 0.0
  %vm517 = vcmp.ge.f32.partialorder %v489, 0.0
  %vm518 = vcmp.ge.f32.partialorder %v490, 0.0
  %vm519 = vcmp.ge.f32.partialorder %v491, 0.0
  %vm520 = vcmp.le.f32.partialorder %v488, 15.0
  %vm521 = vcmp.le.f32.partialorder %v489, 15.0
  %vm522 = vcmp.le.f32.partialorder %v490, 15.0
  %vm523 = vcmp.le.f32.partialorder %v491, 15.0
  %vm524 = vmand %vm516, %vm520
  %vm525 = vmand %vm517, %vm521
  %vm526 = vmand %vm518, %vm522
  %vm527 = vmand %vm519, %vm523
  %v528 = vsel %vm524, 1, 0
  %v529 = vsel %vm525, 1, 0
  %v530 = vsel %vm526, 1, 0
  %v531 = vsel %vm527, 1, 0
  %v532 = vcvt.s32.f32 %v528
  %v533 = vcvt.s32.f32 %v529
  %v534 = vcvt.s32.f32 %v530
  %v535 = vcvt.s32.f32 %v531
  %v536 = vmul.f32 %v512, %v532
  %v537 = vmul.f32 %v513, %v533
  %v538 = vmul.f32 %v514, %v534
  %v539 = vmul.f32 %v515, %v535
  %v540 = vadd.f32 %v488, 1.0
  %v541 = vadd.f32 %v489, 1.0
  %v542 = vadd.f32 %v490, 1.0
  %v543 = vadd.f32 %v491, 1.0
  %vm544 = vcmp.ge.f32.partialorder %v540, 0.0
  %vm545 = vcmp.ge.f32.partialorder %v541, 0.0
  %vm546 = vcmp.ge.f32.partialorder %v542, 0.0
  %vm547 = vcmp.ge.f32.partialorder %v543, 0.0
  %vm548 = vcmp.le.f32.partialorder %v540, 15.0
  %vm549 = vcmp.le.f32.partialorder %v541, 15.0
  %vm550 = vcmp.le.f32.partialorder %v542, 15.0
  %vm551 = vcmp.le.f32.partialorder %v543, 15.0
  %vm552 = vmand %vm544, %vm548
  %vm553 = vmand %vm545, %vm549
  %vm554 = vmand %vm546, %vm550
  %vm555 = vmand %vm547, %vm551
  %v556 = vsel %vm552, 1, 0
  %v557 = vsel %vm553, 1, 0
  %v558 = vsel %vm554, 1, 0
  %v559 = vsel %vm555, 1, 0
  %v560 = vcvt.s32.f32 %v556
  %v561 = vcvt.s32.f32 %v557
  %v562 = vcvt.s32.f32 %v558
  %v563 = vcvt.s32.f32 %v559
  %v564 = vmul.f32 %v500, %v560
  %v565 = vmul.f32 %v501, %v561
  %v566 = vmul.f32 %v502, %v562
  %v567 = vmul.f32 %v503, %v563
  %v568 = vsub.f32 1.0, %v504
  %v569 = vsub.f32 1.0, %v505
  %v570 = vsub.f32 1.0, %v506
  %v571 = vsub.f32 1.0, %v507
  %vm572 = vcmp.ge.f32.partialorder %v492, 0.0
  %vm573 = vcmp.ge.f32.partialorder %v493, 0.0
  %vm574 = vcmp.ge.f32.partialorder %v494, 0.0
  %vm575 = vcmp.ge.f32.partialorder %v495, 0.0
  %vm576 = vcmp.le.f32.partialorder %v492, 15.0
  %vm577 = vcmp.le.f32.partialorder %v493, 15.0
  %vm578 = vcmp.le.f32.partialorder %v494, 15.0
  %vm579 = vcmp.le.f32.partialorder %v495, 15.0
  %vm580 = vmand %vm572, %vm576
  %vm581 = vmand %vm573, %vm577
  %vm582 = vmand %vm574, %vm578
  %vm583 = vmand %vm575, %vm579
  %v584 = vsel %vm580, 1, 0
  %v585 = vsel %vm581, 1, 0
  %v586 = vsel %vm582, 1, 0
  %v587 = vsel %vm583, 1, 0
  %v588 = vcvt.s32.f32 %v584
  %v589 = vcvt.s32.f32 %v585
  %v590 = vcvt.s32.f32 %v586
  %v591 = vcvt.s32.f32 %v587
  %v592 = vmul.f32 %v568, %v588
  %v593 = vmul.f32 %v569, %v589
  %v594 = vmul.f32 %v570, %v590
  %v595 = vmul.f32 %v571, %v591
  %v596 = vadd.f32 %v492, 1.0
  %v597 = vadd.f32 %v493, 1.0
  %v598 = vadd.f32 %v494, 1.0
  %v599 = vadd.f32 %v495, 1.0
  %vm600 = vcmp.ge.f32.partialorder %v596, 0.0
  %vm601 = vcmp.ge.f32.partialorder %v597, 0.0
  %vm602 = vcmp.ge.f32.partialorder %v598, 0.0
  %vm603 = vcmp.ge.f32.partialorder %v599, 0.0
  %vm604 = vcmp.le.f32.partialorder %v596, 15.0
  %vm605 = vcmp.le.f32.partialorder %v597, 15.0
  %vm606 = vcmp.le.f32.partialorder %v598, 15.0
  %vm607 = vcmp.le.f32.partialorder %v599, 15.0
  %vm608 = vmand %vm600, %vm604
  %vm609 = vmand %vm601, %vm605
  %vm610 = vmand %vm602, %vm606
  %vm611 = vmand %vm603, %vm607
  %v612 = vsel %vm608, 1, 0
  %v613 = vsel %vm609, 1, 0
  %v614 = vsel %vm610, 1, 0
  %v615 = vsel %vm611, 1, 0
  %v616 = vcvt.s32.f32 %v612
  %v617 = vcvt.s32.f32 %v613
  %v618 = vcvt.s32.f32 %v614
  %v619 = vcvt.s32.f32 %v615
  %v620 = vmul.f32 %v504, %v616
  %v621 = vmul.f32 %v505, %v617
  %v622 = vmul.f32 %v506, %v618
  %v623 = vmul.f32 %v507, %v619
  %v624 = vsub.f32 1.0, %v508
  %v625 = vsub.f32 1.0, %v509
  %v626 = vsub.f32 1.0, %v510
  %v627 = vsub.f32 1.0, %v511
  %vm628 = vcmp.ge.f32.partialorder %v496, 0.0
  %vm629 = vcmp.ge.f32.partialorder %v497, 0.0
  %vm630 = vcmp.ge.f32.partialorder %v498, 0.0
  %vm631 = vcmp.ge.f32.partialorder %v499, 0.0
  %vm632 = vcmp.le.f32.partialorder %v496, 15.0
  %vm633 = vcmp.le.f32.partialorder %v497, 15.0
  %vm634 = vcmp.le.f32.partialorder %v498, 15.0
  %vm635 = vcmp.le.f32.partialorder %v499, 15.0
  %vm636 = vmand %vm628, %vm632
  %vm637 = vmand %vm629, %vm633
  %vm638 = vmand %vm630, %vm634
  %vm639 = vmand %vm631, %vm635
  %v640 = vsel %vm636, 1, 0
  %v641 = vsel %vm637, 1, 0
  %v642 = vsel %vm638, 1, 0
  %v643 = vsel %vm639, 1, 0
  %v644 = vcvt.s32.f32 %v640
  %v645 = vcvt.s32.f32 %v641
  %v646 = vcvt.s32.f32 %v642
  %v647 = vcvt.s32.f32 %v643
  %v648 = vmul.f32 %v624, %v644
  %v649 = vmul.f32 %v625, %v645
  %v650 = vmul.f32 %v626, %v646
  %v651 = vmul.f32 %v627, %v647
  %v652 = vadd.f32 %v496, 1.0
  %v653 = vadd.f32 %v497, 1.0
  %v654 = vadd.f32 %v498, 1.0
  %v655 = vadd.f32 %v499, 1.0
  %vm656 = vcmp.ge.f32.partialorder %v652, 0.0
  %vm657 = vcmp.ge.f32.partialorder %v653, 0.0
  %vm658 = vcmp.ge.f32.partialorder %v654, 0.0
  %vm659 = vcmp.ge.f32.partialorder %v655, 0.0
  %vm660 = vcmp.le.f32.partialorder %v652, 15.0
  %vm661 = vcmp.le.f32.partialorder %v653, 15.0
  %vm662 = vcmp.le.f32.partialorder %v654, 15.0
  %vm663 = vcmp.le.f32.partialorder %v655, 15.0
  %vm664 = vmand %vm656, %vm660
  %vm665 = vmand %vm657, %vm661
  %vm666 = vmand %vm658, %vm662
  %vm667 = vmand %vm659, %vm663
  %v668 = vsel %vm664, 1, 0
  %v669 = vsel %vm665, 1, 0
  %v670 = vsel %vm666, 1, 0
  %v671 = vsel %vm667, 1, 0
  %v672 = vcvt.s32.f32 %v668
  %v673 = vcvt.s32.f32 %v669
  %v674 = vcvt.s32.f32 %v670
  %v675 = vcvt.s32.f32 %v671
  %v676 = vmul.f32 %v508, %v672
  %v677 = vmul.f32 %v509, %v673
  %v678 = vmul.f32 %v510, %v674
  %v679 = vmul.f32 %v511, %v675
  %v680 = vmul.f32 %v536, %v592
  %v681 = vmul.f32 %v537, %v593
  %v682 = vmul.f32 %v538, %v594
  %v683 = vmul.f32 %v539, %v595
  %v684 = vmul.f32 %v680, %v648
  %v685 = vmul.f32 %v681, %v649
  %v686 = vmul.f32 %v682, %v650
  %v687 = vmul.f32 %v683, %v651
  %v688 = vmul.f32 %v680, %v676
  %v689 = vmul.f32 %v681, %v677
  %v690 = vmul.f32 %v682, %v678
  %v691 = vmul.f32 %v683, %v679
  %v692 = vmul.f32 %v536, %v620
  %v693 = vmul.f32 %v537, %v621
  %v694 = vmul.f32 %v538, %v622
  %v695 = vmul.f32 %v539, %v623
  %v696 = vmul.f32 %v692, %v648
  %v697 = vmul.f32 %v693, %v649
  %v698 = vmul.f32 %v694, %v650
  %v699 = vmul.f32 %v695, %v651
  %v700 = vmul.f32 %v692, %v676
  %v701 = vmul.f32 %v693, %v677
  %v702 = vmul.f32 %v694, %v678
  %v703 = vmul.f32 %v695, %v679
  %v704 = vmul.f32 %v564, %v592
  %v705 = vmul.f32 %v565, %v593
  %v706 = vmul.f32 %v566, %v594
  %v707 = vmul.f32 %v567, %v595
  %v708 = vmul.f32 %v704, %v648
  %v709 = vmul.f32 %v705, %v649
  %v710 = vmul.f32 %v706, %v650
  %v711 = vmul.f32 %v707, %v651
  %v712 = vmul.f32 %v704, %v676
  %v713 = vmul.f32 %v705, %v677
  %v714 = vmul.f32 %v706, %v678
  %v715 = vmul.f32 %v707, %v679
  %v716 = vmul.f32 %v564, %v620
  %v717 = vmul.f32 %v565, %v621
  %v718 = vmul.f32 %v566, %v622
  %v719 = vmul.f32 %v567, %v623
  %v720 = vmul.f32 %v716, %v648
  %v721 = vmul.f32 %v717, %v649
  %v722 = vmul.f32 %v718, %v650
  %v723 = vmul.f32 %v719, %v651
  %v724 = vmul.f32 %v716, %v676
  %v725 = vmul.f32 %v717, %v677
  %v726 = vmul.f32 %v718, %v678
  %v727 = vmul.f32 %v719, %v679
  %s728 = scalar_lea.vmem %s0, 64
  %v729 = vld [vmem:[%s728] sm:$0xff]
  %v730 = vld [vmem:[%s728 + $0x8] sm:$0xff]
  %v731 = vld [vmem:[%s728 + $0x10] sm:$0xff]
  %v732 = vld [vmem:[%s728 + $0x18] sm:$0xff]
  %v733 = vmul.f32 %v684, %v729
  %v734 = vmul.f32 %v685, %v730
  %v735 = vmul.f32 %v686, %v731
  %v736 = vmul.f32 %v687, %v732
  %s737 = scalar_lea.vmem %s0, 192
  %v738 = vld [vmem:[%s737] sm:$0xff]
  %v739 = vld [vmem:[%s737 + $0x8] sm:$0xff]
  %v740 = vld [vmem:[%s737 + $0x10] sm:$0xff]
  %v741 = vld [vmem:[%s737 + $0x18] sm:$0xff]
  %v742 = vmul.f32 %v688, %v738
  %v743 = vmul.f32 %v689, %v739
  %v744 = vmul.f32 %v690, %v740
  %v745 = vmul.f32 %v691, %v741
  %v746 = vadd.f32 %v733, %v742
  %v747 = vadd.f32 %v734, %v743
  %v748 = vadd.f32 %v735, %v744
  %v749 = vadd.f32 %v736, %v745
  %s750 = scalar_lea.vmem %s0, 320
  %v751 = vld [vmem:[%s750] sm:$0xff]
  %v752 = vld [vmem:[%s750 + $0x8] sm:$0xff]
  %v753 = vld [vmem:[%s750 + $0x10] sm:$0xff]
  %v754 = vld [vmem:[%s750 + $0x18] sm:$0xff]
  %v755 = vmul.f32 %v696, %v751
  %v756 = vmul.f32 %v697, %v752
  %v757 = vmul.f32 %v698, %v753
  %v758 = vmul.f32 %v699, %v754
  %v759 = vadd.f32 %v746, %v755
  %v760 = vadd.f32 %v747, %v756
  %v761 = vadd.f32 %v748, %v757
  %v762 = vadd.f32 %v749, %v758
  %s763 = scalar_lea.vmem %s0, 448
  %v764 = vld [vmem:[%s763] sm:$0xff]
  %v765 = vld [vmem:[%s763 + $0x8] sm:$0xff]
  %v766 = vld [vmem:[%s763 + $0x10] sm:$0xff]
  %v767 = vld [vmem:[%s763 + $0x18] sm:$0xff]
  %v768 = vmul.f32 %v700, %v764
  %v769 = vmul.f32 %v701, %v765
  %v770 = vmul.f32 %v702, %v766
  %v771 = vmul.f32 %v703, %v767
  %v772 = vadd.f32 %v759, %v768
  %v773 = vadd.f32 %v760, %v769
  %v774 = vadd.f32 %v761, %v770
  %v775 = vadd.f32 %v762, %v771
  %s776 = scalar_lea.vmem %s0, 576
  %v777 = vld [vmem:[%s776] sm:$0xff]
  %v778 = vld [vmem:[%s776 + $0x8] sm:$0xff]
  %v779 = vld [vmem:[%s776 + $0x10] sm:$0xff]
  %v780 = vld [vmem:[%s776 + $0x18] sm:$0xff]
  %v781 = vmul.f32 %v708, %v777
  %v782 = vmul.f32 %v709, %v778
  %v783 = vmul.f32 %v710, %v779
  %v784 = vmul.f32 %v711, %v780
  %v785 = vadd.f32 %v772, %v781
  %v786 = vadd.f32 %v773, %v782
  %v787 = vadd.f32 %v774, %v783
  %v788 = vadd.f32 %v775, %v784
  %s789 = scalar_lea.vmem %s0, 704
  %v790 = vld [vmem:[%s789] sm:$0xff]
  %v791 = vld [vmem:[%s789 + $0x8] sm:$0xff]
  %v792 = vld [vmem:[%s789 + $0x10] sm:$0xff]
  %v793 = vld [vmem:[%s789 + $0x18] sm:$0xff]
  %v794 = vmul.f32 %v712, %v790
  %v795 = vmul.f32 %v713, %v791
  %v796 = vmul.f32 %v714, %v792
  %v797 = vmul.f32 %v715, %v793
  %v798 = vadd.f32 %v785, %v794
  %v799 = vadd.f32 %v786, %v795
  %v800 = vadd.f32 %v787, %v796
  %v801 = vadd.f32 %v788, %v797
  %s802 = scalar_lea.vmem %s0, 832
  %v803 = vld [vmem:[%s802] sm:$0xff]
  %v804 = vld [vmem:[%s802 + $0x8] sm:$0xff]
  %v805 = vld [vmem:[%s802 + $0x10] sm:$0xff]
  %v806 = vld [vmem:[%s802 + $0x18] sm:$0xff]
  %v807 = vmul.f32 %v720, %v803
  %v808 = vmul.f32 %v721, %v804
  %v809 = vmul.f32 %v722, %v805
  %v810 = vmul.f32 %v723, %v806
  %v811 = vadd.f32 %v798, %v807
  %v812 = vadd.f32 %v799, %v808
  %v813 = vadd.f32 %v800, %v809
  %v814 = vadd.f32 %v801, %v810
  %s815 = scalar_lea.vmem %s0, 960
  %v816 = vld [vmem:[%s815] sm:$0xff]
  %v817 = vld [vmem:[%s815 + $0x8] sm:$0xff]
  %v818 = vld [vmem:[%s815 + $0x10] sm:$0xff]
  %v819 = vld [vmem:[%s815 + $0x18] sm:$0xff]
  %v820 = vmul.f32 %v724, %v816
  %v821 = vmul.f32 %v725, %v817
  %v822 = vmul.f32 %v726, %v818
  %v823 = vmul.f32 %v727, %v819
  %v824 = vadd.f32 %v811, %v820
  %v825 = vadd.f32 %v812, %v821
  %v826 = vadd.f32 %v813, %v822
  %v827 = vadd.f32 %v814, %v823
  %s828 = scalar_lea.vmem %s2, 64
  %829 = vst [vmem:[%s828] sm:$0xff] %v824
  %830 = vst [vmem:[%s828 + $0x8] sm:$0xff] %v825
  %831 = vst [vmem:[%s828 + $0x10] sm:$0xff] %v826
  %832 = vst [vmem:[%s828 + $0x18] sm:$0xff] %v827
  %s833 = scalar_lea.vmem %s0, 96
  %v834 = vld [vmem:[%s833] sm:$0xff]
  %v835 = vld [vmem:[%s833 + $0x8] sm:$0xff]
  %v836 = vld [vmem:[%s833 + $0x10] sm:$0xff]
  %v837 = vld [vmem:[%s833 + $0x18] sm:$0xff]
  %v838 = vmul.f32 %v684, %v834
  %v839 = vmul.f32 %v685, %v835
  %v840 = vmul.f32 %v686, %v836
  %v841 = vmul.f32 %v687, %v837
  %s842 = scalar_lea.vmem %s0, 224
  %v843 = vld [vmem:[%s842] sm:$0xff]
  %v844 = vld [vmem:[%s842 + $0x8] sm:$0xff]
  %v845 = vld [vmem:[%s842 + $0x10] sm:$0xff]
  %v846 = vld [vmem:[%s842 + $0x18] sm:$0xff]
  %v847 = vmul.f32 %v688, %v843
  %v848 = vmul.f32 %v689, %v844
  %v849 = vmul.f32 %v690, %v845
  %v850 = vmul.f32 %v691, %v846
  %v851 = vadd.f32 %v838, %v847
  %v852 = vadd.f32 %v839, %v848
  %v853 = vadd.f32 %v840, %v849
  %v854 = vadd.f32 %v841, %v850
  %s855 = scalar_lea.vmem %s0, 352
  %v856 = vld [vmem:[%s855] sm:$0xff]
  %v857 = vld [vmem:[%s855 + $0x8] sm:$0xff]
  %v858 = vld [vmem:[%s855 + $0x10] sm:$0xff]
  %v859 = vld [vmem:[%s855 + $0x18] sm:$0xff]
  %v860 = vmul.f32 %v696, %v856
  %v861 = vmul.f32 %v697, %v857
  %v862 = vmul.f32 %v698, %v858
  %v863 = vmul.f32 %v699, %v859
  %v864 = vadd.f32 %v851, %v860
  %v865 = vadd.f32 %v852, %v861
  %v866 = vadd.f32 %v853, %v862
  %v867 = vadd.f32 %v854, %v863
  %s868 = scalar_lea.vmem %s0, 480
  %v869 = vld [vmem:[%s868] sm:$0xff]
  %v870 = vld [vmem:[%s868 + $0x8] sm:$0xff]
  %v871 = vld [vmem:[%s868 + $0x10] sm:$0xff]
  %v872 = vld [vmem:[%s868 + $0x18] sm:$0xff]
  %v873 = vmul.f32 %v700, %v869
  %v874 = vmul.f32 %v701, %v870
  %v875 = vmul.f32 %v702, %v871
  %v876 = vmul.f32 %v703, %v872
  %v877 = vadd.f32 %v864, %v873
  %v878 = vadd.f32 %v865, %v874
  %v879 = vadd.f32 %v866, %v875
  %v880 = vadd.f32 %v867, %v876
  %s881 = scalar_lea.vmem %s0, 608
  %v882 = vld [vmem:[%s881] sm:$0xff]
  %v883 = vld [vmem:[%s881 + $0x8] sm:$0xff]
  %v884 = vld [vmem:[%s881 + $0x10] sm:$0xff]
  %v885 = vld [vmem:[%s881 + $0x18] sm:$0xff]
  %v886 = vmul.f32 %v708, %v882
  %v887 = vmul.f32 %v709, %v883
  %v888 = vmul.f32 %v710, %v884
  %v889 = vmul.f32 %v711, %v885
  %v890 = vadd.f32 %v877, %v886
  %v891 = vadd.f32 %v878, %v887
  %v892 = vadd.f32 %v879, %v888
  %v893 = vadd.f32 %v880, %v889
  %s894 = scalar_lea.vmem %s0, 736
  %v895 = vld [vmem:[%s894] sm:$0xff]
  %v896 = vld [vmem:[%s894 + $0x8] sm:$0xff]
  %v897 = vld [vmem:[%s894 + $0x10] sm:$0xff]
  %v898 = vld [vmem:[%s894 + $0x18] sm:$0xff]
  %v899 = vmul.f32 %v712, %v895
  %v900 = vmul.f32 %v713, %v896
  %v901 = vmul.f32 %v714, %v897
  %v902 = vmul.f32 %v715, %v898
  %v903 = vadd.f32 %v890, %v899
  %v904 = vadd.f32 %v891, %v900
  %v905 = vadd.f32 %v892, %v901
  %v906 = vadd.f32 %v893, %v902
  %s907 = scalar_lea.vmem %s0, 864
  %v908 = vld [vmem:[%s907] sm:$0xff]
  %v909 = vld [vmem:[%s907 + $0x8] sm:$0xff]
  %v910 = vld [vmem:[%s907 + $0x10] sm:$0xff]
  %v911 = vld [vmem:[%s907 + $0x18] sm:$0xff]
  %v912 = vmul.f32 %v720, %v908
  %v913 = vmul.f32 %v721, %v909
  %v914 = vmul.f32 %v722, %v910
  %v915 = vmul.f32 %v723, %v911
  %v916 = vadd.f32 %v903, %v912
  %v917 = vadd.f32 %v904, %v913
  %v918 = vadd.f32 %v905, %v914
  %v919 = vadd.f32 %v906, %v915
  %s920 = scalar_lea.vmem %s0, 992
  %v921 = vld [vmem:[%s920] sm:$0xff]
  %v922 = vld [vmem:[%s920 + $0x8] sm:$0xff]
  %v923 = vld [vmem:[%s920 + $0x10] sm:$0xff]
  %v924 = vld [vmem:[%s920 + $0x18] sm:$0xff]
  %v925 = vmul.f32 %v724, %v921
  %v926 = vmul.f32 %v725, %v922
  %v927 = vmul.f32 %v726, %v923
  %v928 = vmul.f32 %v727, %v924
  %v929 = vadd.f32 %v916, %v925
  %v930 = vadd.f32 %v917, %v926
  %v931 = vadd.f32 %v918, %v927
  %v932 = vadd.f32 %v919, %v928
  %s933 = scalar_lea.vmem %s2, 96
  %934 = vst [vmem:[%s933] sm:$0xff] %v929
  %935 = vst [vmem:[%s933 + $0x8] sm:$0xff] %v930
  %936 = vst [vmem:[%s933 + $0x10] sm:$0xff] %v931
  %937 = vst [vmem:[%s933 + $0x18] sm:$0xff] %v932
  // Predicated region
  $region10: #{gen_new_forward.3} parent=0 // pred_check
    _
  $region11: #{gen_new_forward.3} parent=0 // pred_check_branch
    %939 = sbr.rel (0) target = $region13
  $region12: #{gen_new_forward.3} parent=0 // pred_region
    _
  $region13: #{gen_new_forward.3} parent=0 // pred_fallthru
    _
  // Predicated region
  $region14: #{gen_new_forward.3} parent=0 // pred_check
    _
  $region15: #{gen_new_forward.3} parent=0 // pred_check_branch
    %941 = sbr.rel (0) target = $region17
  $region16: #{gen_new_forward.3} parent=0 // pred_region
    _
  $region17: #{gen_new_forward.3} parent=0 // pred_fallthru
    _

</llo_original>
